<compile_context>
chip_gen: v5e
topology: v5e:2x2
jax: 0.10.0
libtpu: 0.0.40
codegen_flags: <defaults>
</compile_context>

<pallas_src>
import functools

import jax
import jax.numpy as jnp
from jax import lax
from jax.experimental import pallas as pl
from jax.experimental.pallas import tpu as pltpu


def _round_up(x, m):
    return ((x + m - 1) // m) * m


# ----------------------------------------------------------------------------
# Fused kernel: all ResUnits of the DilatedBlock, B_TILE samples per grid step
# ----------------------------------------------------------------------------
def _dilated_block_kernel(x_ref, w_ref, b_ref, scale_ref, shift_ref, o_ref,
                          pad_ref, col_ref, *, dilations, ksize, length, c,
                          c_pad, b_tile, pad_off, pad_l_max, pad_r_max):
    """
    x_ref     : (b_tile, C, L)        f32       input activations (this step)
    w_ref     : (U, C, K*c_pad)       f32/bf16  im2col weights (col=j*c_pad+ci)
    b_ref     : (U, C, 1)             f32       conv bias
    scale_ref : (U, C, 1)             f32       folded BN scale
    shift_ref : (U, C, 1)             f32       folded BN shift
    o_ref     : (b_tile, C, L)        f32       output activations
    pad_ref   : (b_tile, C, pad_w)    f32       scratch: zero halo + activation
    col_ref   : (K*c_pad, b_tile*L)   w.dtype   scratch: im2col matrix
    """
    col_dtype = col_ref.dtype

    # --- per-step init -------------------------------------------------------
    # Zero ONLY the halo strips the dilated taps can read; the interior is
    # overwritten with x right below and lanes left of pad_off - pad_l_max are
    # never read.  Done unconditionally every step (no program_id==0 guard:
    # under megacore sharding a core may never execute step 0).
    if pad_l_max > 0:
        pad_ref[:, :, pad_off - pad_l_max:pad_off] = jnp.zeros(
            (b_tile, c, pad_l_max), jnp.float32)
    if pad_r_max > 0:
        pad_ref[:, :, pad_off + length:pad_off + length + pad_r_max] = (
            jnp.zeros((b_tile, c, pad_r_max), jnp.float32))
    # Zero the channel-padding rows of the im2col matrix (matching weight
    # columns are zero, but uninitialized VMEM could hold NaN/Inf and
    # 0 * NaN = NaN).  These rows are never written again.
    if c_pad > c:
        for j in range(ksize):
            col_ref[j * c_pad + c:(j + 1) * c_pad, :] = jnp.zeros(
                (c_pad - c, b_tile * length), col_dtype)

    # Running activation lives in the f32 padded scratch; pad_off is a
    # multiple of 128 so these stores are lane-aligned.
    pad_ref[:, :, pad_off:pad_off + length] = x_ref[...].astype(jnp.float32)

    # --- the ResUnits ---------------------------------------------------------
    for u, d in enumerate(dilations):
        total = d * (ksize - 1)
        pad_l = total // 2          # odd total pad -> extra zero on the RIGHT
        # im2col in the MXU dtype: K dilated taps stacked on the contraction
        # axis, all b_tile samples side by side on the lane axis.
        for j in range(ksize):
            s = pad_off - pad_l + j * d                     # static offset
            for bb in range(b_tile):
                col_ref[j * c_pad:j * c_pad + c,
                        bb * length:(bb + 1) * length] = (
                    pad_ref[bb, :, s:s + length].astype(col_dtype))
        # One wide matmul per unit: (C, K*c_pad) x (K*c_pad, b_tile*L).
        y = jnp.dot(w_ref[u], col_ref[...],
                    preferred_element_type=jnp.float32)
        y = jnp.maximum(y + b_ref[u], 0.0)                  # bias + ReLU (f32)
        y = y * scale_ref[u] + shift_ref[u]                 # BN eval     (f32)
        # Residual add back into the VMEM-resident running activation.
        for bb in range(b_tile):
            pad_ref[bb, :, pad_off:pad_off + length] = (
                pad_ref[bb, :, pad_off:pad_off + length]
                + y[:, bb * length:(bb + 1) * length])

    o_ref[...] = pad_ref[:, :, pad_off:pad_off + length].astype(o_ref.dtype)


# ----------------------------------------------------------------------------
# Wrapper: single pallas_call for the whole DilatedBlock
# ----------------------------------------------------------------------------
def dilated_block_pallas(x, packed_params, dilation_list, ksize, b_tile=None):
    """x: (N, C, L) f32; packed_params from pack_params(); returns (N, C, L)."""
    w, b, scale, shift = packed_params
    n, c, length = x.shape
    n_units, c_out, kc = w.shape
    assert kc % ksize == 0
    c_pad = kc // ksize
    assert c == c_out and c_pad >= c, "fused kernel needs c_in == c_out"
    assert n_units == len(dilation_list)

    pad_l_max = max(d * (ksize - 1) // 2 for d in dilation_list)
    pad_r_max = max(d * (ksize - 1) - d * (ksize - 1) // 2
                    for d in dilation_list)
    # Keep the activation slot lane-aligned so activation stores need no lane
    # rotation.
    pad_off = _round_up(max(pad_l_max, 1), 128)
    pad_w = pad_off + length + pad_r_max

    itemsize = jnp.dtype(w.dtype).itemsize

    if b_tile is None:
        # Wide lane slab per grid step to amortize the ~0.35us/step fixed cost
        # and produce lane-dense matmul/output slabs, but keep >= 2 grid steps
        # when n >= 2 (both v7x TensorCores get work) and bound scratch VMEM.
        target_lanes = 2048
        b_tile = max(1, target_lanes // max(length, 1))
        if n >= 2:
            b_tile = min(b_tile, max(1, n // 2))
        b_tile = max(1, min(b_tile, n))

        def _scratch_bytes(bt):
            return (bt * c * pad_w * 4
                    + ksize * c_pad * bt * length * itemsize)

        while b_tile > 1 and _scratch_bytes(b_tile) > (16 << 20):
            b_tile -= 1

    n_pad = _round_up(n, b_tile)
    x_in = jnp.pad(x, ((0, n_pad - n), (0, 0), (0, 0))) if n_pad != n else x

    kern = functools.partial(
        _dilated_block_kernel, dilations=tuple(dilation_list), ksize=ksize,
        length=length, c=c, c_pad=c_pad, b_tile=b_tile, pad_off=pad_off,
        pad_l_max=pad_l_max, pad_r_max=pad_r_max)

    def resident(shape):          # whole array, VMEM-resident across the grid
        return pl.BlockSpec(shape, lambda i: (0,) * len(shape))

    # Explicit VMEM budget: scratch + double-buffered in/out blocks + params,
    # with headroom (keeps the 16/32 MiB default scoped limit from biting at
    # moderate L without requesting absurd amounts).
    scratch_bytes = (b_tile * c * pad_w * 4
                     + ksize * c_pad * b_tile * length * itemsize)
    io_bytes = 2 * 2 * (b_tile * c * length * 4)
    param_bytes = 2 * (w.size * itemsize
                       + (b.size + scale.size + shift.size) * 4)
    vmem_limit = int(min(128 << 20,
                         max(32 << 20,
                             2 * (scratch_bytes + io_bytes + param_bytes))))

    out = pl.pallas_call(
        kern,
        out_shape=jax.ShapeDtypeStruct((n_pad, c, length), x.dtype),
        grid=(n_pad // b_tile,),                           # batch on the grid
        in_specs=[pl.BlockSpec((b_tile, c, length), lambda i: (i, 0, 0)),
                  resident(w.shape), resident(b.shape),
                  resident(scale.shape), resident(shift.shape)],
        out_specs=pl.BlockSpec((b_tile, c, length), lambda i: (i, 0, 0)),
        scratch_shapes=[pltpu.VMEM((b_tile, c, pad_w), jnp.float32),
                        pltpu.VMEM((ksize * c_pad, b_tile * length), w.dtype)],
        compiler_params=pltpu.CompilerParams(
            dimension_semantics=("parallel",),             # megacore: split batch
            vmem_limit_bytes=vmem_limit),
    )(x_in, w, b, scale, shift)
    return out[:n] if n_pad != n else out


# ----------------------------------------------------------------------------
# One-time parameter packing (out of the hot path)
# ----------------------------------------------------------------------------
def pack_params(params, mxu_dtype=jnp.bfloat16):
    """Stack per-unit params into kernel layouts.

    Weights: (U, C_out, K*c_pad) im2col layout with column index
    j*c_pad + c_in.  c_pad rounds C_in up to the sublane-packing granularity
    of mxu_dtype (8 for f32, 16 for bf16 -> c_pad=32 for the default C=24,
    i.e. an exact 256-deep contraction on v6e/v7x); padding columns are zero.
    Bias / BN scale / BN shift stay f32 (epilogue stays f32).
    """
    itemsize = jnp.dtype(mxu_dtype).itemsize
    gran = max(8, 32 // itemsize)
    ws = []
    for p in params:
        c_out_, c_in_, k_ = p["w"].shape
        c_pad = _round_up(c_in_, gran)
        wt = jnp.transpose(p["w"], (0, 2, 1))               # (C_out, K, C_in)
        wt = jnp.pad(wt, ((0, 0), (0, 0), (0, c_pad - c_in_)))
        ws.append(wt.reshape(c_out_, k_ * c_pad))
    w = jnp.stack(ws).astype(mxu_dtype)
    b = jnp.stack([p["b"] for p in params])[..., None].astype(jnp.float32)
    scale = jnp.stack([p["bn_scale"] for p in params])[..., None].astype(
        jnp.float32)
    shift = jnp.stack([p["bn_shift"] for p in params])[..., None].astype(
        jnp.float32)
    return w, b, scale, shift


# ----------------------------------------------------------------------------
# Pure-JAX reference (for correctness check)
# ----------------------------------------------------------------------------
def res_unit_ref(x, w, b, bn_scale, bn_shift, dilation, ksize,
                 conv_dtype=jnp.float32):
    total = dilation * (ksize - 1)
    pad_l = total // 2
    pad_r = total - pad_l
    x_pad = jnp.pad(x, ((0, 0), (0, 0), (pad_l, pad_r)))
    y = lax.conv_general_dilated(
        x_pad.astype(conv_dtype), w.astype(conv_dtype),
        window_strides=(1,), padding="VALID", rhs_dilation=(dilation,),
        dimension_numbers=("NCH", "OIH", "NCH"),
        preferred_element_type=jnp.float32)
    y = y + b[None, :, None]
    y = jnp.maximum(y, 0.0)
    y = y * bn_scale[None, :, None] + bn_shift[None, :, None]
    return x + y


def dilated_block_ref(x, params, dilation_list, ksize,
                      conv_dtype=jnp.float32):
    for p, d in zip(params, dilation_list):
        x = res_unit_ref(x, p["w"], p["b"], p["bn_scale"], p["bn_shift"],
                         d, ksize, conv_dtype=conv_dtype)
    return x


# ----------------------------------------------------------------------------
# Deterministic parameter init (shapes from DilatedBlock.__init__ defaults)
# ----------------------------------------------------------------------------
def make_params(key, c_in, c_out, ksize, dilation_list, eps=1e-5):
    params = []
    cin = c_in
    for _ in dilation_list:
        key, k1, k2, k3, k4, k5, k6 = jax.random.split(key, 7)
        w = jax.random.normal(k1, (c_out, cin, ksize), jnp.float32) * 0.1
        b = jax.random.normal(k2, (c_out,), jnp.float32) * 0.1
        gamma = 1.0 + 0.1 * jax.random.normal(k3, (c_out,), jnp.float32)
        beta = 0.1 * jax.random.normal(k4, (c_out,), jnp.float32)
        run_mean = 0.1 * jax.random.normal(k5, (c_out,), jnp.float32)
        run_var = 1.0 + 0.1 * jnp.abs(jax.random.normal(k6, (c_out,),
                                                        jnp.float32))
        scale = gamma / jnp.sqrt(run_var + eps)
        shift = beta - run_mean * scale
        params.append({"w": w, "b": b, "bn_scale": scale, "bn_shift": shift})
        cin = c_out
    return params


if __name__ == "__main__":
    # DilatedBlock defaults: c_in=c_out=24, kernel_size=8, dilations [1,2,4,8]
    C_IN = C_OUT = 24
    KSIZE = 8
    DILATIONS = [1, 2, 4, 8]
    N, L = 4, 128          # b_tile=2 -> grid of 2 wide lane-dense steps

    key = jax.random.PRNGKey(0)
    key, kx = jax.random.split(key)
    x = jax.random.normal(kx, (N, C_IN, L), jnp.float32)
    params = make_params(key, C_IN, C_OUT, KSIZE, DILATIONS)

    # --- exact-semantics path (f32 MXU inputs): tight check -----------------
    out_f32 = dilated_block_pallas(x, pack_params(params, jnp.float32),
                                   DILATIONS, KSIZE)
    out_f32 = jax.block_until_ready(out_f32)
    ref_f32 = dilated_block_ref(x, params, DILATIONS, KSIZE)
    assert out_f32.shape == (N, C_OUT, L)
    assert jnp.allclose(out_f32, ref_f32, rtol=1e-4, atol=1e-4), \
        float(jnp.max(jnp.abs(out_f32 - ref_f32)))

    # --- fast path (bf16 MXU inputs/col, f32 accumulate + f32 epilogue) -----
    # Compared against a reference whose conv inputs are bf16-quantized the
    # same way, so only f32 accumulation-order noise remains.
    out_bf16 = dilated_block_pallas(x, pack_params(params, jnp.bfloat16),
                                    DILATIONS, KSIZE)
    out_bf16 = jax.block_until_ready(out_bf16)
    ref_bf16 = dilated_block_ref(x, params, DILATIONS, KSIZE,
                                 conv_dtype=jnp.bfloat16)
    assert jnp.allclose(out_bf16, ref_bf16, rtol=1e-3, atol=1e-3), \
        float(jnp.max(jnp.abs(out_bf16 - ref_bf16)))

    print("KERNEL_OK")
</pallas_src>

<mosaic_0001>
module attributes {stable_mosaic.version = 11 : i64} {
  func.func @_dilated_block_kernel(%arg0: i32, %arg1: memref<2x24x128xf32, #tpu.memory_space<vmem>>, %arg2: memref<4x24x192xf32, #tpu.memory_space<vmem>>, %arg3: memref<4x24x1xf32, #tpu.memory_space<vmem>>, %arg4: memref<4x24x1xf32, #tpu.memory_space<vmem>>, %arg5: memref<4x24x1xf32, #tpu.memory_space<vmem>>, %arg6: memref<2x24x128xf32, #tpu.memory_space<vmem>>, %arg7: memref<2x24x284xf32, #tpu.memory_space<vmem>>, %arg8: memref<192x256xf32, #tpu.memory_space<vmem>>) attributes {dimension_semantics = [#tpu.dimension_semantics<parallel>], iteration_bounds = array<i64: 2>, scalar_prefetch = 0 : i64, scratch_operands = 2 : i64, tpu.core_type = #tpu.core_type<tc>, window_params = [{transform_indices = @transform_0, window_bounds = array<i64: 2, 24, 128>}, {pipeline_mode = #tpu.pipeline_mode<synchronous>, transform_indices = @transform_1, window_bounds = array<i64: 4, 24, 192>}, {pipeline_mode = #tpu.pipeline_mode<synchronous>, transform_indices = @transform_2, window_bounds = array<i64: 4, 24, 1>}, {pipeline_mode = #tpu.pipeline_mode<synchronous>, transform_indices = @transform_3, window_bounds = array<i64: 4, 24, 1>}, {pipeline_mode = #tpu.pipeline_mode<synchronous>, transform_indices = @transform_4, window_bounds = array<i64: 4, 24, 1>}, {transform_indices = @transform_5, window_bounds = array<i64: 2, 24, 128>}]} {
    %cst = arith.constant 0.000000e+00 : f32
    %0 = vector.broadcast %cst : f32 to vector<2x24x28xf32>
    %c0 = arith.constant 0 : index
    %c0_0 = arith.constant 0 : index
    %c100 = arith.constant 100 : index
    %1 = vector.load %arg7[%c0, %c0_0, %c100] : memref<2x24x284xf32, #tpu.memory_space<vmem>>, vector<2x24x28xf32>
    tpu.vector_store %arg7[%c0, %c0_0, %c100], %0 {strides = array<i32>} : memref<2x24x284xf32, #tpu.memory_space<vmem>>, vector<2x24x28xf32>,
    %cst_1 = arith.constant 0.000000e+00 : f32
    %2 = vector.broadcast %cst_1 : f32 to vector<2x24x28xf32>
    %c0_2 = arith.constant 0 : index
    %c0_3 = arith.constant 0 : index
    %c256 = arith.constant 256 : index
    %3 = vector.load %arg7[%c0_2, %c0_3, %c256] : memref<2x24x284xf32, #tpu.memory_space<vmem>>, vector<2x24x28xf32>
    tpu.vector_store %arg7[%c0_2, %c0_3, %c256], %2 {strides = array<i32>} : memref<2x24x284xf32, #tpu.memory_space<vmem>>, vector<2x24x28xf32>,
    %c0_4 = arith.constant 0 : index
    %c0_5 = arith.constant 0 : index
    %c0_6 = arith.constant 0 : index
    %4 = vector.load %arg1[%c0_4, %c0_5, %c0_6] : memref<2x24x128xf32, #tpu.memory_space<vmem>>, vector<2x24x128xf32>
    %c0_7 = arith.constant 0 : index
    %c0_8 = arith.constant 0 : index
    %c128 = arith.constant 128 : index
    %5 = vector.load %arg7[%c0_7, %c0_8, %c128] : memref<2x24x284xf32, #tpu.memory_space<vmem>>, vector<2x24x128xf32>
    tpu.vector_store %arg7[%c0_7, %c0_8, %c128], %4 {strides = array<i32>} : memref<2x24x284xf32, #tpu.memory_space<vmem>>, vector<2x24x128xf32>,
    %c0_9 = arith.constant 0 : index
    %c0_10 = arith.constant 0 : index
    %c125 = arith.constant 125 : index
    %6 = vector.load %arg7[%c0_9, %c0_10, %c125] : memref<2x24x284xf32, #tpu.memory_space<vmem>>, vector<1x24x128xf32>
    %7 = vector.shape_cast %6 : vector<1x24x128xf32> to vector<24x128xf32>
    %c0_11 = arith.constant 0 : index
    %c0_12 = arith.constant 0 : index
    %8 = vector.load %arg8[%c0_11, %c0_12] : memref<192x256xf32, #tpu.memory_space<vmem>>, vector<24x128xf32>
    tpu.vector_store %arg8[%c0_11, %c0_12], %7 {strides = array<i32>} : memref<192x256xf32, #tpu.memory_space<vmem>>, vector<24x128xf32>,
    %c1 = arith.constant 1 : index
    %c0_13 = arith.constant 0 : index
    %c125_14 = arith.constant 125 : index
    %9 = vector.load %arg7[%c1, %c0_13, %c125_14] : memref<2x24x284xf32, #tpu.memory_space<vmem>>, vector<1x24x128xf32>
    %10 = vector.shape_cast %9 : vector<1x24x128xf32> to vector<24x128xf32>
    %c0_15 = arith.constant 0 : index
    %c128_16 = arith.constant 128 : index
    %11 = vector.load %arg8[%c0_15, %c128_16] : memref<192x256xf32, #tpu.memory_space<vmem>>, vector<24x128xf32>
    tpu.vector_store %arg8[%c0_15, %c128_16], %10 {strides = array<i32>} : memref<192x256xf32, #tpu.memory_space<vmem>>, vector<24x128xf32>,
    %c0_17 = arith.constant 0 : index
    %c0_18 = arith.constant 0 : index
    %c126 = arith.constant 126 : index
    %12 = vector.load %arg7[%c0_17, %c0_18, %c126] : memref<2x24x284xf32, #tpu.memory_space<vmem>>, vector<1x24x128xf32>
    %13 = vector.shape_cast %12 : vector<1x24x128xf32> to vector<24x128xf32>
    %c24 = arith.constant 24 : index
    %c0_19 = arith.constant 0 : index
    %14 = vector.load %arg8[%c24, %c0_19] : memref<192x256xf32, #tpu.memory_space<vmem>>, vector<24x128xf32>
    tpu.vector_store %arg8[%c24, %c0_19], %13 {strides = array<i32>} : memref<192x256xf32, #tpu.memory_space<vmem>>, vector<24x128xf32>,
    %c1_20 = arith.constant 1 : index
    %c0_21 = arith.constant 0 : index
    %c126_22 = arith.constant 126 : index
    %15 = vector.load %arg7[%c1_20, %c0_21, %c126_22] : memref<2x24x284xf32, #tpu.memory_space<vmem>>, vector<1x24x128xf32>
    %16 = vector.shape_cast %15 : vector<1x24x128xf32> to vector<24x128xf32>
    %c24_23 = arith.constant 24 : index
    %c128_24 = arith.constant 128 : index
    %17 = vector.load %arg8[%c24_23, %c128_24] : memref<192x256xf32, #tpu.memory_space<vmem>>, vector<24x128xf32>
    tpu.vector_store %arg8[%c24_23, %c128_24], %16 {strides = array<i32>} : memref<192x256xf32, #tpu.memory_space<vmem>>, vector<24x128xf32>,
    %c0_25 = arith.constant 0 : index
    %c0_26 = arith.constant 0 : index
    %c127 = arith.constant 127 : index
    %18 = vector.load %arg7[%c0_25, %c0_26, %c127] : memref<2x24x284xf32, #tpu.memory_space<vmem>>, vector<1x24x128xf32>
    %19 = vector.shape_cast %18 : vector<1x24x128xf32> to vector<24x128xf32>
    %c48 = arith.constant 48 : index
    %c0_27 = arith.constant 0 : index
    %20 = vector.load %arg8[%c48, %c0_27] : memref<192x256xf32, #tpu.memory_space<vmem>>, vector<24x128xf32>
    tpu.vector_store %arg8[%c48, %c0_27], %19 {strides = array<i32>} : memref<192x256xf32, #tpu.memory_space<vmem>>, vector<24x128xf32>,
    %c1_28 = arith.constant 1 : index
    %c0_29 = arith.constant 0 : index
    %c127_30 = arith.constant 127 : index
    %21 = vector.load %arg7[%c1_28, %c0_29, %c127_30] : memref<2x24x284xf32, #tpu.memory_space<vmem>>, vector<1x24x128xf32>
    %22 = vector.shape_cast %21 : vector<1x24x128xf32> to vector<24x128xf32>
    %c48_31 = arith.constant 48 : index
    %c128_32 = arith.constant 128 : index
    %23 = vector.load %arg8[%c48_31, %c128_32] : memref<192x256xf32, #tpu.memory_space<vmem>>, vector<24x128xf32>
    tpu.vector_store %arg8[%c48_31, %c128_32], %22 {strides = array<i32>} : memref<192x256xf32, #tpu.memory_space<vmem>>, vector<24x128xf32>,
    %c0_33 = arith.constant 0 : index
    %c0_34 = arith.constant 0 : index
    %c128_35 = arith.constant 128 : index
    %24 = vector.load %arg7[%c0_33, %c0_34, %c128_35] : memref<2x24x284xf32, #tpu.memory_space<vmem>>, vector<1x24x128xf32>
    %25 = vector.shape_cast %24 : vector<1x24x128xf32> to vector<24x128xf32>
    %c72 = arith.constant 72 : index
    %c0_36 = arith.constant 0 : index
    %26 = vector.load %arg8[%c72, %c0_36] : memref<192x256xf32, #tpu.memory_space<vmem>>, vector<24x128xf32>
    tpu.vector_store %arg8[%c72, %c0_36], %25 {strides = array<i32>} : memref<192x256xf32, #tpu.memory_space<vmem>>, vector<24x128xf32>,
    %c1_37 = arith.constant 1 : index
    %c0_38 = arith.constant 0 : index
    %c128_39 = arith.constant 128 : index
    %27 = vector.load %arg7[%c1_37, %c0_38, %c128_39] : memref<2x24x284xf32, #tpu.memory_space<vmem>>, vector<1x24x128xf32>
    %28 = vector.shape_cast %27 : vector<1x24x128xf32> to vector<24x128xf32>
    %c72_40 = arith.constant 72 : index
    %c128_41 = arith.constant 128 : index
    %29 = vector.load %arg8[%c72_40, %c128_41] : memref<192x256xf32, #tpu.memory_space<vmem>>, vector<24x128xf32>
    tpu.vector_store %arg8[%c72_40, %c128_41], %28 {strides = array<i32>} : memref<192x256xf32, #tpu.memory_space<vmem>>, vector<24x128xf32>,
    %c0_42 = arith.constant 0 : index
    %c0_43 = arith.constant 0 : index
    %c129 = arith.constant 129 : index
    %30 = vector.load %arg7[%c0_42, %c0_43, %c129] : memref<2x24x284xf32, #tpu.memory_space<vmem>>, vector<1x24x128xf32>
    %31 = vector.shape_cast %30 : vector<1x24x128xf32> to vector<24x128xf32>
    %c96 = arith.constant 96 : index
    %c0_44 = arith.constant 0 : index
    %32 = vector.load %arg8[%c96, %c0_44] : memref<192x256xf32, #tpu.memory_space<vmem>>, vector<24x128xf32>
    tpu.vector_store %arg8[%c96, %c0_44], %31 {strides = array<i32>} : memref<192x256xf32, #tpu.memory_space<vmem>>, vector<24x128xf32>,
    %c1_45 = arith.constant 1 : index
    %c0_46 = arith.constant 0 : index
    %c129_47 = arith.constant 129 : index
    %33 = vector.load %arg7[%c1_45, %c0_46, %c129_47] : memref<2x24x284xf32, #tpu.memory_space<vmem>>, vector<1x24x128xf32>
    %34 = vector.shape_cast %33 : vector<1x24x128xf32> to vector<24x128xf32>
    %c96_48 = arith.constant 96 : index
    %c128_49 = arith.constant 128 : index
    %35 = vector.load %arg8[%c96_48, %c128_49] : memref<192x256xf32, #tpu.memory_space<vmem>>, vector<24x128xf32>
    tpu.vector_store %arg8[%c96_48, %c128_49], %34 {strides = array<i32>} : memref<192x256xf32, #tpu.memory_space<vmem>>, vector<24x128xf32>,
    %c0_50 = arith.constant 0 : index
    %c0_51 = arith.constant 0 : index
    %c130 = arith.constant 130 : index
    %36 = vector.load %arg7[%c0_50, %c0_51, %c130] : memref<2x24x284xf32, #tpu.memory_space<vmem>>, vector<1x24x128xf32>
    %37 = vector.shape_cast %36 : vector<1x24x128xf32> to vector<24x128xf32>
    %c120 = arith.constant 120 : index
    %c0_52 = arith.constant 0 : index
    %38 = vector.load %arg8[%c120, %c0_52] : memref<192x256xf32, #tpu.memory_space<vmem>>, vector<24x128xf32>
    tpu.vector_store %arg8[%c120, %c0_52], %37 {strides = array<i32>} : memref<192x256xf32, #tpu.memory_space<vmem>>, vector<24x128xf32>,
    %c1_53 = arith.constant 1 : index
    %c0_54 = arith.constant 0 : index
    %c130_55 = arith.constant 130 : index
    %39 = vector.load %arg7[%c1_53, %c0_54, %c130_55] : memref<2x24x284xf32, #tpu.memory_space<vmem>>, vector<1x24x128xf32>
    %40 = vector.shape_cast %39 : vector<1x24x128xf32> to vector<24x128xf32>
    %c120_56 = arith.constant 120 : index
    %c128_57 = arith.constant 128 : index
    %41 = vector.load %arg8[%c120_56, %c128_57] : memref<192x256xf32, #tpu.memory_space<vmem>>, vector<24x128xf32>
    tpu.vector_store %arg8[%c120_56, %c128_57], %40 {strides = array<i32>} : memref<192x256xf32, #tpu.memory_space<vmem>>, vector<24x128xf32>,
    %c0_58 = arith.constant 0 : index
    %c0_59 = arith.constant 0 : index
    %c131 = arith.constant 131 : index
    %42 = vector.load %arg7[%c0_58, %c0_59, %c131] : memref<2x24x284xf32, #tpu.memory_space<vmem>>, vector<1x24x128xf32>
    %43 = vector.shape_cast %42 : vector<1x24x128xf32> to vector<24x128xf32>
    %c144 = arith.constant 144 : index
    %c0_60 = arith.constant 0 : index
    %44 = vector.load %arg8[%c144, %c0_60] : memref<192x256xf32, #tpu.memory_space<vmem>>, vector<24x128xf32>
    tpu.vector_store %arg8[%c144, %c0_60], %43 {strides = array<i32>} : memref<192x256xf32, #tpu.memory_space<vmem>>, vector<24x128xf32>,
    %c1_61 = arith.constant 1 : index
    %c0_62 = arith.constant 0 : index
    %c131_63 = arith.constant 131 : index
    %45 = vector.load %arg7[%c1_61, %c0_62, %c131_63] : memref<2x24x284xf32, #tpu.memory_space<vmem>>, vector<1x24x128xf32>
    %46 = vector.shape_cast %45 : vector<1x24x128xf32> to vector<24x128xf32>
    %c144_64 = arith.constant 144 : index
    %c128_65 = arith.constant 128 : index
    %47 = vector.load %arg8[%c144_64, %c128_65] : memref<192x256xf32, #tpu.memory_space<vmem>>, vector<24x128xf32>
    tpu.vector_store %arg8[%c144_64, %c128_65], %46 {strides = array<i32>} : memref<192x256xf32, #tpu.memory_space<vmem>>, vector<24x128xf32>,
    %c0_66 = arith.constant 0 : index
    %c0_67 = arith.constant 0 : index
    %c132 = arith.constant 132 : index
    %48 = vector.load %arg7[%c0_66, %c0_67, %c132] : memref<2x24x284xf32, #tpu.memory_space<vmem>>, vector<1x24x128xf32>
    %49 = vector.shape_cast %48 : vector<1x24x128xf32> to vector<24x128xf32>
    %c168 = arith.constant 168 : index
    %c0_68 = arith.constant 0 : index
    %50 = vector.load %arg8[%c168, %c0_68] : memref<192x256xf32, #tpu.memory_space<vmem>>, vector<24x128xf32>
    tpu.vector_store %arg8[%c168, %c0_68], %49 {strides = array<i32>} : memref<192x256xf32, #tpu.memory_space<vmem>>, vector<24x128xf32>,
    %c1_69 = arith.constant 1 : index
    %c0_70 = arith.constant 0 : index
    %c132_71 = arith.constant 132 : index
    %51 = vector.load %arg7[%c1_69, %c0_70, %c132_71] : memref<2x24x284xf32, #tpu.memory_space<vmem>>, vector<1x24x128xf32>
    %52 = vector.shape_cast %51 : vector<1x24x128xf32> to vector<24x128xf32>
    %c168_72 = arith.constant 168 : index
    %c128_73 = arith.constant 128 : index
    %53 = vector.load %arg8[%c168_72, %c128_73] : memref<192x256xf32, #tpu.memory_space<vmem>>, vector<24x128xf32>
    tpu.vector_store %arg8[%c168_72, %c128_73], %52 {strides = array<i32>} : memref<192x256xf32, #tpu.memory_space<vmem>>, vector<24x128xf32>,
    %c0_74 = arith.constant 0 : index
    %c0_75 = arith.constant 0 : index
    %c0_76 = arith.constant 0 : index
    %54 = vector.load %arg2[%c0_74, %c0_75, %c0_76] : memref<4x24x192xf32, #tpu.memory_space<vmem>>, vector<1x24x192xf32>
    %55 = vector.shape_cast %54 : vector<1x24x192xf32> to vector<24x192xf32>
    %c0_77 = arith.constant 0 : index
    %c0_78 = arith.constant 0 : index
    %56 = vector.load %arg8[%c0_77, %c0_78] : memref<192x256xf32, #tpu.memory_space<vmem>>, vector<192x256xf32>
    %cst_79 = arith.constant dense<0.000000e+00> : vector<24x256xf32>
    %57 = tpu.matmul %55, %56, %cst_79 {dimension_numbers = #tpu.dot_dimension_numbers<[1], [0], [0], [1], [0, 0, 1, 1], [], []>} : vector<24x192xf32>, vector<192x256xf32>, vector<24x256xf32> -> vector<24x256xf32>
    %c0_80 = arith.constant 0 : index
    %c0_81 = arith.constant 0 : index
    %c0_82 = arith.constant 0 : index
    %58 = vector.load %arg3[%c0_80, %c0_81, %c0_82] : memref<4x24x1xf32, #tpu.memory_space<vmem>>, vector<1x24x1xf32>
    %59 = vector.shape_cast %58 : vector<1x24x1xf32> to vector<24x1xf32>
    %60 = vector.broadcast %59 : vector<24x1xf32> to vector<24x256xf32>
    %61 = arith.addf %57, %60 : vector<24x256xf32>
    %cst_83 = arith.constant 0.000000e+00 : f32
    %62 = vector.broadcast %cst_83 : f32 to vector<24x256xf32>
    %63 = arith.maximumf %61, %62 : vector<24x256xf32>
    %c0_84 = arith.constant 0 : index
    %c0_85 = arith.constant 0 : index
    %c0_86 = arith.constant 0 : index
    %64 = vector.load %arg4[%c0_84, %c0_85, %c0_86] : memref<4x24x1xf32, #tpu.memory_space<vmem>>, vector<1x24x1xf32>
    %65 = vector.shape_cast %64 : vector<1x24x1xf32> to vector<24x1xf32>
    %66 = vector.broadcast %65 : vector<24x1xf32> to vector<24x256xf32>
    %67 = arith.mulf %63, %66 : vector<24x256xf32>
    %c0_87 = arith.constant 0 : index
    %c0_88 = arith.constant 0 : index
    %c0_89 = arith.constant 0 : index
    %68 = vector.load %arg5[%c0_87, %c0_88, %c0_89] : memref<4x24x1xf32, #tpu.memory_space<vmem>>, vector<1x24x1xf32>
    %69 = vector.shape_cast %68 : vector<1x24x1xf32> to vector<24x1xf32>
    %70 = vector.broadcast %69 : vector<24x1xf32> to vector<24x256xf32>
    %71 = arith.addf %67, %70 : vector<24x256xf32>
    %c0_90 = arith.constant 0 : index
    %c0_91 = arith.constant 0 : index
    %c128_92 = arith.constant 128 : index
    %72 = vector.load %arg7[%c0_90, %c0_91, %c128_92] : memref<2x24x284xf32, #tpu.memory_space<vmem>>, vector<1x24x128xf32>
    %73 = vector.shape_cast %72 : vector<1x24x128xf32> to vector<24x128xf32>
    %74 = vector.extract_strided_slice %71 {offsets = [0, 0], sizes = [24, 128], strides = [1, 1]} : vector<24x256xf32> to vector<24x128xf32>
    %75 = arith.addf %73, %74 : vector<24x128xf32>
    %c0_93 = arith.constant 0 : index
    %c0_94 = arith.constant 0 : index
    %c128_95 = arith.constant 128 : index
    %76 = vector.load %arg7[%c0_93, %c0_94, %c128_95] : memref<2x24x284xf32, #tpu.memory_space<vmem>>, vector<1x24x128xf32>
    %77 = vector.shape_cast %76 : vector<1x24x128xf32> to vector<24x128xf32>
    %78 = vector.shape_cast %75 : vector<24x128xf32> to vector<1x24x128xf32>
    tpu.vector_store %arg7[%c0_93, %c0_94, %c128_95], %78 {strides = array<i32>} : memref<2x24x284xf32, #tpu.memory_space<vmem>>, vector<1x24x128xf32>,
    %c1_96 = arith.constant 1 : index
    %c0_97 = arith.constant 0 : index
    %c128_98 = arith.constant 128 : index
    %79 = vector.load %arg7[%c1_96, %c0_97, %c128_98] : memref<2x24x284xf32, #tpu.memory_space<vmem>>, vector<1x24x128xf32>
    %80 = vector.shape_cast %79 : vector<1x24x128xf32> to vector<24x128xf32>
    %81 = vector.extract_strided_slice %71 {offsets = [0, 128], sizes = [24, 128], strides = [1, 1]} : vector<24x256xf32> to vector<24x128xf32>
    %82 = arith.addf %80, %81 : vector<24x128xf32>
    %c1_99 = arith.constant 1 : index
    %c0_100 = arith.constant 0 : index
    %c128_101 = arith.constant 128 : index
    %83 = vector.load %arg7[%c1_99, %c0_100, %c128_101] : memref<2x24x284xf32, #tpu.memory_space<vmem>>, vector<1x24x128xf32>
    %84 = vector.shape_cast %83 : vector<1x24x128xf32> to vector<24x128xf32>
    %85 = vector.shape_cast %82 : vector<24x128xf32> to vector<1x24x128xf32>
    tpu.vector_store %arg7[%c1_99, %c0_100, %c128_101], %85 {strides = array<i32>} : memref<2x24x284xf32, #tpu.memory_space<vmem>>, vector<1x24x128xf32>,
    %c0_102 = arith.constant 0 : index
    %c0_103 = arith.constant 0 : index
    %c121 = arith.constant 121 : index
    %86 = vector.load %arg7[%c0_102, %c0_103, %c121] : memref<2x24x284xf32, #tpu.memory_space<vmem>>, vector<1x24x128xf32>
    %87 = vector.shape_cast %86 : vector<1x24x128xf32> to vector<24x128xf32>
    %c0_104 = arith.constant 0 : index
    %c0_105 = arith.constant 0 : index
    %88 = vector.load %arg8[%c0_104, %c0_105] : memref<192x256xf32, #tpu.memory_space<vmem>>, vector<24x128xf32>
    tpu.vector_store %arg8[%c0_104, %c0_105], %87 {strides = array<i32>} : memref<192x256xf32, #tpu.memory_space<vmem>>, vector<24x128xf32>,
    %c1_106 = arith.constant 1 : index
    %c0_107 = arith.constant 0 : index
    %c121_108 = arith.constant 121 : index
    %89 = vector.load %arg7[%c1_106, %c0_107, %c121_108] : memref<2x24x284xf32, #tpu.memory_space<vmem>>, vector<1x24x128xf32>
    %90 = vector.shape_cast %89 : vector<1x24x128xf32> to vector<24x128xf32>
    %c0_109 = arith.constant 0 : index
    %c128_110 = arith.constant 128 : index
    %91 = vector.load %arg8[%c0_109, %c128_110] : memref<192x256xf32, #tpu.memory_space<vmem>>, vector<24x128xf32>
    tpu.vector_store %arg8[%c0_109, %c128_110], %90 {strides = array<i32>} : memref<192x256xf32, #tpu.memory_space<vmem>>, vector<24x128xf32>,
    %c0_111 = arith.constant 0 : index
    %c0_112 = arith.constant 0 : index
    %c123 = arith.constant 123 : index
    %92 = vector.load %arg7[%c0_111, %c0_112, %c123] : memref<2x24x284xf32, #tpu.memory_space<vmem>>, vector<1x24x128xf32>
    %93 = vector.shape_cast %92 : vector<1x24x128xf32> to vector<24x128xf32>
    %c24_113 = arith.constant 24 : index
    %c0_114 = arith.constant 0 : index
    %94 = vector.load %arg8[%c24_113, %c0_114] : memref<192x256xf32, #tpu.memory_space<vmem>>, vector<24x128xf32>
    tpu.vector_store %arg8[%c24_113, %c0_114], %93 {strides = array<i32>} : memref<192x256xf32, #tpu.memory_space<vmem>>, vector<24x128xf32>,
    %c1_115 = arith.constant 1 : index
    %c0_116 = arith.constant 0 : index
    %c123_117 = arith.constant 123 : index
    %95 = vector.load %arg7[%c1_115, %c0_116, %c123_117] : memref<2x24x284xf32, #tpu.memory_space<vmem>>, vector<1x24x128xf32>
    %96 = vector.shape_cast %95 : vector<1x24x128xf32> to vector<24x128xf32>
    %c24_118 = arith.constant 24 : index
    %c128_119 = arith.constant 128 : index
    %97 = vector.load %arg8[%c24_118, %c128_119] : memref<192x256xf32, #tpu.memory_space<vmem>>, vector<24x128xf32>
    tpu.vector_store %arg8[%c24_118, %c128_119], %96 {strides = array<i32>} : memref<192x256xf32, #tpu.memory_space<vmem>>, vector<24x128xf32>,
    %c0_120 = arith.constant 0 : index
    %c0_121 = arith.constant 0 : index
    %c125_122 = arith.constant 125 : index
    %98 = vector.load %arg7[%c0_120, %c0_121, %c125_122] : memref<2x24x284xf32, #tpu.memory_space<vmem>>, vector<1x24x128xf32>
    %99 = vector.shape_cast %98 : vector<1x24x128xf32> to vector<24x128xf32>
    %c48_123 = arith.constant 48 : index
    %c0_124 = arith.constant 0 : index
    %100 = vector.load %arg8[%c48_123, %c0_124] : memref<192x256xf32, #tpu.memory_space<vmem>>, vector<24x128xf32>
    tpu.vector_store %arg8[%c48_123, %c0_124], %99 {strides = array<i32>} : memref<192x256xf32, #tpu.memory_space<vmem>>, vector<24x128xf32>,
    %c1_125 = arith.constant 1 : index
    %c0_126 = arith.constant 0 : index
    %c125_127 = arith.constant 125 : index
    %101 = vector.load %arg7[%c1_125, %c0_126, %c125_127] : memref<2x24x284xf32, #tpu.memory_space<vmem>>, vector<1x24x128xf32>
    %102 = vector.shape_cast %101 : vector<1x24x128xf32> to vector<24x128xf32>
    %c48_128 = arith.constant 48 : index
    %c128_129 = arith.constant 128 : index
    %103 = vector.load %arg8[%c48_128, %c128_129] : memref<192x256xf32, #tpu.memory_space<vmem>>, vector<24x128xf32>
    tpu.vector_store %arg8[%c48_128, %c128_129], %102 {strides = array<i32>} : memref<192x256xf32, #tpu.memory_space<vmem>>, vector<24x128xf32>,
    %c0_130 = arith.constant 0 : index
    %c0_131 = arith.constant 0 : index
    %c127_132 = arith.constant 127 : index
    %104 = vector.load %arg7[%c0_130, %c0_131, %c127_132] : memref<2x24x284xf32, #tpu.memory_space<vmem>>, vector<1x24x128xf32>
    %105 = vector.shape_cast %104 : vector<1x24x128xf32> to vector<24x128xf32>
    %c72_133 = arith.constant 72 : index
    %c0_134 = arith.constant 0 : index
    %106 = vector.load %arg8[%c72_133, %c0_134] : memref<192x256xf32, #tpu.memory_space<vmem>>, vector<24x128xf32>
    tpu.vector_store %arg8[%c72_133, %c0_134], %105 {strides = array<i32>} : memref<192x256xf32, #tpu.memory_space<vmem>>, vector<24x128xf32>,
    %c1_135 = arith.constant 1 : index
    %c0_136 = arith.constant 0 : index
    %c127_137 = arith.constant 127 : index
    %107 = vector.load %arg7[%c1_135, %c0_136, %c127_137] : memref<2x24x284xf32, #tpu.memory_space<vmem>>, vector<1x24x128xf32>
    %108 = vector.shape_cast %107 : vector<1x24x128xf32> to vector<24x128xf32>
    %c72_138 = arith.constant 72 : index
    %c128_139 = arith.constant 128 : index
    %109 = vector.load %arg8[%c72_138, %c128_139] : memref<192x256xf32, #tpu.memory_space<vmem>>, vector<24x128xf32>
    tpu.vector_store %arg8[%c72_138, %c128_139], %108 {strides = array<i32>} : memref<192x256xf32, #tpu.memory_space<vmem>>, vector<24x128xf32>,
    %c0_140 = arith.constant 0 : index
    %c0_141 = arith.constant 0 : index
    %c129_142 = arith.constant 129 : index
    %110 = vector.load %arg7[%c0_140, %c0_141, %c129_142] : memref<2x24x284xf32, #tpu.memory_space<vmem>>, vector<1x24x128xf32>
    %111 = vector.shape_cast %110 : vector<1x24x128xf32> to vector<24x128xf32>
    %c96_143 = arith.constant 96 : index
    %c0_144 = arith.constant 0 : index
    %112 = vector.load %arg8[%c96_143, %c0_144] : memref<192x256xf32, #tpu.memory_space<vmem>>, vector<24x128xf32>
    tpu.vector_store %arg8[%c96_143, %c0_144], %111 {strides = array<i32>} : memref<192x256xf32, #tpu.memory_space<vmem>>, vector<24x128xf32>,
    %c1_145 = arith.constant 1 : index
    %c0_146 = arith.constant 0 : index
    %c129_147 = arith.constant 129 : index
    %113 = vector.load %arg7[%c1_145, %c0_146, %c129_147] : memref<2x24x284xf32, #tpu.memory_space<vmem>>, vector<1x24x128xf32>
    %114 = vector.shape_cast %113 : vector<1x24x128xf32> to vector<24x128xf32>
    %c96_148 = arith.constant 96 : index
    %c128_149 = arith.constant 128 : index
    %115 = vector.load %arg8[%c96_148, %c128_149] : memref<192x256xf32, #tpu.memory_space<vmem>>, vector<24x128xf32>
    tpu.vector_store %arg8[%c96_148, %c128_149], %114 {strides = array<i32>} : memref<192x256xf32, #tpu.memory_space<vmem>>, vector<24x128xf32>,
    %c0_150 = arith.constant 0 : index
    %c0_151 = arith.constant 0 : index
    %c131_152 = arith.constant 131 : index
    %116 = vector.load %arg7[%c0_150, %c0_151, %c131_152] : memref<2x24x284xf32, #tpu.memory_space<vmem>>, vector<1x24x128xf32>
    %117 = vector.shape_cast %116 : vector<1x24x128xf32> to vector<24x128xf32>
    %c120_153 = arith.constant 120 : index
    %c0_154 = arith.constant 0 : index
    %118 = vector.load %arg8[%c120_153, %c0_154] : memref<192x256xf32, #tpu.memory_space<vmem>>, vector<24x128xf32>
    tpu.vector_store %arg8[%c120_153, %c0_154], %117 {strides = array<i32>} : memref<192x256xf32, #tpu.memory_space<vmem>>, vector<24x128xf32>,
    %c1_155 = arith.constant 1 : index
    %c0_156 = arith.constant 0 : index
    %c131_157 = arith.constant 131 : index
    %119 = vector.load %arg7[%c1_155, %c0_156, %c131_157] : memref<2x24x284xf32, #tpu.memory_space<vmem>>, vector<1x24x128xf32>
    %120 = vector.shape_cast %119 : vector<1x24x128xf32> to vector<24x128xf32>
    %c120_158 = arith.constant 120 : index
    %c128_159 = arith.constant 128 : index
    %121 = vector.load %arg8[%c120_158, %c128_159] : memref<192x256xf32, #tpu.memory_space<vmem>>, vector<24x128xf32>
    tpu.vector_store %arg8[%c120_158, %c128_159], %120 {strides = array<i32>} : memref<192x256xf32, #tpu.memory_space<vmem>>, vector<24x128xf32>,
    %c0_160 = arith.constant 0 : index
    %c0_161 = arith.constant 0 : index
    %c133 = arith.constant 133 : index
    %122 = vector.load %arg7[%c0_160, %c0_161, %c133] : memref<2x24x284xf32, #tpu.memory_space<vmem>>, vector<1x24x128xf32>
    %123 = vector.shape_cast %122 : vector<1x24x128xf32> to vector<24x128xf32>
    %c144_162 = arith.constant 144 : index
    %c0_163 = arith.constant 0 : index
    %124 = vector.load %arg8[%c144_162, %c0_163] : memref<192x256xf32, #tpu.memory_space<vmem>>, vector<24x128xf32>
    tpu.vector_store %arg8[%c144_162, %c0_163], %123 {strides = array<i32>} : memref<192x256xf32, #tpu.memory_space<vmem>>, vector<24x128xf32>,
    %c1_164 = arith.constant 1 : index
    %c0_165 = arith.constant 0 : index
    %c133_166 = arith.constant 133 : index
    %125 = vector.load %arg7[%c1_164, %c0_165, %c133_166] : memref<2x24x284xf32, #tpu.memory_space<vmem>>, vector<1x24x128xf32>
    %126 = vector.shape_cast %125 : vector<1x24x128xf32> to vector<24x128xf32>
    %c144_167 = arith.constant 144 : index
    %c128_168 = arith.constant 128 : index
    %127 = vector.load %arg8[%c144_167, %c128_168] : memref<192x256xf32, #tpu.memory_space<vmem>>, vector<24x128xf32>
    tpu.vector_store %arg8[%c144_167, %c128_168], %126 {strides = array<i32>} : memref<192x256xf32, #tpu.memory_space<vmem>>, vector<24x128xf32>,
    %c0_169 = arith.constant 0 : index
    %c0_170 = arith.constant 0 : index
    %c135 = arith.constant 135 : index
    %128 = vector.load %arg7[%c0_169, %c0_170, %c135] : memref<2x24x284xf32, #tpu.memory_space<vmem>>, vector<1x24x128xf32>
    %129 = vector.shape_cast %128 : vector<1x24x128xf32> to vector<24x128xf32>
    %c168_171 = arith.constant 168 : index
    %c0_172 = arith.constant 0 : index
    %130 = vector.load %arg8[%c168_171, %c0_172] : memref<192x256xf32, #tpu.memory_space<vmem>>, vector<24x128xf32>
    tpu.vector_store %arg8[%c168_171, %c0_172], %129 {strides = array<i32>} : memref<192x256xf32, #tpu.memory_space<vmem>>, vector<24x128xf32>,
    %c1_173 = arith.constant 1 : index
    %c0_174 = arith.constant 0 : index
    %c135_175 = arith.constant 135 : index
    %131 = vector.load %arg7[%c1_173, %c0_174, %c135_175] : memref<2x24x284xf32, #tpu.memory_space<vmem>>, vector<1x24x128xf32>
    %132 = vector.shape_cast %131 : vector<1x24x128xf32> to vector<24x128xf32>
    %c168_176 = arith.constant 168 : index
    %c128_177 = arith.constant 128 : index
    %133 = vector.load %arg8[%c168_176, %c128_177] : memref<192x256xf32, #tpu.memory_space<vmem>>, vector<24x128xf32>
    tpu.vector_store %arg8[%c168_176, %c128_177], %132 {strides = array<i32>} : memref<192x256xf32, #tpu.memory_space<vmem>>, vector<24x128xf32>,
    %c1_178 = arith.constant 1 : index
    %c0_179 = arith.constant 0 : index
    %c0_180 = arith.constant 0 : index
    %134 = vector.load %arg2[%c1_178, %c0_179, %c0_180] : memref<4x24x192xf32, #tpu.memory_space<vmem>>, vector<1x24x192xf32>
    %135 = vector.shape_cast %134 : vector<1x24x192xf32> to vector<24x192xf32>
    %c0_181 = arith.constant 0 : index
    %c0_182 = arith.constant 0 : index
    %136 = vector.load %arg8[%c0_181, %c0_182] : memref<192x256xf32, #tpu.memory_space<vmem>>, vector<192x256xf32>
    %cst_183 = arith.constant dense<0.000000e+00> : vector<24x256xf32>
    %137 = tpu.matmul %135, %136, %cst_183 {dimension_numbers = #tpu.dot_dimension_numbers<[1], [0], [0], [1], [0, 0, 1, 1], [], []>} : vector<24x192xf32>, vector<192x256xf32>, vector<24x256xf32> -> vector<24x256xf32>
    %c1_184 = arith.constant 1 : index
    %c0_185 = arith.constant 0 : index
    %c0_186 = arith.constant 0 : index
    %138 = vector.load %arg3[%c1_184, %c0_185, %c0_186] : memref<4x24x1xf32, #tpu.memory_space<vmem>>, vector<1x24x1xf32>
    %139 = vector.shape_cast %138 : vector<1x24x1xf32> to vector<24x1xf32>
    %140 = vector.broadcast %139 : vector<24x1xf32> to vector<24x256xf32>
    %141 = arith.addf %137, %140 : vector<24x256xf32>
    %cst_187 = arith.constant 0.000000e+00 : f32
    %142 = vector.broadcast %cst_187 : f32 to vector<24x256xf32>
    %143 = arith.maximumf %141, %142 : vector<24x256xf32>
    %c1_188 = arith.constant 1 : index
    %c0_189 = arith.constant 0 : index
    %c0_190 = arith.constant 0 : index
    %144 = vector.load %arg4[%c1_188, %c0_189, %c0_190] : memref<4x24x1xf32, #tpu.memory_space<vmem>>, vector<1x24x1xf32>
    %145 = vector.shape_cast %144 : vector<1x24x1xf32> to vector<24x1xf32>
    %146 = vector.broadcast %145 : vector<24x1xf32> to vector<24x256xf32>
    %147 = arith.mulf %143, %146 : vector<24x256xf32>
    %c1_191 = arith.constant 1 : index
    %c0_192 = arith.constant 0 : index
    %c0_193 = arith.constant 0 : index
    %148 = vector.load %arg5[%c1_191, %c0_192, %c0_193] : memref<4x24x1xf32, #tpu.memory_space<vmem>>, vector<1x24x1xf32>
    %149 = vector.shape_cast %148 : vector<1x24x1xf32> to vector<24x1xf32>
    %150 = vector.broadcast %149 : vector<24x1xf32> to vector<24x256xf32>
    %151 = arith.addf %147, %150 : vector<24x256xf32>
    %c0_194 = arith.constant 0 : index
    %c0_195 = arith.constant 0 : index
    %c128_196 = arith.constant 128 : index
    %152 = vector.load %arg7[%c0_194, %c0_195, %c128_196] : memref<2x24x284xf32, #tpu.memory_space<vmem>>, vector<1x24x128xf32>
    %153 = vector.shape_cast %152 : vector<1x24x128xf32> to vector<24x128xf32>
    %154 = vector.extract_strided_slice %151 {offsets = [0, 0], sizes = [24, 128], strides = [1, 1]} : vector<24x256xf32> to vector<24x128xf32>
    %155 = arith.addf %153, %154 : vector<24x128xf32>
    %c0_197 = arith.constant 0 : index
    %c0_198 = arith.constant 0 : index
    %c128_199 = arith.constant 128 : index
    %156 = vector.load %arg7[%c0_197, %c0_198, %c128_199] : memref<2x24x284xf32, #tpu.memory_space<vmem>>, vector<1x24x128xf32>
    %157 = vector.shape_cast %156 : vector<1x24x128xf32> to vector<24x128xf32>
    %158 = vector.shape_cast %155 : vector<24x128xf32> to vector<1x24x128xf32>
    tpu.vector_store %arg7[%c0_197, %c0_198, %c128_199], %158 {strides = array<i32>} : memref<2x24x284xf32, #tpu.memory_space<vmem>>, vector<1x24x128xf32>,
    %c1_200 = arith.constant 1 : index
    %c0_201 = arith.constant 0 : index
    %c128_202 = arith.constant 128 : index
    %159 = vector.load %arg7[%c1_200, %c0_201, %c128_202] : memref<2x24x284xf32, #tpu.memory_space<vmem>>, vector<1x24x128xf32>
    %160 = vector.shape_cast %159 : vector<1x24x128xf32> to vector<24x128xf32>
    %161 = vector.extract_strided_slice %151 {offsets = [0, 128], sizes = [24, 128], strides = [1, 1]} : vector<24x256xf32> to vector<24x128xf32>
    %162 = arith.addf %160, %161 : vector<24x128xf32>
    %c1_203 = arith.constant 1 : index
    %c0_204 = arith.constant 0 : index
    %c128_205 = arith.constant 128 : index
    %163 = vector.load %arg7[%c1_203, %c0_204, %c128_205] : memref<2x24x284xf32, #tpu.memory_space<vmem>>, vector<1x24x128xf32>
    %164 = vector.shape_cast %163 : vector<1x24x128xf32> to vector<24x128xf32>
    %165 = vector.shape_cast %162 : vector<24x128xf32> to vector<1x24x128xf32>
    tpu.vector_store %arg7[%c1_203, %c0_204, %c128_205], %165 {strides = array<i32>} : memref<2x24x284xf32, #tpu.memory_space<vmem>>, vector<1x24x128xf32>,
    %c0_206 = arith.constant 0 : index
    %c0_207 = arith.constant 0 : index
    %c114 = arith.constant 114 : index
    %166 = vector.load %arg7[%c0_206, %c0_207, %c114] : memref<2x24x284xf32, #tpu.memory_space<vmem>>, vector<1x24x128xf32>
    %167 = vector.shape_cast %166 : vector<1x24x128xf32> to vector<24x128xf32>
    %c0_208 = arith.constant 0 : index
    %c0_209 = arith.constant 0 : index
    %168 = vector.load %arg8[%c0_208, %c0_209] : memref<192x256xf32, #tpu.memory_space<vmem>>, vector<24x128xf32>
    tpu.vector_store %arg8[%c0_208, %c0_209], %167 {strides = array<i32>} : memref<192x256xf32, #tpu.memory_space<vmem>>, vector<24x128xf32>,
    %c1_210 = arith.constant 1 : index
    %c0_211 = arith.constant 0 : index
    %c114_212 = arith.constant 114 : index
    %169 = vector.load %arg7[%c1_210, %c0_211, %c114_212] : memref<2x24x284xf32, #tpu.memory_space<vmem>>, vector<1x24x128xf32>
    %170 = vector.shape_cast %169 : vector<1x24x128xf32> to vector<24x128xf32>
    %c0_213 = arith.constant 0 : index
    %c128_214 = arith.constant 128 : index
    %171 = vector.load %arg8[%c0_213, %c128_214] : memref<192x256xf32, #tpu.memory_space<vmem>>, vector<24x128xf32>
    tpu.vector_store %arg8[%c0_213, %c128_214], %170 {strides = array<i32>} : memref<192x256xf32, #tpu.memory_space<vmem>>, vector<24x128xf32>,
    %c0_215 = arith.constant 0 : index
    %c0_216 = arith.constant 0 : index
    %c118 = arith.constant 118 : index
    %172 = vector.load %arg7[%c0_215, %c0_216, %c118] : memref<2x24x284xf32, #tpu.memory_space<vmem>>, vector<1x24x128xf32>
    %173 = vector.shape_cast %172 : vector<1x24x128xf32> to vector<24x128xf32>
    %c24_217 = arith.constant 24 : index
    %c0_218 = arith.constant 0 : index
    %174 = vector.load %arg8[%c24_217, %c0_218] : memref<192x256xf32, #tpu.memory_space<vmem>>, vector<24x128xf32>
    tpu.vector_store %arg8[%c24_217, %c0_218], %173 {strides = array<i32>} : memref<192x256xf32, #tpu.memory_space<vmem>>, vector<24x128xf32>,
    %c1_219 = arith.constant 1 : index
    %c0_220 = arith.constant 0 : index
    %c118_221 = arith.constant 118 : index
    %175 = vector.load %arg7[%c1_219, %c0_220, %c118_221] : memref<2x24x284xf32, #tpu.memory_space<vmem>>, vector<1x24x128xf32>
    %176 = vector.shape_cast %175 : vector<1x24x128xf32> to vector<24x128xf32>
    %c24_222 = arith.constant 24 : index
    %c128_223 = arith.constant 128 : index
    %177 = vector.load %arg8[%c24_222, %c128_223] : memref<192x256xf32, #tpu.memory_space<vmem>>, vector<24x128xf32>
    tpu.vector_store %arg8[%c24_222, %c128_223], %176 {strides = array<i32>} : memref<192x256xf32, #tpu.memory_space<vmem>>, vector<24x128xf32>,
    %c0_224 = arith.constant 0 : index
    %c0_225 = arith.constant 0 : index
    %c122 = arith.constant 122 : index
    %178 = vector.load %arg7[%c0_224, %c0_225, %c122] : memref<2x24x284xf32, #tpu.memory_space<vmem>>, vector<1x24x128xf32>
    %179 = vector.shape_cast %178 : vector<1x24x128xf32> to vector<24x128xf32>
    %c48_226 = arith.constant 48 : index
    %c0_227 = arith.constant 0 : index
    %180 = vector.load %arg8[%c48_226, %c0_227] : memref<192x256xf32, #tpu.memory_space<vmem>>, vector<24x128xf32>
    tpu.vector_store %arg8[%c48_226, %c0_227], %179 {strides = array<i32>} : memref<192x256xf32, #tpu.memory_space<vmem>>, vector<24x128xf32>,
    %c1_228 = arith.constant 1 : index
    %c0_229 = arith.constant 0 : index
    %c122_230 = arith.constant 122 : index
    %181 = vector.load %arg7[%c1_228, %c0_229, %c122_230] : memref<2x24x284xf32, #tpu.memory_space<vmem>>, vector<1x24x128xf32>
    %182 = vector.shape_cast %181 : vector<1x24x128xf32> to vector<24x128xf32>
    %c48_231 = arith.constant 48 : index
    %c128_232 = arith.constant 128 : index
    %183 = vector.load %arg8[%c48_231, %c128_232] : memref<192x256xf32, #tpu.memory_space<vmem>>, vector<24x128xf32>
    tpu.vector_store %arg8[%c48_231, %c128_232], %182 {strides = array<i32>} : memref<192x256xf32, #tpu.memory_space<vmem>>, vector<24x128xf32>,
    %c0_233 = arith.constant 0 : index
    %c0_234 = arith.constant 0 : index
    %c126_235 = arith.constant 126 : index
    %184 = vector.load %arg7[%c0_233, %c0_234, %c126_235] : memref<2x24x284xf32, #tpu.memory_space<vmem>>, vector<1x24x128xf32>
    %185 = vector.shape_cast %184 : vector<1x24x128xf32> to vector<24x128xf32>
    %c72_236 = arith.constant 72 : index
    %c0_237 = arith.constant 0 : index
    %186 = vector.load %arg8[%c72_236, %c0_237] : memref<192x256xf32, #tpu.memory_space<vmem>>, vector<24x128xf32>
    tpu.vector_store %arg8[%c72_236, %c0_237], %185 {strides = array<i32>} : memref<192x256xf32, #tpu.memory_space<vmem>>, vector<24x128xf32>,
    %c1_238 = arith.constant 1 : index
    %c0_239 = arith.constant 0 : index
    %c126_240 = arith.constant 126 : index
    %187 = vector.load %arg7[%c1_238, %c0_239, %c126_240] : memref<2x24x284xf32, #tpu.memory_space<vmem>>, vector<1x24x128xf32>
    %188 = vector.shape_cast %187 : vector<1x24x128xf32> to vector<24x128xf32>
    %c72_241 = arith.constant 72 : index
    %c128_242 = arith.constant 128 : index
    %189 = vector.load %arg8[%c72_241, %c128_242] : memref<192x256xf32, #tpu.memory_space<vmem>>, vector<24x128xf32>
    tpu.vector_store %arg8[%c72_241, %c128_242], %188 {strides = array<i32>} : memref<192x256xf32, #tpu.memory_space<vmem>>, vector<24x128xf32>,
    %c0_243 = arith.constant 0 : index
    %c0_244 = arith.constant 0 : index
    %c130_245 = arith.constant 130 : index
    %190 = vector.load %arg7[%c0_243, %c0_244, %c130_245] : memref<2x24x284xf32, #tpu.memory_space<vmem>>, vector<1x24x128xf32>
    %191 = vector.shape_cast %190 : vector<1x24x128xf32> to vector<24x128xf32>
    %c96_246 = arith.constant 96 : index
    %c0_247 = arith.constant 0 : index
    %192 = vector.load %arg8[%c96_246, %c0_247] : memref<192x256xf32, #tpu.memory_space<vmem>>, vector<24x128xf32>
    tpu.vector_store %arg8[%c96_246, %c0_247], %191 {strides = array<i32>} : memref<192x256xf32, #tpu.memory_space<vmem>>, vector<24x128xf32>,
    %c1_248 = arith.constant 1 : index
    %c0_249 = arith.constant 0 : index
    %c130_250 = arith.constant 130 : index
    %193 = vector.load %arg7[%c1_248, %c0_249, %c130_250] : memref<2x24x284xf32, #tpu.memory_space<vmem>>, vector<1x24x128xf32>
    %194 = vector.shape_cast %193 : vector<1x24x128xf32> to vector<24x128xf32>
    %c96_251 = arith.constant 96 : index
    %c128_252 = arith.constant 128 : index
    %195 = vector.load %arg8[%c96_251, %c128_252] : memref<192x256xf32, #tpu.memory_space<vmem>>, vector<24x128xf32>
    tpu.vector_store %arg8[%c96_251, %c128_252], %194 {strides = array<i32>} : memref<192x256xf32, #tpu.memory_space<vmem>>, vector<24x128xf32>,
    %c0_253 = arith.constant 0 : index
    %c0_254 = arith.constant 0 : index
    %c134 = arith.constant 134 : index
    %196 = vector.load %arg7[%c0_253, %c0_254, %c134] : memref<2x24x284xf32, #tpu.memory_space<vmem>>, vector<1x24x128xf32>
    %197 = vector.shape_cast %196 : vector<1x24x128xf32> to vector<24x128xf32>
    %c120_255 = arith.constant 120 : index
    %c0_256 = arith.constant 0 : index
    %198 = vector.load %arg8[%c120_255, %c0_256] : memref<192x256xf32, #tpu.memory_space<vmem>>, vector<24x128xf32>
    tpu.vector_store %arg8[%c120_255, %c0_256], %197 {strides = array<i32>} : memref<192x256xf32, #tpu.memory_space<vmem>>, vector<24x128xf32>,
    %c1_257 = arith.constant 1 : index
    %c0_258 = arith.constant 0 : index
    %c134_259 = arith.constant 134 : index
    %199 = vector.load %arg7[%c1_257, %c0_258, %c134_259] : memref<2x24x284xf32, #tpu.memory_space<vmem>>, vector<1x24x128xf32>
    %200 = vector.shape_cast %199 : vector<1x24x128xf32> to vector<24x128xf32>
    %c120_260 = arith.constant 120 : index
    %c128_261 = arith.constant 128 : index
    %201 = vector.load %arg8[%c120_260, %c128_261] : memref<192x256xf32, #tpu.memory_space<vmem>>, vector<24x128xf32>
    tpu.vector_store %arg8[%c120_260, %c128_261], %200 {strides = array<i32>} : memref<192x256xf32, #tpu.memory_space<vmem>>, vector<24x128xf32>,
    %c0_262 = arith.constant 0 : index
    %c0_263 = arith.constant 0 : index
    %c138 = arith.constant 138 : index
    %202 = vector.load %arg7[%c0_262, %c0_263, %c138] : memref<2x24x284xf32, #tpu.memory_space<vmem>>, vector<1x24x128xf32>
    %203 = vector.shape_cast %202 : vector<1x24x128xf32> to vector<24x128xf32>
    %c144_264 = arith.constant 144 : index
    %c0_265 = arith.constant 0 : index
    %204 = vector.load %arg8[%c144_264, %c0_265] : memref<192x256xf32, #tpu.memory_space<vmem>>, vector<24x128xf32>
    tpu.vector_store %arg8[%c144_264, %c0_265], %203 {strides = array<i32>} : memref<192x256xf32, #tpu.memory_space<vmem>>, vector<24x128xf32>,
    %c1_266 = arith.constant 1 : index
    %c0_267 = arith.constant 0 : index
    %c138_268 = arith.constant 138 : index
    %205 = vector.load %arg7[%c1_266, %c0_267, %c138_268] : memref<2x24x284xf32, #tpu.memory_space<vmem>>, vector<1x24x128xf32>
    %206 = vector.shape_cast %205 : vector<1x24x128xf32> to vector<24x128xf32>
    %c144_269 = arith.constant 144 : index
    %c128_270 = arith.constant 128 : index
    %207 = vector.load %arg8[%c144_269, %c128_270] : memref<192x256xf32, #tpu.memory_space<vmem>>, vector<24x128xf32>
    tpu.vector_store %arg8[%c144_269, %c128_270], %206 {strides = array<i32>} : memref<192x256xf32, #tpu.memory_space<vmem>>, vector<24x128xf32>,
    %c0_271 = arith.constant 0 : index
    %c0_272 = arith.constant 0 : index
    %c142 = arith.constant 142 : index
    %208 = vector.load %arg7[%c0_271, %c0_272, %c142] : memref<2x24x284xf32, #tpu.memory_space<vmem>>, vector<1x24x128xf32>
    %209 = vector.shape_cast %208 : vector<1x24x128xf32> to vector<24x128xf32>
    %c168_273 = arith.constant 168 : index
    %c0_274 = arith.constant 0 : index
    %210 = vector.load %arg8[%c168_273, %c0_274] : memref<192x256xf32, #tpu.memory_space<vmem>>, vector<24x128xf32>
    tpu.vector_store %arg8[%c168_273, %c0_274], %209 {strides = array<i32>} : memref<192x256xf32, #tpu.memory_space<vmem>>, vector<24x128xf32>,
    %c1_275 = arith.constant 1 : index
    %c0_276 = arith.constant 0 : index
    %c142_277 = arith.constant 142 : index
    %211 = vector.load %arg7[%c1_275, %c0_276, %c142_277] : memref<2x24x284xf32, #tpu.memory_space<vmem>>, vector<1x24x128xf32>
    %212 = vector.shape_cast %211 : vector<1x24x128xf32> to vector<24x128xf32>
    %c168_278 = arith.constant 168 : index
    %c128_279 = arith.constant 128 : index
    %213 = vector.load %arg8[%c168_278, %c128_279] : memref<192x256xf32, #tpu.memory_space<vmem>>, vector<24x128xf32>
    tpu.vector_store %arg8[%c168_278, %c128_279], %212 {strides = array<i32>} : memref<192x256xf32, #tpu.memory_space<vmem>>, vector<24x128xf32>,
    %c2 = arith.constant 2 : index
    %c0_280 = arith.constant 0 : index
    %c0_281 = arith.constant 0 : index
    %214 = vector.load %arg2[%c2, %c0_280, %c0_281] : memref<4x24x192xf32, #tpu.memory_space<vmem>>, vector<1x24x192xf32>
    %215 = vector.shape_cast %214 : vector<1x24x192xf32> to vector<24x192xf32>
    %c0_282 = arith.constant 0 : index
    %c0_283 = arith.constant 0 : index
    %216 = vector.load %arg8[%c0_282, %c0_283] : memref<192x256xf32, #tpu.memory_space<vmem>>, vector<192x256xf32>
    %cst_284 = arith.constant dense<0.000000e+00> : vector<24x256xf32>
    %217 = tpu.matmul %215, %216, %cst_284 {dimension_numbers = #tpu.dot_dimension_numbers<[1], [0], [0], [1], [0, 0, 1, 1], [], []>} : vector<24x192xf32>, vector<192x256xf32>, vector<24x256xf32> -> vector<24x256xf32>
    %c2_285 = arith.constant 2 : index
    %c0_286 = arith.constant 0 : index
    %c0_287 = arith.constant 0 : index
    %218 = vector.load %arg3[%c2_285, %c0_286, %c0_287] : memref<4x24x1xf32, #tpu.memory_space<vmem>>, vector<1x24x1xf32>
    %219 = vector.shape_cast %218 : vector<1x24x1xf32> to vector<24x1xf32>
    %220 = vector.broadcast %219 : vector<24x1xf32> to vector<24x256xf32>
    %221 = arith.addf %217, %220 : vector<24x256xf32>
    %cst_288 = arith.constant 0.000000e+00 : f32
    %222 = vector.broadcast %cst_288 : f32 to vector<24x256xf32>
    %223 = arith.maximumf %221, %222 : vector<24x256xf32>
    %c2_289 = arith.constant 2 : index
    %c0_290 = arith.constant 0 : index
    %c0_291 = arith.constant 0 : index
    %224 = vector.load %arg4[%c2_289, %c0_290, %c0_291] : memref<4x24x1xf32, #tpu.memory_space<vmem>>, vector<1x24x1xf32>
    %225 = vector.shape_cast %224 : vector<1x24x1xf32> to vector<24x1xf32>
    %226 = vector.broadcast %225 : vector<24x1xf32> to vector<24x256xf32>
    %227 = arith.mulf %223, %226 : vector<24x256xf32>
    %c2_292 = arith.constant 2 : index
    %c0_293 = arith.constant 0 : index
    %c0_294 = arith.constant 0 : index
    %228 = vector.load %arg5[%c2_292, %c0_293, %c0_294] : memref<4x24x1xf32, #tpu.memory_space<vmem>>, vector<1x24x1xf32>
    %229 = vector.shape_cast %228 : vector<1x24x1xf32> to vector<24x1xf32>
    %230 = vector.broadcast %229 : vector<24x1xf32> to vector<24x256xf32>
    %231 = arith.addf %227, %230 : vector<24x256xf32>
    %c0_295 = arith.constant 0 : index
    %c0_296 = arith.constant 0 : index
    %c128_297 = arith.constant 128 : index
    %232 = vector.load %arg7[%c0_295, %c0_296, %c128_297] : memref<2x24x284xf32, #tpu.memory_space<vmem>>, vector<1x24x128xf32>
    %233 = vector.shape_cast %232 : vector<1x24x128xf32> to vector<24x128xf32>
    %234 = vector.extract_strided_slice %231 {offsets = [0, 0], sizes = [24, 128], strides = [1, 1]} : vector<24x256xf32> to vector<24x128xf32>
    %235 = arith.addf %233, %234 : vector<24x128xf32>
    %c0_298 = arith.constant 0 : index
    %c0_299 = arith.constant 0 : index
    %c128_300 = arith.constant 128 : index
    %236 = vector.load %arg7[%c0_298, %c0_299, %c128_300] : memref<2x24x284xf32, #tpu.memory_space<vmem>>, vector<1x24x128xf32>
    %237 = vector.shape_cast %236 : vector<1x24x128xf32> to vector<24x128xf32>
    %238 = vector.shape_cast %235 : vector<24x128xf32> to vector<1x24x128xf32>
    tpu.vector_store %arg7[%c0_298, %c0_299, %c128_300], %238 {strides = array<i32>} : memref<2x24x284xf32, #tpu.memory_space<vmem>>, vector<1x24x128xf32>,
    %c1_301 = arith.constant 1 : index
    %c0_302 = arith.constant 0 : index
    %c128_303 = arith.constant 128 : index
    %239 = vector.load %arg7[%c1_301, %c0_302, %c128_303] : memref<2x24x284xf32, #tpu.memory_space<vmem>>, vector<1x24x128xf32>
    %240 = vector.shape_cast %239 : vector<1x24x128xf32> to vector<24x128xf32>
    %241 = vector.extract_strided_slice %231 {offsets = [0, 128], sizes = [24, 128], strides = [1, 1]} : vector<24x256xf32> to vector<24x128xf32>
    %242 = arith.addf %240, %241 : vector<24x128xf32>
    %c1_304 = arith.constant 1 : index
    %c0_305 = arith.constant 0 : index
    %c128_306 = arith.constant 128 : index
    %243 = vector.load %arg7[%c1_304, %c0_305, %c128_306] : memref<2x24x284xf32, #tpu.memory_space<vmem>>, vector<1x24x128xf32>
    %244 = vector.shape_cast %243 : vector<1x24x128xf32> to vector<24x128xf32>
    %245 = vector.shape_cast %242 : vector<24x128xf32> to vector<1x24x128xf32>
    tpu.vector_store %arg7[%c1_304, %c0_305, %c128_306], %245 {strides = array<i32>} : memref<2x24x284xf32, #tpu.memory_space<vmem>>, vector<1x24x128xf32>,
    %c0_307 = arith.constant 0 : index
    %c0_308 = arith.constant 0 : index
    %c100_309 = arith.constant 100 : index
    %246 = vector.load %arg7[%c0_307, %c0_308, %c100_309] : memref<2x24x284xf32, #tpu.memory_space<vmem>>, vector<1x24x128xf32>
    %247 = vector.shape_cast %246 : vector<1x24x128xf32> to vector<24x128xf32>
    %c0_310 = arith.constant 0 : index
    %c0_311 = arith.constant 0 : index
    %248 = vector.load %arg8[%c0_310, %c0_311] : memref<192x256xf32, #tpu.memory_space<vmem>>, vector<24x128xf32>
    tpu.vector_store %arg8[%c0_310, %c0_311], %247 {strides = array<i32>} : memref<192x256xf32, #tpu.memory_space<vmem>>, vector<24x128xf32>,
    %c1_312 = arith.constant 1 : index
    %c0_313 = arith.constant 0 : index
    %c100_314 = arith.constant 100 : index
    %249 = vector.load %arg7[%c1_312, %c0_313, %c100_314] : memref<2x24x284xf32, #tpu.memory_space<vmem>>, vector<1x24x128xf32>
    %250 = vector.shape_cast %249 : vector<1x24x128xf32> to vector<24x128xf32>
    %c0_315 = arith.constant 0 : index
    %c128_316 = arith.constant 128 : index
    %251 = vector.load %arg8[%c0_315, %c128_316] : memref<192x256xf32, #tpu.memory_space<vmem>>, vector<24x128xf32>
    tpu.vector_store %arg8[%c0_315, %c128_316], %250 {strides = array<i32>} : memref<192x256xf32, #tpu.memory_space<vmem>>, vector<24x128xf32>,
    %c0_317 = arith.constant 0 : index
    %c0_318 = arith.constant 0 : index
    %c108 = arith.constant 108 : index
    %252 = vector.load %arg7[%c0_317, %c0_318, %c108] : memref<2x24x284xf32, #tpu.memory_space<vmem>>, vector<1x24x128xf32>
    %253 = vector.shape_cast %252 : vector<1x24x128xf32> to vector<24x128xf32>
    %c24_319 = arith.constant 24 : index
    %c0_320 = arith.constant 0 : index
    %254 = vector.load %arg8[%c24_319, %c0_320] : memref<192x256xf32, #tpu.memory_space<vmem>>, vector<24x128xf32>
    tpu.vector_store %arg8[%c24_319, %c0_320], %253 {strides = array<i32>} : memref<192x256xf32, #tpu.memory_space<vmem>>, vector<24x128xf32>,
    %c1_321 = arith.constant 1 : index
    %c0_322 = arith.constant 0 : index
    %c108_323 = arith.constant 108 : index
    %255 = vector.load %arg7[%c1_321, %c0_322, %c108_323] : memref<2x24x284xf32, #tpu.memory_space<vmem>>, vector<1x24x128xf32>
    %256 = vector.shape_cast %255 : vector<1x24x128xf32> to vector<24x128xf32>
    %c24_324 = arith.constant 24 : index
    %c128_325 = arith.constant 128 : index
    %257 = vector.load %arg8[%c24_324, %c128_325] : memref<192x256xf32, #tpu.memory_space<vmem>>, vector<24x128xf32>
    tpu.vector_store %arg8[%c24_324, %c128_325], %256 {strides = array<i32>} : memref<192x256xf32, #tpu.memory_space<vmem>>, vector<24x128xf32>,
    %c0_326 = arith.constant 0 : index
    %c0_327 = arith.constant 0 : index
    %c116 = arith.constant 116 : index
    %258 = vector.load %arg7[%c0_326, %c0_327, %c116] : memref<2x24x284xf32, #tpu.memory_space<vmem>>, vector<1x24x128xf32>
    %259 = vector.shape_cast %258 : vector<1x24x128xf32> to vector<24x128xf32>
    %c48_328 = arith.constant 48 : index
    %c0_329 = arith.constant 0 : index
    %260 = vector.load %arg8[%c48_328, %c0_329] : memref<192x256xf32, #tpu.memory_space<vmem>>, vector<24x128xf32>
    tpu.vector_store %arg8[%c48_328, %c0_329], %259 {strides = array<i32>} : memref<192x256xf32, #tpu.memory_space<vmem>>, vector<24x128xf32>,
    %c1_330 = arith.constant 1 : index
    %c0_331 = arith.constant 0 : index
    %c116_332 = arith.constant 116 : index
    %261 = vector.load %arg7[%c1_330, %c0_331, %c116_332] : memref<2x24x284xf32, #tpu.memory_space<vmem>>, vector<1x24x128xf32>
    %262 = vector.shape_cast %261 : vector<1x24x128xf32> to vector<24x128xf32>
    %c48_333 = arith.constant 48 : index
    %c128_334 = arith.constant 128 : index
    %263 = vector.load %arg8[%c48_333, %c128_334] : memref<192x256xf32, #tpu.memory_space<vmem>>, vector<24x128xf32>
    tpu.vector_store %arg8[%c48_333, %c128_334], %262 {strides = array<i32>} : memref<192x256xf32, #tpu.memory_space<vmem>>, vector<24x128xf32>,
    %c0_335 = arith.constant 0 : index
    %c0_336 = arith.constant 0 : index
    %c124 = arith.constant 124 : index
    %264 = vector.load %arg7[%c0_335, %c0_336, %c124] : memref<2x24x284xf32, #tpu.memory_space<vmem>>, vector<1x24x128xf32>
    %265 = vector.shape_cast %264 : vector<1x24x128xf32> to vector<24x128xf32>
    %c72_337 = arith.constant 72 : index
    %c0_338 = arith.constant 0 : index
    %266 = vector.load %arg8[%c72_337, %c0_338] : memref<192x256xf32, #tpu.memory_space<vmem>>, vector<24x128xf32>
    tpu.vector_store %arg8[%c72_337, %c0_338], %265 {strides = array<i32>} : memref<192x256xf32, #tpu.memory_space<vmem>>, vector<24x128xf32>,
    %c1_339 = arith.constant 1 : index
    %c0_340 = arith.constant 0 : index
    %c124_341 = arith.constant 124 : index
    %267 = vector.load %arg7[%c1_339, %c0_340, %c124_341] : memref<2x24x284xf32, #tpu.memory_space<vmem>>, vector<1x24x128xf32>
    %268 = vector.shape_cast %267 : vector<1x24x128xf32> to vector<24x128xf32>
    %c72_342 = arith.constant 72 : index
    %c128_343 = arith.constant 128 : index
    %269 = vector.load %arg8[%c72_342, %c128_343] : memref<192x256xf32, #tpu.memory_space<vmem>>, vector<24x128xf32>
    tpu.vector_store %arg8[%c72_342, %c128_343], %268 {strides = array<i32>} : memref<192x256xf32, #tpu.memory_space<vmem>>, vector<24x128xf32>,
    %c0_344 = arith.constant 0 : index
    %c0_345 = arith.constant 0 : index
    %c132_346 = arith.constant 132 : index
    %270 = vector.load %arg7[%c0_344, %c0_345, %c132_346] : memref<2x24x284xf32, #tpu.memory_space<vmem>>, vector<1x24x128xf32>
    %271 = vector.shape_cast %270 : vector<1x24x128xf32> to vector<24x128xf32>
    %c96_347 = arith.constant 96 : index
    %c0_348 = arith.constant 0 : index
    %272 = vector.load %arg8[%c96_347, %c0_348] : memref<192x256xf32, #tpu.memory_space<vmem>>, vector<24x128xf32>
    tpu.vector_store %arg8[%c96_347, %c0_348], %271 {strides = array<i32>} : memref<192x256xf32, #tpu.memory_space<vmem>>, vector<24x128xf32>,
    %c1_349 = arith.constant 1 : index
    %c0_350 = arith.constant 0 : index
    %c132_351 = arith.constant 132 : index
    %273 = vector.load %arg7[%c1_349, %c0_350, %c132_351] : memref<2x24x284xf32, #tpu.memory_space<vmem>>, vector<1x24x128xf32>
    %274 = vector.shape_cast %273 : vector<1x24x128xf32> to vector<24x128xf32>
    %c96_352 = arith.constant 96 : index
    %c128_353 = arith.constant 128 : index
    %275 = vector.load %arg8[%c96_352, %c128_353] : memref<192x256xf32, #tpu.memory_space<vmem>>, vector<24x128xf32>
    tpu.vector_store %arg8[%c96_352, %c128_353], %274 {strides = array<i32>} : memref<192x256xf32, #tpu.memory_space<vmem>>, vector<24x128xf32>,
    %c0_354 = arith.constant 0 : index
    %c0_355 = arith.constant 0 : index
    %c140 = arith.constant 140 : index
    %276 = vector.load %arg7[%c0_354, %c0_355, %c140] : memref<2x24x284xf32, #tpu.memory_space<vmem>>, vector<1x24x128xf32>
    %277 = vector.shape_cast %276 : vector<1x24x128xf32> to vector<24x128xf32>
    %c120_356 = arith.constant 120 : index
    %c0_357 = arith.constant 0 : index
    %278 = vector.load %arg8[%c120_356, %c0_357] : memref<192x256xf32, #tpu.memory_space<vmem>>, vector<24x128xf32>
    tpu.vector_store %arg8[%c120_356, %c0_357], %277 {strides = array<i32>} : memref<192x256xf32, #tpu.memory_space<vmem>>, vector<24x128xf32>,
    %c1_358 = arith.constant 1 : index
    %c0_359 = arith.constant 0 : index
    %c140_360 = arith.constant 140 : index
    %279 = vector.load %arg7[%c1_358, %c0_359, %c140_360] : memref<2x24x284xf32, #tpu.memory_space<vmem>>, vector<1x24x128xf32>
    %280 = vector.shape_cast %279 : vector<1x24x128xf32> to vector<24x128xf32>
    %c120_361 = arith.constant 120 : index
    %c128_362 = arith.constant 128 : index
    %281 = vector.load %arg8[%c120_361, %c128_362] : memref<192x256xf32, #tpu.memory_space<vmem>>, vector<24x128xf32>
    tpu.vector_store %arg8[%c120_361, %c128_362], %280 {strides = array<i32>} : memref<192x256xf32, #tpu.memory_space<vmem>>, vector<24x128xf32>,
    %c0_363 = arith.constant 0 : index
    %c0_364 = arith.constant 0 : index
    %c148 = arith.constant 148 : index
    %282 = vector.load %arg7[%c0_363, %c0_364, %c148] : memref<2x24x284xf32, #tpu.memory_space<vmem>>, vector<1x24x128xf32>
    %283 = vector.shape_cast %282 : vector<1x24x128xf32> to vector<24x128xf32>
    %c144_365 = arith.constant 144 : index
    %c0_366 = arith.constant 0 : index
    %284 = vector.load %arg8[%c144_365, %c0_366] : memref<192x256xf32, #tpu.memory_space<vmem>>, vector<24x128xf32>
    tpu.vector_store %arg8[%c144_365, %c0_366], %283 {strides = array<i32>} : memref<192x256xf32, #tpu.memory_space<vmem>>, vector<24x128xf32>,
    %c1_367 = arith.constant 1 : index
    %c0_368 = arith.constant 0 : index
    %c148_369 = arith.constant 148 : index
    %285 = vector.load %arg7[%c1_367, %c0_368, %c148_369] : memref<2x24x284xf32, #tpu.memory_space<vmem>>, vector<1x24x128xf32>
    %286 = vector.shape_cast %285 : vector<1x24x128xf32> to vector<24x128xf32>
    %c144_370 = arith.constant 144 : index
    %c128_371 = arith.constant 128 : index
    %287 = vector.load %arg8[%c144_370, %c128_371] : memref<192x256xf32, #tpu.memory_space<vmem>>, vector<24x128xf32>
    tpu.vector_store %arg8[%c144_370, %c128_371], %286 {strides = array<i32>} : memref<192x256xf32, #tpu.memory_space<vmem>>, vector<24x128xf32>,
    %c0_372 = arith.constant 0 : index
    %c0_373 = arith.constant 0 : index
    %c156 = arith.constant 156 : index
    %288 = vector.load %arg7[%c0_372, %c0_373, %c156] : memref<2x24x284xf32, #tpu.memory_space<vmem>>, vector<1x24x128xf32>
    %289 = vector.shape_cast %288 : vector<1x24x128xf32> to vector<24x128xf32>
    %c168_374 = arith.constant 168 : index
    %c0_375 = arith.constant 0 : index
    %290 = vector.load %arg8[%c168_374, %c0_375] : memref<192x256xf32, #tpu.memory_space<vmem>>, vector<24x128xf32>
    tpu.vector_store %arg8[%c168_374, %c0_375], %289 {strides = array<i32>} : memref<192x256xf32, #tpu.memory_space<vmem>>, vector<24x128xf32>,
    %c1_376 = arith.constant 1 : index
    %c0_377 = arith.constant 0 : index
    %c156_378 = arith.constant 156 : index
    %291 = vector.load %arg7[%c1_376, %c0_377, %c156_378] : memref<2x24x284xf32, #tpu.memory_space<vmem>>, vector<1x24x128xf32>
    %292 = vector.shape_cast %291 : vector<1x24x128xf32> to vector<24x128xf32>
    %c168_379 = arith.constant 168 : index
    %c128_380 = arith.constant 128 : index
    %293 = vector.load %arg8[%c168_379, %c128_380] : memref<192x256xf32, #tpu.memory_space<vmem>>, vector<24x128xf32>
    tpu.vector_store %arg8[%c168_379, %c128_380], %292 {strides = array<i32>} : memref<192x256xf32, #tpu.memory_space<vmem>>, vector<24x128xf32>,
    %c3 = arith.constant 3 : index
    %c0_381 = arith.constant 0 : index
    %c0_382 = arith.constant 0 : index
    %294 = vector.load %arg2[%c3, %c0_381, %c0_382] : memref<4x24x192xf32, #tpu.memory_space<vmem>>, vector<1x24x192xf32>
    %295 = vector.shape_cast %294 : vector<1x24x192xf32> to vector<24x192xf32>
    %c0_383 = arith.constant 0 : index
    %c0_384 = arith.constant 0 : index
    %296 = vector.load %arg8[%c0_383, %c0_384] : memref<192x256xf32, #tpu.memory_space<vmem>>, vector<192x256xf32>
    %cst_385 = arith.constant dense<0.000000e+00> : vector<24x256xf32>
    %297 = tpu.matmul %295, %296, %cst_385 {dimension_numbers = #tpu.dot_dimension_numbers<[1], [0], [0], [1], [0, 0, 1, 1], [], []>} : vector<24x192xf32>, vector<192x256xf32>, vector<24x256xf32> -> vector<24x256xf32>
    %c3_386 = arith.constant 3 : index
    %c0_387 = arith.constant 0 : index
    %c0_388 = arith.constant 0 : index
    %298 = vector.load %arg3[%c3_386, %c0_387, %c0_388] : memref<4x24x1xf32, #tpu.memory_space<vmem>>, vector<1x24x1xf32>
    %299 = vector.shape_cast %298 : vector<1x24x1xf32> to vector<24x1xf32>
    %300 = vector.broadcast %299 : vector<24x1xf32> to vector<24x256xf32>
    %301 = arith.addf %297, %300 : vector<24x256xf32>
    %cst_389 = arith.constant 0.000000e+00 : f32
    %302 = vector.broadcast %cst_389 : f32 to vector<24x256xf32>
    %303 = arith.maximumf %301, %302 : vector<24x256xf32>
    %c3_390 = arith.constant 3 : index
    %c0_391 = arith.constant 0 : index
    %c0_392 = arith.constant 0 : index
    %304 = vector.load %arg4[%c3_390, %c0_391, %c0_392] : memref<4x24x1xf32, #tpu.memory_space<vmem>>, vector<1x24x1xf32>
    %305 = vector.shape_cast %304 : vector<1x24x1xf32> to vector<24x1xf32>
    %306 = vector.broadcast %305 : vector<24x1xf32> to vector<24x256xf32>
    %307 = arith.mulf %303, %306 : vector<24x256xf32>
    %c3_393 = arith.constant 3 : index
    %c0_394 = arith.constant 0 : index
    %c0_395 = arith.constant 0 : index
    %308 = vector.load %arg5[%c3_393, %c0_394, %c0_395] : memref<4x24x1xf32, #tpu.memory_space<vmem>>, vector<1x24x1xf32>
    %309 = vector.shape_cast %308 : vector<1x24x1xf32> to vector<24x1xf32>
    %310 = vector.broadcast %309 : vector<24x1xf32> to vector<24x256xf32>
    %311 = arith.addf %307, %310 : vector<24x256xf32>
    %c0_396 = arith.constant 0 : index
    %c0_397 = arith.constant 0 : index
    %c128_398 = arith.constant 128 : index
    %312 = vector.load %arg7[%c0_396, %c0_397, %c128_398] : memref<2x24x284xf32, #tpu.memory_space<vmem>>, vector<1x24x128xf32>
    %313 = vector.shape_cast %312 : vector<1x24x128xf32> to vector<24x128xf32>
    %314 = vector.extract_strided_slice %311 {offsets = [0, 0], sizes = [24, 128], strides = [1, 1]} : vector<24x256xf32> to vector<24x128xf32>
    %315 = arith.addf %313, %314 : vector<24x128xf32>
    %c0_399 = arith.constant 0 : index
    %c0_400 = arith.constant 0 : index
    %c128_401 = arith.constant 128 : index
    %316 = vector.load %arg7[%c0_399, %c0_400, %c128_401] : memref<2x24x284xf32, #tpu.memory_space<vmem>>, vector<1x24x128xf32>
    %317 = vector.shape_cast %316 : vector<1x24x128xf32> to vector<24x128xf32>
    %318 = vector.shape_cast %315 : vector<24x128xf32> to vector<1x24x128xf32>
    tpu.vector_store %arg7[%c0_399, %c0_400, %c128_401], %318 {strides = array<i32>} : memref<2x24x284xf32, #tpu.memory_space<vmem>>, vector<1x24x128xf32>,
    %c1_402 = arith.constant 1 : index
    %c0_403 = arith.constant 0 : index
    %c128_404 = arith.constant 128 : index
    %319 = vector.load %arg7[%c1_402, %c0_403, %c128_404] : memref<2x24x284xf32, #tpu.memory_space<vmem>>, vector<1x24x128xf32>
    %320 = vector.shape_cast %319 : vector<1x24x128xf32> to vector<24x128xf32>
    %321 = vector.extract_strided_slice %311 {offsets = [0, 128], sizes = [24, 128], strides = [1, 1]} : vector<24x256xf32> to vector<24x128xf32>
    %322 = arith.addf %320, %321 : vector<24x128xf32>
    %c1_405 = arith.constant 1 : index
    %c0_406 = arith.constant 0 : index
    %c128_407 = arith.constant 128 : index
    %323 = vector.load %arg7[%c1_405, %c0_406, %c128_407] : memref<2x24x284xf32, #tpu.memory_space<vmem>>, vector<1x24x128xf32>
    %324 = vector.shape_cast %323 : vector<1x24x128xf32> to vector<24x128xf32>
    %325 = vector.shape_cast %322 : vector<24x128xf32> to vector<1x24x128xf32>
    tpu.vector_store %arg7[%c1_405, %c0_406, %c128_407], %325 {strides = array<i32>} : memref<2x24x284xf32, #tpu.memory_space<vmem>>, vector<1x24x128xf32>,
    %c0_408 = arith.constant 0 : index
    %c0_409 = arith.constant 0 : index
    %c128_410 = arith.constant 128 : index
    %326 = vector.load %arg7[%c0_408, %c0_409, %c128_410] : memref<2x24x284xf32, #tpu.memory_space<vmem>>, vector<2x24x128xf32>
    %c0_411 = arith.constant 0 : index
    %c0_412 = arith.constant 0 : index
    %c0_413 = arith.constant 0 : index
    %327 = vector.load %arg6[%c0_411, %c0_412, %c0_413] : memref<2x24x128xf32, #tpu.memory_space<vmem>>, vector<2x24x128xf32>
    tpu.vector_store %arg6[%c0_411, %c0_412, %c0_413], %326 {strides = array<i32>} : memref<2x24x128xf32, #tpu.memory_space<vmem>>, vector<2x24x128xf32>,
    return
  }
  func.func @transform_0(%arg0: i32) -> (i32, i32, i32) {
    %c0_i32 = arith.constant 0 : i32
    %c0_i32_0 = arith.constant 0 : i32
    %c0_i32_1 = arith.constant 0 : i32
    return %arg0, %c0_i32, %c0_i32_0 : i32, i32, i32
  }
  func.func @transform_1(%arg0: i32) -> (i32, i32, i32) {
    %c0_i32 = arith.constant 0 : i32
    %c0_i32_0 = arith.constant 0 : i32
    %c0_i32_1 = arith.constant 0 : i32
    %c0_i32_2 = arith.constant 0 : i32
    return %c0_i32, %c0_i32_0, %c0_i32_1 : i32, i32, i32
  }
  func.func @transform_2(%arg0: i32) -> (i32, i32, i32) {
    %c0_i32 = arith.constant 0 : i32
    %c0_i32_0 = arith.constant 0 : i32
    %c0_i32_1 = arith.constant 0 : i32
    %c0_i32_2 = arith.constant 0 : i32
    return %c0_i32, %c0_i32_0, %c0_i32_1 : i32, i32, i32
  }
  func.func @transform_3(%arg0: i32) -> (i32, i32, i32) {
    %c0_i32 = arith.constant 0 : i32
    %c0_i32_0 = arith.constant 0 : i32
    %c0_i32_1 = arith.constant 0 : i32
    %c0_i32_2 = arith.constant 0 : i32
    return %c0_i32, %c0_i32_0, %c0_i32_1 : i32, i32, i32
  }
  func.func @transform_4(%arg0: i32) -> (i32, i32, i32) {
    %c0_i32 = arith.constant 0 : i32
    %c0_i32_0 = arith.constant 0 : i32
    %c0_i32_1 = arith.constant 0 : i32
    %c0_i32_2 = arith.constant 0 : i32
    return %c0_i32, %c0_i32_0, %c0_i32_1 : i32, i32, i32
  }
  func.func @transform_5(%arg0: i32) -> (i32, i32, i32) {
    %c0_i32 = arith.constant 0 : i32
    %c0_i32_0 = arith.constant 0 : i32
    %c0_i32_1 = arith.constant 0 : i32
    return %arg0, %c0_i32, %c0_i32_0 : i32, i32, i32
  }
}

</mosaic_0001>

<llo_original>
// kernel: tpu_custom_call.1
$region0: #{tpu_custom_call.1}
  #allocation0 [shape = 'u32[]', space=smem, size = 0x4, offset = 0x4, fixed_abs, tag = 'smem constant byte address 0x4 - core index']
  #allocation1 [shape = 'u32[72,128]{1,0:T(1,128)}', space=vmem, size = 0x9000, scoped, tag = 'internal scratch']
  #allocation2 [shape = 'f32[2,24,284]{2,1,0:T(8,128)}', space=vmem, size = 0x12000, scoped, tag = 'scratch operand']
  #allocation3 [shape = 'f32[192,256]{1,0:T(8,128)}', space=vmem, size = 0x30000, scoped, tag = 'scratch operand']
  %s0 = inlined_call_operand.vmem [shape: f32[4,24,128], index: 0, kind: input, shape index: {}]
  %s1 = inlined_call_operand.vmem [shape: f32[4,24,192], index: 1, kind: input, shape index: {}]
  %s2 = inlined_call_operand.vmem [shape: f32[4,24,1], index: 2, kind: input, shape index: {}]
  %s3 = inlined_call_operand.vmem [shape: f32[4,24,1], index: 3, kind: input, shape index: {}]
  %s4 = inlined_call_operand.vmem [shape: f32[4,24,1], index: 4, kind: input, shape index: {}]
  %s5 = inlined_call_operand.hbm [shape: f32[4,24,128], index: 5, kind: output, shape index: {}]
  %s6 = sld [smem:[#allocation0]]
  $region53: #{tpu_custom_call.1} parent=0
    _
  %s8 = ssub.s32 1, %s6
  %s9 = scalar_select 0, %s8, %s6
  $region1: #{tpu_custom_call.1} parent=0
    #allocation4 [shape = 'u8[49152]{0}', space=vmem, size = 0xc000, scoped, tag = 'output window, operand 0']
    #allocation5 [shape = 's32[2]{0}', space=sflag, size = 0x8, scoped, tag = 'scoped memory for tpu_custom_call.1']
    %10 = vsyncpa [#allocation5], 0
    %s11 = scalar_lea.sflag [#allocation5], 1
    %12 = vsyncpa %s11, 0
    loop: start=0, step=1, limit=4
    $region2: #{tpu_custom_call.1} parent=1 // loop_pre_header
      _
    $region3: #{tpu_custom_call.1} parent=1 // loop_header
      %s14 = sphi 0, %s18
      %p15 = scmp.ge.s32.totalorder %s14, 4
      %s24 = sphi 0, %s26
      %s27 = sphi 0, %s24
      %s28 = sphi 0, %s27
      %s44 = sphi 0, %s28
      %s48 = sphi 0, %s48
      %s50 = sphi 0, %s48
      %s51 = sphi 0, %s50
      %s65 = sphi 0, %s51
      %s69 = sphi 0, %s69
      %s71 = sphi 0, %s69
      %s72 = sphi 0, %s71
      %s86 = sphi 0, %s72
      %s90 = sphi 0, %s90
      %s92 = sphi 0, %s90
      %s93 = sphi 0, %s92
      %s107 = sphi 0, %s93
      %s111 = sphi 0, %s111
      %s113 = sphi 0, %s111
      %s114 = sphi 0, %s113
      %s128 = sphi 0, %s114
      %s134 = sphi 0, %s136
      %s137 = sphi 0, %s134
      %s138 = sphi 0, %s137
      %s154 = sphi 0, %s138
    $region4: #{tpu_custom_call.1} parent=1 // loop_header_branch
      %17 = sbr.rel (%p15) target = $region8
    $region5: #{tpu_custom_call.1} parent=1 // loop_body
      %s19 = ssub.s32 %s14, 1
      %s20 = ssub.s32 %s14, 2
      %s21 = sadd.s32 %s14, 1
      %s22 = ssub.s32 %s14, %s21
      %p23 = scmp.eq.s32.totalorder %s22, 0
      %s25 = sadd.s32 %s24, 1
      %s26 = scalar_select %p23, %s24, %s25
      %p29 = pneg %p23
      %p30 = scmp.eq.s32.totalorder %s14, 1
      %p31 = por %p29, %p30
      %p32 = scmp.ne.s32.totalorder %s24, %s27
      %p33 = scmp.eq.s32.totalorder %s14, 0
      %p34 = por %p32, %p33
      %p35 = scmp.ne.s32.totalorder %s24, %s27
      %p36 = scmp.eq.s32.totalorder %s19, 1
      %p37 = por %p35, %p36
      %p38 = scmp.ne.s32.totalorder %s27, %s28
      %p39 = scmp.eq.s32.totalorder %s19, 0
      %p40 = por %p38, %p39
      %p41 = scmp.ne.s32.totalorder %s27, %s28
      %p42 = scmp.eq.s32.totalorder %s20, 1
      %p43 = por %p41, %p42
      %p45 = scmp.ne.s32.totalorder %s28, %s44
      %p46 = scmp.eq.s32.totalorder %s20, 0
      %p47 = por %p45, %p46
      %s49 = sadd.s32 %s48, 1
      %p52 = scmp.eq.s32.totalorder %s14, 1
      %p53 = scmp.ne.s32.totalorder %s48, %s50
      %p54 = scmp.eq.s32.totalorder %s14, 0
      %p55 = por %p53, %p54
      %p56 = scmp.ne.s32.totalorder %s48, %s50
      %p57 = scmp.eq.s32.totalorder %s19, 1
      %p58 = por %p56, %p57
      %p59 = scmp.ne.s32.totalorder %s50, %s51
      %p60 = scmp.eq.s32.totalorder %s19, 0
      %p61 = por %p59, %p60
      %p62 = scmp.ne.s32.totalorder %s50, %s51
      %p63 = scmp.eq.s32.totalorder %s20, 1
      %p64 = por %p62, %p63
      %p66 = scmp.ne.s32.totalorder %s51, %s65
      %p67 = scmp.eq.s32.totalorder %s20, 0
      %p68 = por %p66, %p67
      %s70 = sadd.s32 %s69, 1
      %p73 = scmp.eq.s32.totalorder %s14, 1
      %p74 = scmp.ne.s32.totalorder %s69, %s71
      %p75 = scmp.eq.s32.totalorder %s14, 0
      %p76 = por %p74, %p75
      %p77 = scmp.ne.s32.totalorder %s69, %s71
      %p78 = scmp.eq.s32.totalorder %s19, 1
      %p79 = por %p77, %p78
      %p80 = scmp.ne.s32.totalorder %s71, %s72
      %p81 = scmp.eq.s32.totalorder %s19, 0
      %p82 = por %p80, %p81
      %p83 = scmp.ne.s32.totalorder %s71, %s72
      %p84 = scmp.eq.s32.totalorder %s20, 1
      %p85 = por %p83, %p84
      %p87 = scmp.ne.s32.totalorder %s72, %s86
      %p88 = scmp.eq.s32.totalorder %s20, 0
      %p89 = por %p87, %p88
      %s91 = sadd.s32 %s90, 1
      %p94 = scmp.eq.s32.totalorder %s14, 1
      %p95 = scmp.ne.s32.totalorder %s90, %s92
      %p96 = scmp.eq.s32.totalorder %s14, 0
      %p97 = por %p95, %p96
      %p98 = scmp.ne.s32.totalorder %s90, %s92
      %p99 = scmp.eq.s32.totalorder %s19, 1
      %p100 = por %p98, %p99
      %p101 = scmp.ne.s32.totalorder %s92, %s93
      %p102 = scmp.eq.s32.totalorder %s19, 0
      %p103 = por %p101, %p102
      %p104 = scmp.ne.s32.totalorder %s92, %s93
      %p105 = scmp.eq.s32.totalorder %s20, 1
      %p106 = por %p104, %p105
      %p108 = scmp.ne.s32.totalorder %s93, %s107
      %p109 = scmp.eq.s32.totalorder %s20, 0
      %p110 = por %p108, %p109
      %s112 = sadd.s32 %s111, 1
      %p115 = scmp.eq.s32.totalorder %s14, 1
      %p116 = scmp.ne.s32.totalorder %s111, %s113
      %p117 = scmp.eq.s32.totalorder %s14, 0
      %p118 = por %p116, %p117
      %p119 = scmp.ne.s32.totalorder %s111, %s113
      %p120 = scmp.eq.s32.totalorder %s19, 1
      %p121 = por %p119, %p120
      %p122 = scmp.ne.s32.totalorder %s113, %s114
      %p123 = scmp.eq.s32.totalorder %s19, 0
      %p124 = por %p122, %p123
      %p125 = scmp.ne.s32.totalorder %s113, %s114
      %p126 = scmp.eq.s32.totalorder %s20, 1
      %p127 = por %p125, %p126
      %p129 = scmp.ne.s32.totalorder %s114, %s128
      %p130 = scmp.eq.s32.totalorder %s20, 0
      %p131 = por %p129, %p130
      %s132 = ssub.s32 %s14, %s21
      %p133 = scmp.eq.s32.totalorder %s132, 0
      %s135 = sadd.s32 %s134, 1
      %s136 = scalar_select %p133, %s134, %s135
      %p139 = pneg %p133
      %p140 = scmp.eq.s32.totalorder %s14, 1
      %p141 = por %p139, %p140
      %p142 = scmp.ne.s32.totalorder %s134, %s137
      %p143 = scmp.eq.s32.totalorder %s14, 0
      %p144 = por %p142, %p143
      %p145 = scmp.ne.s32.totalorder %s134, %s137
      %p146 = scmp.eq.s32.totalorder %s19, 1
      %p147 = por %p145, %p146
      %p148 = scmp.ne.s32.totalorder %s137, %s138
      %p149 = scmp.eq.s32.totalorder %s19, 0
      %p150 = por %p148, %p149
      %p151 = scmp.ne.s32.totalorder %s137, %s138
      %p152 = scmp.eq.s32.totalorder %s20, 1
      %p153 = por %p151, %p152
      %p155 = scmp.ne.s32.totalorder %s138, %s154
      %p156 = scmp.eq.s32.totalorder %s20, 0
      %p157 = por %p155, %p156
      %p158 = scmp.le.s32.totalorder 1, %s14
      %p159 = scmp.lt.s32.totalorder %s14, 3
      %p160 = pnand %p158, %p159
      %p161 = pneg %p160
      // Predicated region
      $region9: #{tpu_custom_call.1} parent=5 // pred_check
        _
      $region10: #{tpu_custom_call.1} parent=5 // pred_check_branch
        %163 = sbr.rel (%p160) target = $region12
      $region11: #{tpu_custom_call.1} parent=5 // pred_region
        %s164 = ssub.s32 %s14, 1
        // Predicated region
        $region13: #{tpu_custom_call.1} parent=11 // pred_check
          %p165 = pneg %p61
        $region14: #{tpu_custom_call.1} parent=11 // pred_check_branch
          %167 = sbr.rel (%p165) target = $region16
        $region15: #{tpu_custom_call.1} parent=11 // pred_region
          _
        $region16: #{tpu_custom_call.1} parent=11 // pred_fallthru
          _
        // Predicated region
        $region17: #{tpu_custom_call.1} parent=11 // pred_check
          %p168 = pneg %p82
        $region18: #{tpu_custom_call.1} parent=11 // pred_check_branch
          %170 = sbr.rel (%p168) target = $region20
        $region19: #{tpu_custom_call.1} parent=11 // pred_region
          _
        $region20: #{tpu_custom_call.1} parent=11 // pred_fallthru
          _
        // Predicated region
        $region21: #{tpu_custom_call.1} parent=11 // pred_check
          %p171 = pneg %p103
        $region22: #{tpu_custom_call.1} parent=11 // pred_check_branch
          %173 = sbr.rel (%p171) target = $region24
        $region23: #{tpu_custom_call.1} parent=11 // pred_region
          _
        $region24: #{tpu_custom_call.1} parent=11 // pred_fallthru
          _
        // Predicated region
        $region25: #{tpu_custom_call.1} parent=11 // pred_check
          %p174 = pneg %p124
        $region26: #{tpu_custom_call.1} parent=11 // pred_check_branch
          %176 = sbr.rel (%p174) target = $region28
        $region27: #{tpu_custom_call.1} parent=11 // pred_region
          _
        $region28: #{tpu_custom_call.1} parent=11 // pred_fallthru
          _
      $region12: #{tpu_custom_call.1} parent=5 // pred_fallthru
        _
      %p177 = scmp.lt.s32.totalorder %s14, 2
      // Predicated region
      $region29: #{tpu_custom_call.1} parent=5 // pred_check
        %p178 = pneg %p177
      $region30: #{tpu_custom_call.1} parent=5 // pred_check_branch
        %180 = sbr.rel (%p178) target = $region32
      $region31: #{tpu_custom_call.1} parent=5 // pred_region
        // Predicated region
        $region33: #{tpu_custom_call.1} parent=31 // pred_check
          %p181 = pneg %p34
        $region34: #{tpu_custom_call.1} parent=31 // pred_check_branch
          %183 = sbr.rel (%p181) target = $region36
        $region35: #{tpu_custom_call.1} parent=31 // pred_region
          %s184 = smul.u32 2, %s14
          %p185 = scmp.lt.s32.totalorder %s184, 3
          %s186 = scalar_select %p185, %s184, 3
          %s187 = smul.addr %s186, 3
          %s188 = smul.addr %s187, 8
          %s189 = scalar_lea.vmem %s0, %s188
          %s190 = smul.u32 2, %s14
        $region36: #{tpu_custom_call.1} parent=31 // pred_fallthru
          _
      $region32: #{tpu_custom_call.1} parent=5 // pred_fallthru
        _
      %p191 = scmp.le.s32.totalorder 1, %s14
      %p192 = scmp.lt.s32.totalorder %s14, 3
      %p193 = pnand %p191, %p192
      %p194 = pneg %p193
      // Predicated region
      $region37: #{tpu_custom_call.1} parent=5 // pred_check
        _
      $region38: #{tpu_custom_call.1} parent=5 // pred_check_branch
        %196 = sbr.rel (%p193) target = $region40
      $region39: #{tpu_custom_call.1} parent=5 // pred_region
        %s197 = ssub.s32 %s14, 1
        %s198 = smul.u32 2, %s19
        %p199 = scmp.lt.s32.totalorder %s198, 3
        %s200 = scalar_select %p199, %s198, 3
        %s201 = smul.addr %s200, 3
        %s202 = smul.addr %s201, 8
        %s203 = scalar_lea.vmem %s0, %s202
        %p204 = pneg %p40
        %p205 = pneg %p37
        %p206 = pneg %p61
        %p207 = pneg %p58
        %p208 = pneg %p82
        %p209 = pneg %p79
        %p210 = pneg %p103
        %p211 = pneg %p100
        %p212 = pneg %p124
        %p213 = pneg %p121
        %p214 = pneg %p150
        %p215 = pneg %p147
        %s216 = sand.u32 %s137, 1
        %s217 = scalar_lea.sflag [#allocation5], %s216
        %s218 = sand.u32 %s137, 1
        %s219 = smul.addr %s218, 48
        %s220 = scalar_lea.vmem [#allocation4], %s219
        %s221 = smul.u32 2, %s19
        %p222 = scmp.lt.s32.totalorder %s221, 3
        %s223 = scalar_select %p222, %s221, 3
        %s224 = smul.addr %s223, 3
        %s225 = smul.addr %s224, 8
        %s226 = scalar_lea.vmem %s0, %s225
        %s227 = smul.u32 2, %s19
        %s228 = smul.u32 2, %s19
        %vm229 = vcmask 1048352
        %230 = vst.msk [vmem:[#allocation2] sm:$0xff] %vm229, 0.0
        %231 = vst.msk [vmem:[#allocation2 + $0x18] sm:$0xff] %vm229, 0.0
        %232 = vst.msk [vmem:[#allocation2 + $0x30] sm:$0xff] %vm229, 0.0
        %233 = vst.msk [vmem:[#allocation2 + $0x48] sm:$0xff] %vm229, 0.0
        %234 = vst.msk [vmem:[#allocation2 + $0x60] sm:$0xff] %vm229, 0.0
        %235 = vst.msk [vmem:[#allocation2 + $0x78] sm:$0xff] %vm229, 0.0
        %vm236 = vcmask 228352
        %237 = vst.msk [vmem:[#allocation2 + $0x10] sm:$0xff] %vm236, 0.0
        %238 = vst.msk [vmem:[#allocation2 + $0x28] sm:$0xff] %vm236, 0.0
        %239 = vst.msk [vmem:[#allocation2 + $0x40] sm:$0xff] %vm236, 0.0
        %240 = vst.msk [vmem:[#allocation2 + $0x58] sm:$0xff] %vm236, 0.0
        %241 = vst.msk [vmem:[#allocation2 + $0x70] sm:$0xff] %vm236, 0.0
        %242 = vst.msk [vmem:[#allocation2 + $0x88] sm:$0xff] %vm236, 0.0
        %v243 = vld [vmem:[%s226] sm:$0xff]
        %v244 = vld [vmem:[%s226 + $0x8] sm:$0xff]
        %v245 = vld [vmem:[%s226 + $0x10] sm:$0xff]
        %v246 = vld [vmem:[%s226 + $0x18] sm:$0xff]
        %v247 = vld [vmem:[%s226 + $0x20] sm:$0xff]
        %v248 = vld [vmem:[%s226 + $0x28] sm:$0xff]
        %249 = vst [vmem:[#allocation2 + $0x8] sm:$0xff] %v243
        %250 = vst [vmem:[#allocation2 + $0x20] sm:$0xff] %v244
        %251 = vst [vmem:[#allocation2 + $0x38] sm:$0xff] %v245
        %252 = vst [vmem:[#allocation2 + $0x50] sm:$0xff] %v246
        %253 = vst [vmem:[#allocation2 + $0x68] sm:$0xff] %v247
        %254 = vst [vmem:[#allocation2 + $0x80] sm:$0xff] %v248
        %v255 = vld [vmem:[#allocation2] sm:$0xff]
        %v256 = vld [vmem:[#allocation2 + $0x8] sm:$0xff]
        %v257 = vld [vmem:[#allocation2 + $0x18] sm:$0xff]
        %v258 = vld [vmem:[#allocation2 + $0x20] sm:$0xff]
        %v259 = vld [vmem:[#allocation2 + $0x30] sm:$0xff]
        %v260 = vld [vmem:[#allocation2 + $0x38] sm:$0xff]
        %267 = vrot.lane.b32.xlu0 %v255, 3
        %v268 = vpop.permute.xlu0 %267
        %269 = vrot.lane.b32.xlu0 %v256, 3
        %v270 = vpop.permute.xlu0 %269
        %271 = vrot.lane.b32.xlu0 %v257, 3
        %v272 = vpop.permute.xlu0 %271
        %273 = vrot.lane.b32.xlu0 %v258, 3
        %v274 = vpop.permute.xlu0 %273
        %275 = vrot.lane.b32.xlu0 %v259, 3
        %v276 = vpop.permute.xlu0 %275
        %277 = vrot.lane.b32.xlu0 %v260, 3
        %v278 = vpop.permute.xlu0 %277
        %vm279 = vcmask 23552
        %v280 = vsel %vm279, %v268, %v270
        %v281 = vsel %vm279, %v272, %v274
        %v282 = vsel %vm279, %v276, %v278
        %286 = vst [vmem:[#allocation3] sm:$0xff] %v280
        %287 = vst [vmem:[#allocation3 + $0x10] sm:$0xff] %v281
        %288 = vst [vmem:[#allocation3 + $0x20] sm:$0xff] %v282
        %s289 = scalar_lea.vmem [#allocation2], 72
        %v290 = vld [vmem:[%s289] sm:$0xff]
        %v291 = vld [vmem:[%s289 + $0x8] sm:$0xff]
        %v292 = vld [vmem:[%s289 + $0x18] sm:$0xff]
        %v293 = vld [vmem:[%s289 + $0x20] sm:$0xff]
        %v294 = vld [vmem:[%s289 + $0x30] sm:$0xff]
        %v295 = vld [vmem:[%s289 + $0x38] sm:$0xff]
        %302 = vrot.lane.b32.xlu0 %v290, 3
        %v303 = vpop.permute.xlu0 %302
        %304 = vrot.lane.b32.xlu0 %v291, 3
        %v305 = vpop.permute.xlu0 %304
        %306 = vrot.lane.b32.xlu0 %v292, 3
        %v307 = vpop.permute.xlu0 %306
        %308 = vrot.lane.b32.xlu0 %v293, 3
        %v309 = vpop.permute.xlu0 %308
        %310 = vrot.lane.b32.xlu0 %v294, 3
        %v311 = vpop.permute.xlu0 %310
        %312 = vrot.lane.b32.xlu0 %v295, 3
        %v313 = vpop.permute.xlu0 %312
        %v314 = vsel %vm279, %v303, %v305
        %v315 = vsel %vm279, %v307, %v309
        %v316 = vsel %vm279, %v311, %v313
        %320 = vst [vmem:[#allocation3 + $0x8] sm:$0xff] %v314
        %321 = vst [vmem:[#allocation3 + $0x18] sm:$0xff] %v315
        %322 = vst [vmem:[#allocation3 + $0x28] sm:$0xff] %v316
        %v323 = vld [vmem:[#allocation2] sm:$0xff]
        %v324 = vld [vmem:[#allocation2 + $0x8] sm:$0xff]
        %v325 = vld [vmem:[#allocation2 + $0x18] sm:$0xff]
        %v326 = vld [vmem:[#allocation2 + $0x20] sm:$0xff]
        %v327 = vld [vmem:[#allocation2 + $0x30] sm:$0xff]
        %v328 = vld [vmem:[#allocation2 + $0x38] sm:$0xff]
        %335 = vrot.lane.b32.xlu0 %v323, 2
        %v336 = vpop.permute.xlu0 %335
        %337 = vrot.lane.b32.xlu0 %v324, 2
        %v338 = vpop.permute.xlu0 %337
        %339 = vrot.lane.b32.xlu0 %v325, 2
        %v340 = vpop.permute.xlu0 %339
        %341 = vrot.lane.b32.xlu0 %v326, 2
        %v342 = vpop.permute.xlu0 %341
        %343 = vrot.lane.b32.xlu0 %v327, 2
        %v344 = vpop.permute.xlu0 %343
        %345 = vrot.lane.b32.xlu0 %v328, 2
        %v346 = vpop.permute.xlu0 %345
        %vm347 = vcmask 15360
        %v348 = vsel %vm347, %v336, %v338
        %v349 = vsel %vm347, %v340, %v342
        %v350 = vsel %vm347, %v344, %v346
        %354 = vst [vmem:[#allocation3 + $0x30] sm:$0xff] %v348
        %355 = vst [vmem:[#allocation3 + $0x40] sm:$0xff] %v349
        %356 = vst [vmem:[#allocation3 + $0x50] sm:$0xff] %v350
        %v357 = vld [vmem:[%s289] sm:$0xff]
        %v358 = vld [vmem:[%s289 + $0x8] sm:$0xff]
        %v359 = vld [vmem:[%s289 + $0x18] sm:$0xff]
        %v360 = vld [vmem:[%s289 + $0x20] sm:$0xff]
        %v361 = vld [vmem:[%s289 + $0x30] sm:$0xff]
        %v362 = vld [vmem:[%s289 + $0x38] sm:$0xff]
        %369 = vrot.lane.b32.xlu0 %v357, 2
        %v370 = vpop.permute.xlu0 %369
        %371 = vrot.lane.b32.xlu0 %v358, 2
        %v372 = vpop.permute.xlu0 %371
        %373 = vrot.lane.b32.xlu0 %v359, 2
        %v374 = vpop.permute.xlu0 %373
        %375 = vrot.lane.b32.xlu0 %v360, 2
        %v376 = vpop.permute.xlu0 %375
        %377 = vrot.lane.b32.xlu0 %v361, 2
        %v378 = vpop.permute.xlu0 %377
        %379 = vrot.lane.b32.xlu0 %v362, 2
        %v380 = vpop.permute.xlu0 %379
        %v381 = vsel %vm347, %v370, %v372
        %v382 = vsel %vm347, %v374, %v376
        %v383 = vsel %vm347, %v378, %v380
        %387 = vst [vmem:[#allocation3 + $0x38] sm:$0xff] %v381
        %388 = vst [vmem:[#allocation3 + $0x48] sm:$0xff] %v382
        %389 = vst [vmem:[#allocation3 + $0x58] sm:$0xff] %v383
        %v390 = vld [vmem:[#allocation2] sm:$0xff]
        %v391 = vld [vmem:[#allocation2 + $0x8] sm:$0xff]
        %v392 = vld [vmem:[#allocation2 + $0x18] sm:$0xff]
        %v393 = vld [vmem:[#allocation2 + $0x20] sm:$0xff]
        %v394 = vld [vmem:[#allocation2 + $0x30] sm:$0xff]
        %v395 = vld [vmem:[#allocation2 + $0x38] sm:$0xff]
        %402 = vrot.lane.b32.xlu0 %v390, 1
        %v403 = vpop.permute.xlu0 %402
        %404 = vrot.lane.b32.xlu0 %v391, 1
        %v405 = vpop.permute.xlu0 %404
        %406 = vrot.lane.b32.xlu0 %v392, 1
        %v407 = vpop.permute.xlu0 %406
        %408 = vrot.lane.b32.xlu0 %v393, 1
        %v409 = vpop.permute.xlu0 %408
        %410 = vrot.lane.b32.xlu0 %v394, 1
        %v411 = vpop.permute.xlu0 %410
        %412 = vrot.lane.b32.xlu0 %v395, 1
        %v413 = vpop.permute.xlu0 %412
        %vm414 = vcmask 7168
        %v415 = vsel %vm414, %v403, %v405
        %v416 = vsel %vm414, %v407, %v409
        %v417 = vsel %vm414, %v411, %v413
        %421 = vst [vmem:[#allocation3 + $0x60] sm:$0xff] %v415
        %422 = vst [vmem:[#allocation3 + $0x70] sm:$0xff] %v416
        %423 = vst [vmem:[#allocation3 + $0x80] sm:$0xff] %v417
        %v424 = vld [vmem:[%s289] sm:$0xff]
        %v425 = vld [vmem:[%s289 + $0x8] sm:$0xff]
        %v426 = vld [vmem:[%s289 + $0x18] sm:$0xff]
        %v427 = vld [vmem:[%s289 + $0x20] sm:$0xff]
        %v428 = vld [vmem:[%s289 + $0x30] sm:$0xff]
        %v429 = vld [vmem:[%s289 + $0x38] sm:$0xff]
        %436 = vrot.lane.b32.xlu0 %v424, 1
        %v437 = vpop.permute.xlu0 %436
        %438 = vrot.lane.b32.xlu0 %v425, 1
        %v439 = vpop.permute.xlu0 %438
        %440 = vrot.lane.b32.xlu0 %v426, 1
        %v441 = vpop.permute.xlu0 %440
        %442 = vrot.lane.b32.xlu0 %v427, 1
        %v443 = vpop.permute.xlu0 %442
        %444 = vrot.lane.b32.xlu0 %v428, 1
        %v445 = vpop.permute.xlu0 %444
        %446 = vrot.lane.b32.xlu0 %v429, 1
        %v447 = vpop.permute.xlu0 %446
        %v448 = vsel %vm414, %v437, %v439
        %v449 = vsel %vm414, %v441, %v443
        %v450 = vsel %vm414, %v445, %v447
        %454 = vst [vmem:[#allocation3 + $0x68] sm:$0xff] %v448
        %455 = vst [vmem:[#allocation3 + $0x78] sm:$0xff] %v449
        %456 = vst [vmem:[#allocation3 + $0x88] sm:$0xff] %v450
        %v457 = vld [vmem:[#allocation2 + $0x8] sm:$0xff]
        %v458 = vld [vmem:[#allocation2 + $0x20] sm:$0xff]
        %v459 = vld [vmem:[#allocation2 + $0x38] sm:$0xff]
        %460 = vst [vmem:[#allocation3 + $0x90] sm:$0xff] %v457
        %461 = vst [vmem:[#allocation3 + $0xa0] sm:$0xff] %v458
        %462 = vst [vmem:[#allocation3 + $0xb0] sm:$0xff] %v459
        %v463 = vld [vmem:[%s289 + $0x8] sm:$0xff]
        %v464 = vld [vmem:[%s289 + $0x20] sm:$0xff]
        %v465 = vld [vmem:[%s289 + $0x38] sm:$0xff]
        %466 = vst [vmem:[#allocation3 + $0x98] sm:$0xff] %v463
        %467 = vst [vmem:[#allocation3 + $0xa8] sm:$0xff] %v464
        %468 = vst [vmem:[#allocation3 + $0xb8] sm:$0xff] %v465
        %v469 = vld [vmem:[#allocation2 + $0x8] sm:$0xff]
        %v470 = vld [vmem:[#allocation2 + $0x10] sm:$0xff]
        %v471 = vld [vmem:[#allocation2 + $0x20] sm:$0xff]
        %v472 = vld [vmem:[#allocation2 + $0x28] sm:$0xff]
        %v473 = vld [vmem:[#allocation2 + $0x38] sm:$0xff]
        %v474 = vld [vmem:[#allocation2 + $0x40] sm:$0xff]
        %481 = vrot.lane.b32.xlu0 %v469, 127
        %v482 = vpop.permute.xlu0 %481
        %483 = vrot.lane.b32.xlu0 %v470, 127
        %v484 = vpop.permute.xlu0 %483
        %485 = vrot.lane.b32.xlu0 %v471, 127
        %v486 = vpop.permute.xlu0 %485
        %487 = vrot.lane.b32.xlu0 %v472, 127
        %v488 = vpop.permute.xlu0 %487
        %489 = vrot.lane.b32.xlu0 %v473, 127
        %v490 = vpop.permute.xlu0 %489
        %491 = vrot.lane.b32.xlu0 %v474, 127
        %v492 = vpop.permute.xlu0 %491
        %vm493 = vcmask 1039360
        %v494 = vsel %vm493, %v482, %v484
        %v495 = vsel %vm493, %v486, %v488
        %v496 = vsel %vm493, %v490, %v492
        %500 = vst [vmem:[#allocation3 + $0xc0] sm:$0xff] %v494
        %501 = vst [vmem:[#allocation3 + $0xd0] sm:$0xff] %v495
        %502 = vst [vmem:[#allocation3 + $0xe0] sm:$0xff] %v496
        %v503 = vld [vmem:[%s289 + $0x8] sm:$0xff]
        %v504 = vld [vmem:[%s289 + $0x10] sm:$0xff]
        %v505 = vld [vmem:[%s289 + $0x20] sm:$0xff]
        %v506 = vld [vmem:[%s289 + $0x28] sm:$0xff]
        %v507 = vld [vmem:[%s289 + $0x38] sm:$0xff]
        %v508 = vld [vmem:[%s289 + $0x40] sm:$0xff]
        %515 = vrot.lane.b32.xlu0 %v503, 127
        %v516 = vpop.permute.xlu0 %515
        %517 = vrot.lane.b32.xlu0 %v504, 127
        %v518 = vpop.permute.xlu0 %517
        %519 = vrot.lane.b32.xlu0 %v505, 127
        %v520 = vpop.permute.xlu0 %519
        %521 = vrot.lane.b32.xlu0 %v506, 127
        %v522 = vpop.permute.xlu0 %521
        %523 = vrot.lane.b32.xlu0 %v507, 127
        %v524 = vpop.permute.xlu0 %523
        %525 = vrot.lane.b32.xlu0 %v508, 127
        %v526 = vpop.permute.xlu0 %525
        %v527 = vsel %vm493, %v516, %v518
        %v528 = vsel %vm493, %v520, %v522
        %v529 = vsel %vm493, %v524, %v526
        %533 = vst [vmem:[#allocation3 + $0xc8] sm:$0xff] %v527
        %534 = vst [vmem:[#allocation3 + $0xd8] sm:$0xff] %v528
        %535 = vst [vmem:[#allocation3 + $0xe8] sm:$0xff] %v529
        %v536 = vld [vmem:[#allocation2 + $0x8] sm:$0xff]
        %v537 = vld [vmem:[#allocation2 + $0x10] sm:$0xff]
        %v538 = vld [vmem:[#allocation2 + $0x20] sm:$0xff]
        %v539 = vld [vmem:[#allocation2 + $0x28] sm:$0xff]
        %v540 = vld [vmem:[#allocation2 + $0x38] sm:$0xff]
        %v541 = vld [vmem:[#allocation2 + $0x40] sm:$0xff]
        %548 = vrot.lane.b32.xlu0 %v536, 126
        %v549 = vpop.permute.xlu0 %548
        %550 = vrot.lane.b32.xlu0 %v537, 126
        %v551 = vpop.permute.xlu0 %550
        %552 = vrot.lane.b32.xlu0 %v538, 126
        %v553 = vpop.permute.xlu0 %552
        %554 = vrot.lane.b32.xlu0 %v539, 126
        %v555 = vpop.permute.xlu0 %554
        %556 = vrot.lane.b32.xlu0 %v540, 126
        %v557 = vpop.permute.xlu0 %556
        %558 = vrot.lane.b32.xlu0 %v541, 126
        %v559 = vpop.permute.xlu0 %558
        %vm560 = vcmask 1031168
        %v561 = vsel %vm560, %v549, %v551
        %v562 = vsel %vm560, %v553, %v555
        %v563 = vsel %vm560, %v557, %v559
        %567 = vst [vmem:[#allocation3 + $0xf0] sm:$0xff] %v561
        %568 = vst [vmem:[#allocation3 + $0x100] sm:$0xff] %v562
        %569 = vst [vmem:[#allocation3 + $0x110] sm:$0xff] %v563
        %v570 = vld [vmem:[%s289 + $0x8] sm:$0xff]
        %v571 = vld [vmem:[%s289 + $0x10] sm:$0xff]
        %v572 = vld [vmem:[%s289 + $0x20] sm:$0xff]
        %v573 = vld [vmem:[%s289 + $0x28] sm:$0xff]
        %v574 = vld [vmem:[%s289 + $0x38] sm:$0xff]
        %v575 = vld [vmem:[%s289 + $0x40] sm:$0xff]
        %582 = vrot.lane.b32.xlu0 %v570, 126
        %v583 = vpop.permute.xlu0 %582
        %584 = vrot.lane.b32.xlu0 %v571, 126
        %v585 = vpop.permute.xlu0 %584
        %586 = vrot.lane.b32.xlu0 %v572, 126
        %v587 = vpop.permute.xlu0 %586
        %588 = vrot.lane.b32.xlu0 %v573, 126
        %v589 = vpop.permute.xlu0 %588
        %590 = vrot.lane.b32.xlu0 %v574, 126
        %v591 = vpop.permute.xlu0 %590
        %592 = vrot.lane.b32.xlu0 %v575, 126
        %v593 = vpop.permute.xlu0 %592
        %v594 = vsel %vm560, %v583, %v585
        %v595 = vsel %vm560, %v587, %v589
        %v596 = vsel %vm560, %v591, %v593
        %600 = vst [vmem:[#allocation3 + $0xf8] sm:$0xff] %v594
        %601 = vst [vmem:[#allocation3 + $0x108] sm:$0xff] %v595
        %602 = vst [vmem:[#allocation3 + $0x118] sm:$0xff] %v596
        %v603 = vld [vmem:[#allocation2 + $0x8] sm:$0xff]
        %v604 = vld [vmem:[#allocation2 + $0x10] sm:$0xff]
        %v605 = vld [vmem:[#allocation2 + $0x20] sm:$0xff]
        %v606 = vld [vmem:[#allocation2 + $0x28] sm:$0xff]
        %v607 = vld [vmem:[#allocation2 + $0x38] sm:$0xff]
        %v608 = vld [vmem:[#allocation2 + $0x40] sm:$0xff]
        %615 = vrot.lane.b32.xlu0 %v603, 125
        %v616 = vpop.permute.xlu0 %615
        %617 = vrot.lane.b32.xlu0 %v604, 125
        %v618 = vpop.permute.xlu0 %617
        %619 = vrot.lane.b32.xlu0 %v605, 125
        %v620 = vpop.permute.xlu0 %619
        %621 = vrot.lane.b32.xlu0 %v606, 125
        %v622 = vpop.permute.xlu0 %621
        %623 = vrot.lane.b32.xlu0 %v607, 125
        %v624 = vpop.permute.xlu0 %623
        %625 = vrot.lane.b32.xlu0 %v608, 125
        %v626 = vpop.permute.xlu0 %625
        %vm627 = vcmask 1022976
        %v628 = vsel %vm627, %v616, %v618
        %v629 = vsel %vm627, %v620, %v622
        %v630 = vsel %vm627, %v624, %v626
        %634 = vst [vmem:[#allocation3 + $0x120] sm:$0xff] %v628
        %635 = vst [vmem:[#allocation3 + $0x130] sm:$0xff] %v629
        %636 = vst [vmem:[#allocation3 + $0x140] sm:$0xff] %v630
        %v637 = vld [vmem:[%s289 + $0x8] sm:$0xff]
        %v638 = vld [vmem:[%s289 + $0x10] sm:$0xff]
        %v639 = vld [vmem:[%s289 + $0x20] sm:$0xff]
        %v640 = vld [vmem:[%s289 + $0x28] sm:$0xff]
        %v641 = vld [vmem:[%s289 + $0x38] sm:$0xff]
        %v642 = vld [vmem:[%s289 + $0x40] sm:$0xff]
        %649 = vrot.lane.b32.xlu0 %v637, 125
        %v650 = vpop.permute.xlu0 %649
        %651 = vrot.lane.b32.xlu0 %v638, 125
        %v652 = vpop.permute.xlu0 %651
        %653 = vrot.lane.b32.xlu0 %v639, 125
        %v654 = vpop.permute.xlu0 %653
        %655 = vrot.lane.b32.xlu0 %v640, 125
        %v656 = vpop.permute.xlu0 %655
        %657 = vrot.lane.b32.xlu0 %v641, 125
        %v658 = vpop.permute.xlu0 %657
        %659 = vrot.lane.b32.xlu0 %v642, 125
        %v660 = vpop.permute.xlu0 %659
        %v661 = vsel %vm627, %v650, %v652
        %v662 = vsel %vm627, %v654, %v656
        %v663 = vsel %vm627, %v658, %v660
        %667 = vst [vmem:[#allocation3 + $0x128] sm:$0xff] %v661
        %668 = vst [vmem:[#allocation3 + $0x138] sm:$0xff] %v662
        %669 = vst [vmem:[#allocation3 + $0x148] sm:$0xff] %v663
        %v670 = vld [vmem:[#allocation2 + $0x8] sm:$0xff]
        %v671 = vld [vmem:[#allocation2 + $0x10] sm:$0xff]
        %v672 = vld [vmem:[#allocation2 + $0x20] sm:$0xff]
        %v673 = vld [vmem:[#allocation2 + $0x28] sm:$0xff]
        %v674 = vld [vmem:[#allocation2 + $0x38] sm:$0xff]
        %v675 = vld [vmem:[#allocation2 + $0x40] sm:$0xff]
        %682 = vrot.lane.b32.xlu0 %v670, 124
        %v683 = vpop.permute.xlu0 %682
        %684 = vrot.lane.b32.xlu0 %v671, 124
        %v685 = vpop.permute.xlu0 %684
        %686 = vrot.lane.b32.xlu0 %v672, 124
        %v687 = vpop.permute.xlu0 %686
        %688 = vrot.lane.b32.xlu0 %v673, 124
        %v689 = vpop.permute.xlu0 %688
        %690 = vrot.lane.b32.xlu0 %v674, 124
        %v691 = vpop.permute.xlu0 %690
        %692 = vrot.lane.b32.xlu0 %v675, 124
        %v693 = vpop.permute.xlu0 %692
        %vm694 = vcmask 1014784
        %v695 = vsel %vm694, %v683, %v685
        %v696 = vsel %vm694, %v687, %v689
        %v697 = vsel %vm694, %v691, %v693
        %701 = vst [vmem:[#allocation3 + $0x150] sm:$0xff] %v695
        %702 = vst [vmem:[#allocation3 + $0x160] sm:$0xff] %v696
        %703 = vst [vmem:[#allocation3 + $0x170] sm:$0xff] %v697
        %v704 = vld [vmem:[%s289 + $0x8] sm:$0xff]
        %v705 = vld [vmem:[%s289 + $0x10] sm:$0xff]
        %v706 = vld [vmem:[%s289 + $0x20] sm:$0xff]
        %v707 = vld [vmem:[%s289 + $0x28] sm:$0xff]
        %v708 = vld [vmem:[%s289 + $0x38] sm:$0xff]
        %v709 = vld [vmem:[%s289 + $0x40] sm:$0xff]
        %716 = vrot.lane.b32.xlu0 %v704, 124
        %v717 = vpop.permute.xlu0 %716
        %718 = vrot.lane.b32.xlu0 %v705, 124
        %v719 = vpop.permute.xlu0 %718
        %720 = vrot.lane.b32.xlu0 %v706, 124
        %v721 = vpop.permute.xlu0 %720
        %722 = vrot.lane.b32.xlu0 %v707, 124
        %v723 = vpop.permute.xlu0 %722
        %724 = vrot.lane.b32.xlu0 %v708, 124
        %v725 = vpop.permute.xlu0 %724
        %726 = vrot.lane.b32.xlu0 %v709, 124
        %v727 = vpop.permute.xlu0 %726
        %v728 = vsel %vm694, %v717, %v719
        %v729 = vsel %vm694, %v721, %v723
        %v730 = vsel %vm694, %v725, %v727
        %734 = vst [vmem:[#allocation3 + $0x158] sm:$0xff] %v728
        %735 = vst [vmem:[#allocation3 + $0x168] sm:$0xff] %v729
        %736 = vst [vmem:[#allocation3 + $0x178] sm:$0xff] %v730
        %v737 = vld [vmem:[%s1] sm:$0xff]
        %v738 = vld [vmem:[%s1 + $0x8] sm:$0xff]
        %v739 = vld [vmem:[%s1 + $0x10] sm:$0xff]
        %v740 = vld [vmem:[%s1 + $0x18] sm:$0xff]
        %v741 = vld [vmem:[%s1 + $0x20] sm:$0xff]
        %v742 = vld [vmem:[%s1 + $0x28] sm:$0xff]
        %v743 = vld [vmem:[#allocation3] sm:$0xff]
        %v744 = vld [vmem:[#allocation3 + $0x8] sm:$0xff]
        %v745 = vld [vmem:[#allocation3 + $0x10] sm:$0xff]
        %v746 = vld [vmem:[#allocation3 + $0x18] sm:$0xff]
        %v747 = vld [vmem:[#allocation3 + $0x20] sm:$0xff]
        %v748 = vld [vmem:[#allocation3 + $0x28] sm:$0xff]
        %v749 = vld [vmem:[#allocation3 + $0x30] sm:$0xff]
        %v750 = vld [vmem:[#allocation3 + $0x38] sm:$0xff]
        %v751 = vld [vmem:[#allocation3 + $0x40] sm:$0xff]
        %v752 = vld [vmem:[#allocation3 + $0x48] sm:$0xff]
        %v753 = vld [vmem:[#allocation3 + $0x50] sm:$0xff]
        %v754 = vld [vmem:[#allocation3 + $0x58] sm:$0xff]
        %v755 = vld [vmem:[#allocation3 + $0x60] sm:$0xff]
        %v756 = vld [vmem:[#allocation3 + $0x68] sm:$0xff]
        %v757 = vld [vmem:[#allocation3 + $0x70] sm:$0xff]
        %v758 = vld [vmem:[#allocation3 + $0x78] sm:$0xff]
        %v759 = vld [vmem:[#allocation3 + $0x80] sm:$0xff]
        %v760 = vld [vmem:[#allocation3 + $0x88] sm:$0xff]
        %v761 = vld [vmem:[#allocation3 + $0x90] sm:$0xff]
        %v762 = vld [vmem:[#allocation3 + $0x98] sm:$0xff]
        %v763 = vld [vmem:[#allocation3 + $0xa0] sm:$0xff]
        %v764 = vld [vmem:[#allocation3 + $0xa8] sm:$0xff]
        %v765 = vld [vmem:[#allocation3 + $0xb0] sm:$0xff]
        %v766 = vld [vmem:[#allocation3 + $0xb8] sm:$0xff]
        %v767 = vld [vmem:[#allocation3 + $0xc0] sm:$0xff]
        %v768 = vld [vmem:[#allocation3 + $0xc8] sm:$0xff]
        %v769 = vld [vmem:[#allocation3 + $0xd0] sm:$0xff]
        %v770 = vld [vmem:[#allocation3 + $0xd8] sm:$0xff]
        %v771 = vld [vmem:[#allocation3 + $0xe0] sm:$0xff]
        %v772 = vld [vmem:[#allocation3 + $0xe8] sm:$0xff]
        %v773 = vld [vmem:[#allocation3 + $0xf0] sm:$0xff]
        %v774 = vld [vmem:[#allocation3 + $0xf8] sm:$0xff]
        %v775 = vld [vmem:[#allocation3 + $0x100] sm:$0xff]
        %v776 = vld [vmem:[#allocation3 + $0x108] sm:$0xff]
        %v777 = vld [vmem:[#allocation3 + $0x110] sm:$0xff]
        %v778 = vld [vmem:[#allocation3 + $0x118] sm:$0xff]
        %v779 = vld [vmem:[#allocation3 + $0x120] sm:$0xff]
        %v780 = vld [vmem:[#allocation3 + $0x128] sm:$0xff]
        %v781 = vld [vmem:[#allocation3 + $0x130] sm:$0xff]
        %v782 = vld [vmem:[#allocation3 + $0x138] sm:$0xff]
        %v783 = vld [vmem:[#allocation3 + $0x140] sm:$0xff]
        %v784 = vld [vmem:[#allocation3 + $0x148] sm:$0xff]
        %v785 = vld [vmem:[#allocation3 + $0x150] sm:$0xff]
        %v786 = vld [vmem:[#allocation3 + $0x158] sm:$0xff]
        %v787 = vld [vmem:[#allocation3 + $0x160] sm:$0xff]
        %v788 = vld [vmem:[#allocation3 + $0x168] sm:$0xff]
        %v789 = vld [vmem:[#allocation3 + $0x170] sm:$0xff]
        %v790 = vld [vmem:[#allocation3 + $0x178] sm:$0xff]
        %v791 = vld [vmem:[%s2] sm:$0xff]
        %v792 = vld [vmem:[%s2 + $0x8] sm:$0xff]
        %v793 = vld [vmem:[%s2 + $0x10] sm:$0xff]
        %795 = vset.pattern.permute.xlu0 0
        %796 = vperm.xlu0 %795, %v791
        %v797 = vpop.permute.xlu0 %796
        %800 = vset.pattern.permute.xlu0 0
        %801 = vperm.xlu0 %800, %v792
        %v802 = vpop.permute.xlu0 %801
        %805 = vset.pattern.permute.xlu0 0
        %806 = vperm.xlu0 %805, %v793
        %v807 = vpop.permute.xlu0 %806
        %vm809 = vcmask 523264
        %v811 = vsel %vm809, %v738, 0
        %v814 = vsel %vm809, %v740, 0
        %v817 = vsel %vm809, %v742, 0
        %819 = vmatpush.msra.mxu0 %v773
        %820 = vmatpush.msra.mxu0 %v771
        %821 = vmatpush.msra.mxu0 %v769
        %822 = vmatpush.msra.mxu0 %v767
        %823 = vmatpush.msra.mxu0 %v765
        %824 = vmatpush.msra.mxu0 %v763
        %825 = vmatpush.msra.mxu0 %v761
        %826 = vmatpush.msra.mxu0 %v759
        %827 = vmatpush.msra.mxu0 %v757
        %828 = vmatpush.msra.mxu0 %v755
        %829 = vmatpush.msra.mxu0 %v753
        %830 = vmatpush.msra.mxu0 %v751
        %831 = vmatpush.msra.mxu0 %v749
        %832 = vmatpush.msra.mxu0 %v747
        %833 = vmatpush.msra.mxu0 %v745
        %834 = vmatpush.msra.mxu0 %v743
        %835 = vmatmul.f32.gmra.mxu0 %v737
        %v836 = vpop.f32.mrf.mxu0
        %v837 = vadd.f32 %v797, %v836
        %838 = vmatmul.f32.gmra.mxu0 %v739
        %v839 = vpop.f32.mrf.mxu0
        %v840 = vadd.f32 %v802, %v839
        %841 = vmatmul.f32.gmra.mxu0 %v741
        %v842 = vpop.f32.mrf.mxu0
        %v843 = vadd.f32 %v807, %v842
        %844 = vdwg.mxu0
        %845 = vmatpush.msra.mxu0 0.0
        %846 = vmatpush.msra.mxu0 0.0
        %847 = vmatpush.msra.mxu0 0.0
        %848 = vmatpush.msra.mxu0 0.0
        %849 = vmatpush.msra.mxu0 0.0
        %850 = vmatpush.msra.mxu0 0.0
        %851 = vmatpush.msra.mxu0 0.0
        %852 = vmatpush.msra.mxu0 0.0
        %853 = vmatpush.msra.mxu0 %v789
        %854 = vmatpush.msra.mxu0 %v787
        %855 = vmatpush.msra.mxu0 %v785
        %856 = vmatpush.msra.mxu0 %v783
        %857 = vmatpush.msra.mxu0 %v781
        %858 = vmatpush.msra.mxu0 %v779
        %859 = vmatpush.msra.mxu0 %v777
        %860 = vmatpush.msra.mxu0 %v775
        %861 = vmatmul.f32.gmra.mxu0 %v811
        %v862 = vpop.f32.mrf.mxu0
        %v863 = vadd.f32 %v837, %v862
        %864 = vmatmul.f32.gmra.mxu0 %v814
        %v865 = vpop.f32.mrf.mxu0
        %v866 = vadd.f32 %v840, %v865
        %867 = vmatmul.f32.gmra.mxu0 %v817
        %v868 = vpop.f32.mrf.mxu0
        %v869 = vadd.f32 %v843, %v868
        %870 = vdwg.mxu0
        %871 = vmatpush.msra.mxu0 %v774
        %872 = vmatpush.msra.mxu0 %v772
        %873 = vmatpush.msra.mxu0 %v770
        %874 = vmatpush.msra.mxu0 %v768
        %875 = vmatpush.msra.mxu0 %v766
        %876 = vmatpush.msra.mxu0 %v764
        %877 = vmatpush.msra.mxu0 %v762
        %878 = vmatpush.msra.mxu0 %v760
        %879 = vmatpush.msra.mxu0 %v758
        %880 = vmatpush.msra.mxu0 %v756
        %881 = vmatpush.msra.mxu0 %v754
        %882 = vmatpush.msra.mxu0 %v752
        %883 = vmatpush.msra.mxu0 %v750
        %884 = vmatpush.msra.mxu0 %v748
        %885 = vmatpush.msra.mxu0 %v746
        %886 = vmatpush.msra.mxu0 %v744
        %887 = vmatmul.f32.gmra.mxu0 %v737
        %v888 = vpop.f32.mrf.mxu0
        %v889 = vadd.f32 %v797, %v888
        %890 = vmatmul.f32.gmra.mxu0 %v739
        %v891 = vpop.f32.mrf.mxu0
        %v892 = vadd.f32 %v802, %v891
        %893 = vmatmul.f32.gmra.mxu0 %v741
        %v894 = vpop.f32.mrf.mxu0
        %v895 = vadd.f32 %v807, %v894
        %896 = vdwg.mxu0
        %897 = vmatpush.msra.mxu0 0.0
        %898 = vmatpush.msra.mxu0 0.0
        %899 = vmatpush.msra.mxu0 0.0
        %900 = vmatpush.msra.mxu0 0.0
        %901 = vmatpush.msra.mxu0 0.0
        %902 = vmatpush.msra.mxu0 0.0
        %903 = vmatpush.msra.mxu0 0.0
        %904 = vmatpush.msra.mxu0 0.0
        %905 = vmatpush.msra.mxu0 %v790
        %906 = vmatpush.msra.mxu0 %v788
        %907 = vmatpush.msra.mxu0 %v786
        %908 = vmatpush.msra.mxu0 %v784
        %909 = vmatpush.msra.mxu0 %v782
        %910 = vmatpush.msra.mxu0 %v780
        %911 = vmatpush.msra.mxu0 %v778
        %912 = vmatpush.msra.mxu0 %v776
        %913 = vmatmul.f32.gmra.mxu0 %v811
        %v914 = vpop.f32.mrf.mxu0
        %v915 = vadd.f32 %v889, %v914
        %916 = vmatmul.f32.gmra.mxu0 %v814
        %v917 = vpop.f32.mrf.mxu0
        %v918 = vadd.f32 %v892, %v917
        %919 = vmatmul.f32.gmra.mxu0 %v817
        %v920 = vpop.f32.mrf.mxu0
        %v921 = vadd.f32 %v895, %v920
        %922 = vdwg.mxu0
        %v923 = vmax.f32 %v863, 0.0
        %v924 = vmax.f32 %v915, 0.0
        %v925 = vmax.f32 %v866, 0.0
        %v926 = vmax.f32 %v918, 0.0
        %v927 = vmax.f32 %v869, 0.0
        %v928 = vmax.f32 %v921, 0.0
        %v929 = vld [vmem:[%s3] sm:$0xff]
        %v930 = vld [vmem:[%s3 + $0x8] sm:$0xff]
        %v931 = vld [vmem:[%s3 + $0x10] sm:$0xff]
        %933 = vset.pattern.permute.xlu0 0
        %934 = vperm.xlu0 %933, %v929
        %v935 = vpop.permute.xlu0 %934
        %938 = vset.pattern.permute.xlu0 0
        %939 = vperm.xlu0 %938, %v930
        %v940 = vpop.permute.xlu0 %939
        %943 = vset.pattern.permute.xlu0 0
        %944 = vperm.xlu0 %943, %v931
        %v945 = vpop.permute.xlu0 %944
        %v947 = vmul.f32 %v923, %v935
        %v948 = vmul.f32 %v924, %v935
        %v949 = vmul.f32 %v925, %v940
        %v950 = vmul.f32 %v926, %v940
        %v951 = vmul.f32 %v927, %v945
        %v952 = vmul.f32 %v928, %v945
        %v953 = vld [vmem:[%s4] sm:$0xff]
        %v954 = vld [vmem:[%s4 + $0x8] sm:$0xff]
        %v955 = vld [vmem:[%s4 + $0x10] sm:$0xff]
        %957 = vset.pattern.permute.xlu0 0
        %958 = vperm.xlu0 %957, %v953
        %v959 = vpop.permute.xlu0 %958
        %962 = vset.pattern.permute.xlu0 0
        %963 = vperm.xlu0 %962, %v954
        %v964 = vpop.permute.xlu0 %963
        %967 = vset.pattern.permute.xlu0 0
        %968 = vperm.xlu0 %967, %v955
        %v969 = vpop.permute.xlu0 %968
        %v971 = vadd.f32 %v947, %v959
        %v972 = vadd.f32 %v948, %v959
        %v973 = vadd.f32 %v949, %v964
        %v974 = vadd.f32 %v950, %v964
        %v975 = vadd.f32 %v951, %v969
        %v976 = vadd.f32 %v952, %v969
        %v977 = vld [vmem:[#allocation2 + $0x8] sm:$0xff]
        %v978 = vld [vmem:[#allocation2 + $0x20] sm:$0xff]
        %v979 = vld [vmem:[#allocation2 + $0x38] sm:$0xff]
        %v980 = vadd.f32 %v977, %v971
        %v981 = vadd.f32 %v978, %v973
        %v982 = vadd.f32 %v979, %v975
        %983 = vst [vmem:[#allocation2 + $0x8] sm:$0xff] %v980
        %984 = vst [vmem:[#allocation2 + $0x20] sm:$0xff] %v981
        %985 = vst [vmem:[#allocation2 + $0x38] sm:$0xff] %v982
        %v986 = vld [vmem:[%s289 + $0x8] sm:$0xff]
        %v987 = vld [vmem:[%s289 + $0x20] sm:$0xff]
        %v988 = vld [vmem:[%s289 + $0x38] sm:$0xff]
        %v989 = vadd.f32 %v986, %v972
        %v990 = vadd.f32 %v987, %v974
        %v991 = vadd.f32 %v988, %v976
        %992 = vst [vmem:[%s289 + $0x8] sm:$0xff] %v989
        %993 = vst [vmem:[%s289 + $0x20] sm:$0xff] %v990
        %994 = vst [vmem:[%s289 + $0x38] sm:$0xff] %v991
        %v995 = vld [vmem:[#allocation2] sm:$0xff]
        %v996 = vld [vmem:[#allocation2 + $0x8] sm:$0xff]
        %v997 = vld [vmem:[#allocation2 + $0x18] sm:$0xff]
        %v998 = vld [vmem:[#allocation2 + $0x20] sm:$0xff]
        %v999 = vld [vmem:[#allocation2 + $0x30] sm:$0xff]
        %v1000 = vld [vmem:[#allocation2 + $0x38] sm:$0xff]
        %1007 = vrot.lane.b32.xlu0 %v995, 7
        %v1008 = vpop.permute.xlu0 %1007
        %1009 = vrot.lane.b32.xlu0 %v996, 7
        %v1010 = vpop.permute.xlu0 %1009
        %1011 = vrot.lane.b32.xlu0 %v997, 7
        %v1012 = vpop.permute.xlu0 %1011
        %1013 = vrot.lane.b32.xlu0 %v998, 7
        %v1014 = vpop.permute.xlu0 %1013
        %1015 = vrot.lane.b32.xlu0 %v999, 7
        %v1016 = vpop.permute.xlu0 %1015
        %1017 = vrot.lane.b32.xlu0 %v1000, 7
        %v1018 = vpop.permute.xlu0 %1017
        %vm1019 = vcmask 56320
        %v1020 = vsel %vm1019, %v1008, %v1010
        %v1021 = vsel %vm1019, %v1012, %v1014
        %v1022 = vsel %vm1019, %v1016, %v1018
        %1026 = vst [vmem:[#allocation3] sm:$0xff] %v1020
        %1027 = vst [vmem:[#allocation3 + $0x10] sm:$0xff] %v1021
        %1028 = vst [vmem:[#allocation3 + $0x20] sm:$0xff] %v1022
        %v1029 = vld [vmem:[%s289] sm:$0xff]
        %v1030 = vld [vmem:[%s289 + $0x8] sm:$0xff]
        %v1031 = vld [vmem:[%s289 + $0x18] sm:$0xff]
        %v1032 = vld [vmem:[%s289 + $0x20] sm:$0xff]
        %v1033 = vld [vmem:[%s289 + $0x30] sm:$0xff]
        %v1034 = vld [vmem:[%s289 + $0x38] sm:$0xff]
        %1041 = vrot.lane.b32.xlu0 %v1029, 7
        %v1042 = vpop.permute.xlu0 %1041
        %1043 = vrot.lane.b32.xlu0 %v1030, 7
        %v1044 = vpop.permute.xlu0 %1043
        %1045 = vrot.lane.b32.xlu0 %v1031, 7
        %v1046 = vpop.permute.xlu0 %1045
        %1047 = vrot.lane.b32.xlu0 %v1032, 7
        %v1048 = vpop.permute.xlu0 %1047
        %1049 = vrot.lane.b32.xlu0 %v1033, 7
        %v1050 = vpop.permute.xlu0 %1049
        %1051 = vrot.lane.b32.xlu0 %v1034, 7
        %v1052 = vpop.permute.xlu0 %1051
        %v1053 = vsel %vm1019, %v1042, %v1044
        %v1054 = vsel %vm1019, %v1046, %v1048
        %v1055 = vsel %vm1019, %v1050, %v1052
        %1059 = vst [vmem:[#allocation3 + $0x8] sm:$0xff] %v1053
        %1060 = vst [vmem:[#allocation3 + $0x18] sm:$0xff] %v1054
        %1061 = vst [vmem:[#allocation3 + $0x28] sm:$0xff] %v1055
        %v1062 = vld [vmem:[#allocation2] sm:$0xff]
        %v1063 = vld [vmem:[#allocation2 + $0x8] sm:$0xff]
        %v1064 = vld [vmem:[#allocation2 + $0x18] sm:$0xff]
        %v1065 = vld [vmem:[#allocation2 + $0x20] sm:$0xff]
        %v1066 = vld [vmem:[#allocation2 + $0x30] sm:$0xff]
        %v1067 = vld [vmem:[#allocation2 + $0x38] sm:$0xff]
        %1074 = vrot.lane.b32.xlu0 %v1062, 5
        %v1075 = vpop.permute.xlu0 %1074
        %1076 = vrot.lane.b32.xlu0 %v1063, 5
        %v1077 = vpop.permute.xlu0 %1076
        %1078 = vrot.lane.b32.xlu0 %v1064, 5
        %v1079 = vpop.permute.xlu0 %1078
        %1080 = vrot.lane.b32.xlu0 %v1065, 5
        %v1081 = vpop.permute.xlu0 %1080
        %1082 = vrot.lane.b32.xlu0 %v1066, 5
        %v1083 = vpop.permute.xlu0 %1082
        %1084 = vrot.lane.b32.xlu0 %v1067, 5
        %v1085 = vpop.permute.xlu0 %1084
        %vm1086 = vcmask 39936
        %v1087 = vsel %vm1086, %v1075, %v1077
        %v1088 = vsel %vm1086, %v1079, %v1081
        %v1089 = vsel %vm1086, %v1083, %v1085
        %1093 = vst [vmem:[#allocation3 + $0x30] sm:$0xff] %v1087
        %1094 = vst [vmem:[#allocation3 + $0x40] sm:$0xff] %v1088
        %1095 = vst [vmem:[#allocation3 + $0x50] sm:$0xff] %v1089
        %v1096 = vld [vmem:[%s289] sm:$0xff]
        %v1097 = vld [vmem:[%s289 + $0x8] sm:$0xff]
        %v1098 = vld [vmem:[%s289 + $0x18] sm:$0xff]
        %v1099 = vld [vmem:[%s289 + $0x20] sm:$0xff]
        %v1100 = vld [vmem:[%s289 + $0x30] sm:$0xff]
        %v1101 = vld [vmem:[%s289 + $0x38] sm:$0xff]
        %1108 = vrot.lane.b32.xlu0 %v1096, 5
        %v1109 = vpop.permute.xlu0 %1108
        %1110 = vrot.lane.b32.xlu0 %v1097, 5
        %v1111 = vpop.permute.xlu0 %1110
        %1112 = vrot.lane.b32.xlu0 %v1098, 5
        %v1113 = vpop.permute.xlu0 %1112
        %1114 = vrot.lane.b32.xlu0 %v1099, 5
        %v1115 = vpop.permute.xlu0 %1114
        %1116 = vrot.lane.b32.xlu0 %v1100, 5
        %v1117 = vpop.permute.xlu0 %1116
        %1118 = vrot.lane.b32.xlu0 %v1101, 5
        %v1119 = vpop.permute.xlu0 %1118
        %v1120 = vsel %vm1086, %v1109, %v1111
        %v1121 = vsel %vm1086, %v1113, %v1115
        %v1122 = vsel %vm1086, %v1117, %v1119
        %1126 = vst [vmem:[#allocation3 + $0x38] sm:$0xff] %v1120
        %1127 = vst [vmem:[#allocation3 + $0x48] sm:$0xff] %v1121
        %1128 = vst [vmem:[#allocation3 + $0x58] sm:$0xff] %v1122
        %v1129 = vld [vmem:[#allocation2] sm:$0xff]
        %v1130 = vld [vmem:[#allocation2 + $0x8] sm:$0xff]
        %v1131 = vld [vmem:[#allocation2 + $0x18] sm:$0xff]
        %v1132 = vld [vmem:[#allocation2 + $0x20] sm:$0xff]
        %v1133 = vld [vmem:[#allocation2 + $0x30] sm:$0xff]
        %v1134 = vld [vmem:[#allocation2 + $0x38] sm:$0xff]
        %1141 = vrot.lane.b32.xlu0 %v1129, 3
        %v1142 = vpop.permute.xlu0 %1141
        %1143 = vrot.lane.b32.xlu0 %v1130, 3
        %v1144 = vpop.permute.xlu0 %1143
        %1145 = vrot.lane.b32.xlu0 %v1131, 3
        %v1146 = vpop.permute.xlu0 %1145
        %1147 = vrot.lane.b32.xlu0 %v1132, 3
        %v1148 = vpop.permute.xlu0 %1147
        %1149 = vrot.lane.b32.xlu0 %v1133, 3
        %v1150 = vpop.permute.xlu0 %1149
        %1151 = vrot.lane.b32.xlu0 %v1134, 3
        %v1152 = vpop.permute.xlu0 %1151
        %v1153 = vsel %vm279, %v1142, %v1144
        %v1154 = vsel %vm279, %v1146, %v1148
        %v1155 = vsel %vm279, %v1150, %v1152
        %1159 = vst [vmem:[#allocation3 + $0x60] sm:$0xff] %v1153
        %1160 = vst [vmem:[#allocation3 + $0x70] sm:$0xff] %v1154
        %1161 = vst [vmem:[#allocation3 + $0x80] sm:$0xff] %v1155
        %v1162 = vld [vmem:[%s289] sm:$0xff]
        %v1163 = vld [vmem:[%s289 + $0x8] sm:$0xff]
        %v1164 = vld [vmem:[%s289 + $0x18] sm:$0xff]
        %v1165 = vld [vmem:[%s289 + $0x20] sm:$0xff]
        %v1166 = vld [vmem:[%s289 + $0x30] sm:$0xff]
        %v1167 = vld [vmem:[%s289 + $0x38] sm:$0xff]
        %1174 = vrot.lane.b32.xlu0 %v1162, 3
        %v1175 = vpop.permute.xlu0 %1174
        %1176 = vrot.lane.b32.xlu0 %v1163, 3
        %v1177 = vpop.permute.xlu0 %1176
        %1178 = vrot.lane.b32.xlu0 %v1164, 3
        %v1179 = vpop.permute.xlu0 %1178
        %1180 = vrot.lane.b32.xlu0 %v1165, 3
        %v1181 = vpop.permute.xlu0 %1180
        %1182 = vrot.lane.b32.xlu0 %v1166, 3
        %v1183 = vpop.permute.xlu0 %1182
        %1184 = vrot.lane.b32.xlu0 %v1167, 3
        %v1185 = vpop.permute.xlu0 %1184
        %v1186 = vsel %vm279, %v1175, %v1177
        %v1187 = vsel %vm279, %v1179, %v1181
        %v1188 = vsel %vm279, %v1183, %v1185
        %1192 = vst [vmem:[#allocation3 + $0x68] sm:$0xff] %v1186
        %1193 = vst [vmem:[#allocation3 + $0x78] sm:$0xff] %v1187
        %1194 = vst [vmem:[#allocation3 + $0x88] sm:$0xff] %v1188
        %v1195 = vld [vmem:[#allocation2] sm:$0xff]
        %v1196 = vld [vmem:[#allocation2 + $0x8] sm:$0xff]
        %v1197 = vld [vmem:[#allocation2 + $0x18] sm:$0xff]
        %v1198 = vld [vmem:[#allocation2 + $0x20] sm:$0xff]
        %v1199 = vld [vmem:[#allocation2 + $0x30] sm:$0xff]
        %v1200 = vld [vmem:[#allocation2 + $0x38] sm:$0xff]
        %1207 = vrot.lane.b32.xlu0 %v1195, 1
        %v1208 = vpop.permute.xlu0 %1207
        %1209 = vrot.lane.b32.xlu0 %v1196, 1
        %v1210 = vpop.permute.xlu0 %1209
        %1211 = vrot.lane.b32.xlu0 %v1197, 1
        %v1212 = vpop.permute.xlu0 %1211
        %1213 = vrot.lane.b32.xlu0 %v1198, 1
        %v1214 = vpop.permute.xlu0 %1213
        %1215 = vrot.lane.b32.xlu0 %v1199, 1
        %v1216 = vpop.permute.xlu0 %1215
        %1217 = vrot.lane.b32.xlu0 %v1200, 1
        %v1218 = vpop.permute.xlu0 %1217
        %v1219 = vsel %vm414, %v1208, %v1210
        %v1220 = vsel %vm414, %v1212, %v1214
        %v1221 = vsel %vm414, %v1216, %v1218
        %1225 = vst [vmem:[#allocation3 + $0x90] sm:$0xff] %v1219
        %1226 = vst [vmem:[#allocation3 + $0xa0] sm:$0xff] %v1220
        %1227 = vst [vmem:[#allocation3 + $0xb0] sm:$0xff] %v1221
        %v1228 = vld [vmem:[%s289] sm:$0xff]
        %v1229 = vld [vmem:[%s289 + $0x8] sm:$0xff]
        %v1230 = vld [vmem:[%s289 + $0x18] sm:$0xff]
        %v1231 = vld [vmem:[%s289 + $0x20] sm:$0xff]
        %v1232 = vld [vmem:[%s289 + $0x30] sm:$0xff]
        %v1233 = vld [vmem:[%s289 + $0x38] sm:$0xff]
        %1240 = vrot.lane.b32.xlu0 %v1228, 1
        %v1241 = vpop.permute.xlu0 %1240
        %1242 = vrot.lane.b32.xlu0 %v1229, 1
        %v1243 = vpop.permute.xlu0 %1242
        %1244 = vrot.lane.b32.xlu0 %v1230, 1
        %v1245 = vpop.permute.xlu0 %1244
        %1246 = vrot.lane.b32.xlu0 %v1231, 1
        %v1247 = vpop.permute.xlu0 %1246
        %1248 = vrot.lane.b32.xlu0 %v1232, 1
        %v1249 = vpop.permute.xlu0 %1248
        %1250 = vrot.lane.b32.xlu0 %v1233, 1
        %v1251 = vpop.permute.xlu0 %1250
        %v1252 = vsel %vm414, %v1241, %v1243
        %v1253 = vsel %vm414, %v1245, %v1247
        %v1254 = vsel %vm414, %v1249, %v1251
        %1258 = vst [vmem:[#allocation3 + $0x98] sm:$0xff] %v1252
        %1259 = vst [vmem:[#allocation3 + $0xa8] sm:$0xff] %v1253
        %1260 = vst [vmem:[#allocation3 + $0xb8] sm:$0xff] %v1254
        %v1261 = vld [vmem:[#allocation2 + $0x8] sm:$0xff]
        %v1262 = vld [vmem:[#allocation2 + $0x10] sm:$0xff]
        %v1263 = vld [vmem:[#allocation2 + $0x20] sm:$0xff]
        %v1264 = vld [vmem:[#allocation2 + $0x28] sm:$0xff]
        %v1265 = vld [vmem:[#allocation2 + $0x38] sm:$0xff]
        %v1266 = vld [vmem:[#allocation2 + $0x40] sm:$0xff]
        %1273 = vrot.lane.b32.xlu0 %v1261, 127
        %v1274 = vpop.permute.xlu0 %1273
        %1275 = vrot.lane.b32.xlu0 %v1262, 127
        %v1276 = vpop.permute.xlu0 %1275
        %1277 = vrot.lane.b32.xlu0 %v1263, 127
        %v1278 = vpop.permute.xlu0 %1277
        %1279 = vrot.lane.b32.xlu0 %v1264, 127
        %v1280 = vpop.permute.xlu0 %1279
        %1281 = vrot.lane.b32.xlu0 %v1265, 127
        %v1282 = vpop.permute.xlu0 %1281
        %1283 = vrot.lane.b32.xlu0 %v1266, 127
        %v1284 = vpop.permute.xlu0 %1283
        %v1285 = vsel %vm493, %v1274, %v1276
        %v1286 = vsel %vm493, %v1278, %v1280
        %v1287 = vsel %vm493, %v1282, %v1284
        %1291 = vst [vmem:[#allocation3 + $0xc0] sm:$0xff] %v1285
        %1292 = vst [vmem:[#allocation3 + $0xd0] sm:$0xff] %v1286
        %1293 = vst [vmem:[#allocation3 + $0xe0] sm:$0xff] %v1287
        %v1294 = vld [vmem:[%s289 + $0x8] sm:$0xff]
        %v1295 = vld [vmem:[%s289 + $0x10] sm:$0xff]
        %v1296 = vld [vmem:[%s289 + $0x20] sm:$0xff]
        %v1297 = vld [vmem:[%s289 + $0x28] sm:$0xff]
        %v1298 = vld [vmem:[%s289 + $0x38] sm:$0xff]
        %v1299 = vld [vmem:[%s289 + $0x40] sm:$0xff]
        %1306 = vrot.lane.b32.xlu0 %v1294, 127
        %v1307 = vpop.permute.xlu0 %1306
        %1308 = vrot.lane.b32.xlu0 %v1295, 127
        %v1309 = vpop.permute.xlu0 %1308
        %1310 = vrot.lane.b32.xlu0 %v1296, 127
        %v1311 = vpop.permute.xlu0 %1310
        %1312 = vrot.lane.b32.xlu0 %v1297, 127
        %v1313 = vpop.permute.xlu0 %1312
        %1314 = vrot.lane.b32.xlu0 %v1298, 127
        %v1315 = vpop.permute.xlu0 %1314
        %1316 = vrot.lane.b32.xlu0 %v1299, 127
        %v1317 = vpop.permute.xlu0 %1316
        %v1318 = vsel %vm493, %v1307, %v1309
        %v1319 = vsel %vm493, %v1311, %v1313
        %v1320 = vsel %vm493, %v1315, %v1317
        %1324 = vst [vmem:[#allocation3 + $0xc8] sm:$0xff] %v1318
        %1325 = vst [vmem:[#allocation3 + $0xd8] sm:$0xff] %v1319
        %1326 = vst [vmem:[#allocation3 + $0xe8] sm:$0xff] %v1320
        %v1327 = vld [vmem:[#allocation2 + $0x8] sm:$0xff]
        %v1328 = vld [vmem:[#allocation2 + $0x10] sm:$0xff]
        %v1329 = vld [vmem:[#allocation2 + $0x20] sm:$0xff]
        %v1330 = vld [vmem:[#allocation2 + $0x28] sm:$0xff]
        %v1331 = vld [vmem:[#allocation2 + $0x38] sm:$0xff]
        %v1332 = vld [vmem:[#allocation2 + $0x40] sm:$0xff]
        %1339 = vrot.lane.b32.xlu0 %v1327, 125
        %v1340 = vpop.permute.xlu0 %1339
        %1341 = vrot.lane.b32.xlu0 %v1328, 125
        %v1342 = vpop.permute.xlu0 %1341
        %1343 = vrot.lane.b32.xlu0 %v1329, 125
        %v1344 = vpop.permute.xlu0 %1343
        %1345 = vrot.lane.b32.xlu0 %v1330, 125
        %v1346 = vpop.permute.xlu0 %1345
        %1347 = vrot.lane.b32.xlu0 %v1331, 125
        %v1348 = vpop.permute.xlu0 %1347
        %1349 = vrot.lane.b32.xlu0 %v1332, 125
        %v1350 = vpop.permute.xlu0 %1349
        %v1351 = vsel %vm627, %v1340, %v1342
        %v1352 = vsel %vm627, %v1344, %v1346
        %v1353 = vsel %vm627, %v1348, %v1350
        %1357 = vst [vmem:[#allocation3 + $0xf0] sm:$0xff] %v1351
        %1358 = vst [vmem:[#allocation3 + $0x100] sm:$0xff] %v1352
        %1359 = vst [vmem:[#allocation3 + $0x110] sm:$0xff] %v1353
        %v1360 = vld [vmem:[%s289 + $0x8] sm:$0xff]
        %v1361 = vld [vmem:[%s289 + $0x10] sm:$0xff]
        %v1362 = vld [vmem:[%s289 + $0x20] sm:$0xff]
        %v1363 = vld [vmem:[%s289 + $0x28] sm:$0xff]
        %v1364 = vld [vmem:[%s289 + $0x38] sm:$0xff]
        %v1365 = vld [vmem:[%s289 + $0x40] sm:$0xff]
        %1372 = vrot.lane.b32.xlu0 %v1360, 125
        %v1373 = vpop.permute.xlu0 %1372
        %1374 = vrot.lane.b32.xlu0 %v1361, 125
        %v1375 = vpop.permute.xlu0 %1374
        %1376 = vrot.lane.b32.xlu0 %v1362, 125
        %v1377 = vpop.permute.xlu0 %1376
        %1378 = vrot.lane.b32.xlu0 %v1363, 125
        %v1379 = vpop.permute.xlu0 %1378
        %1380 = vrot.lane.b32.xlu0 %v1364, 125
        %v1381 = vpop.permute.xlu0 %1380
        %1382 = vrot.lane.b32.xlu0 %v1365, 125
        %v1383 = vpop.permute.xlu0 %1382
        %v1384 = vsel %vm627, %v1373, %v1375
        %v1385 = vsel %vm627, %v1377, %v1379
        %v1386 = vsel %vm627, %v1381, %v1383
        %1390 = vst [vmem:[#allocation3 + $0xf8] sm:$0xff] %v1384
        %1391 = vst [vmem:[#allocation3 + $0x108] sm:$0xff] %v1385
        %1392 = vst [vmem:[#allocation3 + $0x118] sm:$0xff] %v1386
        %v1393 = vld [vmem:[#allocation2 + $0x8] sm:$0xff]
        %v1394 = vld [vmem:[#allocation2 + $0x10] sm:$0xff]
        %v1395 = vld [vmem:[#allocation2 + $0x20] sm:$0xff]
        %v1396 = vld [vmem:[#allocation2 + $0x28] sm:$0xff]
        %v1397 = vld [vmem:[#allocation2 + $0x38] sm:$0xff]
        %v1398 = vld [vmem:[#allocation2 + $0x40] sm:$0xff]
        %1405 = vrot.lane.b32.xlu0 %v1393, 123
        %v1406 = vpop.permute.xlu0 %1405
        %1407 = vrot.lane.b32.xlu0 %v1394, 123
        %v1408 = vpop.permute.xlu0 %1407
        %1409 = vrot.lane.b32.xlu0 %v1395, 123
        %v1410 = vpop.permute.xlu0 %1409
        %1411 = vrot.lane.b32.xlu0 %v1396, 123
        %v1412 = vpop.permute.xlu0 %1411
        %1413 = vrot.lane.b32.xlu0 %v1397, 123
        %v1414 = vpop.permute.xlu0 %1413
        %1415 = vrot.lane.b32.xlu0 %v1398, 123
        %v1416 = vpop.permute.xlu0 %1415
        %vm1417 = vcmask 1006592
        %v1418 = vsel %vm1417, %v1406, %v1408
        %v1419 = vsel %vm1417, %v1410, %v1412
        %v1420 = vsel %vm1417, %v1414, %v1416
        %1424 = vst [vmem:[#allocation3 + $0x120] sm:$0xff] %v1418
        %1425 = vst [vmem:[#allocation3 + $0x130] sm:$0xff] %v1419
        %1426 = vst [vmem:[#allocation3 + $0x140] sm:$0xff] %v1420
        %v1427 = vld [vmem:[%s289 + $0x8] sm:$0xff]
        %v1428 = vld [vmem:[%s289 + $0x10] sm:$0xff]
        %v1429 = vld [vmem:[%s289 + $0x20] sm:$0xff]
        %v1430 = vld [vmem:[%s289 + $0x28] sm:$0xff]
        %v1431 = vld [vmem:[%s289 + $0x38] sm:$0xff]
        %v1432 = vld [vmem:[%s289 + $0x40] sm:$0xff]
        %1439 = vrot.lane.b32.xlu0 %v1427, 123
        %v1440 = vpop.permute.xlu0 %1439
        %1441 = vrot.lane.b32.xlu0 %v1428, 123
        %v1442 = vpop.permute.xlu0 %1441
        %1443 = vrot.lane.b32.xlu0 %v1429, 123
        %v1444 = vpop.permute.xlu0 %1443
        %1445 = vrot.lane.b32.xlu0 %v1430, 123
        %v1446 = vpop.permute.xlu0 %1445
        %1447 = vrot.lane.b32.xlu0 %v1431, 123
        %v1448 = vpop.permute.xlu0 %1447
        %1449 = vrot.lane.b32.xlu0 %v1432, 123
        %v1450 = vpop.permute.xlu0 %1449
        %v1451 = vsel %vm1417, %v1440, %v1442
        %v1452 = vsel %vm1417, %v1444, %v1446
        %v1453 = vsel %vm1417, %v1448, %v1450
        %1457 = vst [vmem:[#allocation3 + $0x128] sm:$0xff] %v1451
        %1458 = vst [vmem:[#allocation3 + $0x138] sm:$0xff] %v1452
        %1459 = vst [vmem:[#allocation3 + $0x148] sm:$0xff] %v1453
        %v1460 = vld [vmem:[#allocation2 + $0x8] sm:$0xff]
        %v1461 = vld [vmem:[#allocation2 + $0x10] sm:$0xff]
        %v1462 = vld [vmem:[#allocation2 + $0x20] sm:$0xff]
        %v1463 = vld [vmem:[#allocation2 + $0x28] sm:$0xff]
        %v1464 = vld [vmem:[#allocation2 + $0x38] sm:$0xff]
        %v1465 = vld [vmem:[#allocation2 + $0x40] sm:$0xff]
        %1472 = vrot.lane.b32.xlu0 %v1460, 121
        %v1473 = vpop.permute.xlu0 %1472
        %1474 = vrot.lane.b32.xlu0 %v1461, 121
        %v1475 = vpop.permute.xlu0 %1474
        %1476 = vrot.lane.b32.xlu0 %v1462, 121
        %v1477 = vpop.permute.xlu0 %1476
        %1478 = vrot.lane.b32.xlu0 %v1463, 121
        %v1479 = vpop.permute.xlu0 %1478
        %1480 = vrot.lane.b32.xlu0 %v1464, 121
        %v1481 = vpop.permute.xlu0 %1480
        %1482 = vrot.lane.b32.xlu0 %v1465, 121
        %v1483 = vpop.permute.xlu0 %1482
        %vm1484 = vcmask 990208
        %v1485 = vsel %vm1484, %v1473, %v1475
        %v1486 = vsel %vm1484, %v1477, %v1479
        %v1487 = vsel %vm1484, %v1481, %v1483
        %1491 = vst [vmem:[#allocation3 + $0x150] sm:$0xff] %v1485
        %1492 = vst [vmem:[#allocation3 + $0x160] sm:$0xff] %v1486
        %1493 = vst [vmem:[#allocation3 + $0x170] sm:$0xff] %v1487
        %v1494 = vld [vmem:[%s289 + $0x8] sm:$0xff]
        %v1495 = vld [vmem:[%s289 + $0x10] sm:$0xff]
        %v1496 = vld [vmem:[%s289 + $0x20] sm:$0xff]
        %v1497 = vld [vmem:[%s289 + $0x28] sm:$0xff]
        %v1498 = vld [vmem:[%s289 + $0x38] sm:$0xff]
        %v1499 = vld [vmem:[%s289 + $0x40] sm:$0xff]
        %1506 = vrot.lane.b32.xlu0 %v1494, 121
        %v1507 = vpop.permute.xlu0 %1506
        %1508 = vrot.lane.b32.xlu0 %v1495, 121
        %v1509 = vpop.permute.xlu0 %1508
        %1510 = vrot.lane.b32.xlu0 %v1496, 121
        %v1511 = vpop.permute.xlu0 %1510
        %1512 = vrot.lane.b32.xlu0 %v1497, 121
        %v1513 = vpop.permute.xlu0 %1512
        %1514 = vrot.lane.b32.xlu0 %v1498, 121
        %v1515 = vpop.permute.xlu0 %1514
        %1516 = vrot.lane.b32.xlu0 %v1499, 121
        %v1517 = vpop.permute.xlu0 %1516
        %v1518 = vsel %vm1484, %v1507, %v1509
        %v1519 = vsel %vm1484, %v1511, %v1513
        %v1520 = vsel %vm1484, %v1515, %v1517
        %1524 = vst [vmem:[#allocation3 + $0x158] sm:$0xff] %v1518
        %1525 = vst [vmem:[#allocation3 + $0x168] sm:$0xff] %v1519
        %1526 = vst [vmem:[#allocation3 + $0x178] sm:$0xff] %v1520
        %s1527 = scalar_lea.vmem %s1, 48
        %v1528 = vld [vmem:[%s1527] sm:$0xff]
        %v1529 = vld [vmem:[%s1527 + $0x8] sm:$0xff]
        %v1530 = vld [vmem:[%s1527 + $0x10] sm:$0xff]
        %v1531 = vld [vmem:[%s1527 + $0x18] sm:$0xff]
        %v1532 = vld [vmem:[%s1527 + $0x20] sm:$0xff]
        %v1533 = vld [vmem:[%s1527 + $0x28] sm:$0xff]
        %v1534 = vld [vmem:[#allocation3] sm:$0xff]
        %v1535 = vld [vmem:[#allocation3 + $0x8] sm:$0xff]
        %v1536 = vld [vmem:[#allocation3 + $0x10] sm:$0xff]
        %v1537 = vld [vmem:[#allocation3 + $0x18] sm:$0xff]
        %v1538 = vld [vmem:[#allocation3 + $0x20] sm:$0xff]
        %v1539 = vld [vmem:[#allocation3 + $0x28] sm:$0xff]
        %v1540 = vld [vmem:[#allocation3 + $0x30] sm:$0xff]
        %v1541 = vld [vmem:[#allocation3 + $0x38] sm:$0xff]
        %v1542 = vld [vmem:[#allocation3 + $0x40] sm:$0xff]
        %v1543 = vld [vmem:[#allocation3 + $0x48] sm:$0xff]
        %v1544 = vld [vmem:[#allocation3 + $0x50] sm:$0xff]
        %v1545 = vld [vmem:[#allocation3 + $0x58] sm:$0xff]
        %v1546 = vld [vmem:[#allocation3 + $0x60] sm:$0xff]
        %v1547 = vld [vmem:[#allocation3 + $0x68] sm:$0xff]
        %v1548 = vld [vmem:[#allocation3 + $0x70] sm:$0xff]
        %v1549 = vld [vmem:[#allocation3 + $0x78] sm:$0xff]
        %v1550 = vld [vmem:[#allocation3 + $0x80] sm:$0xff]
        %v1551 = vld [vmem:[#allocation3 + $0x88] sm:$0xff]
        %v1552 = vld [vmem:[#allocation3 + $0x90] sm:$0xff]
        %v1553 = vld [vmem:[#allocation3 + $0x98] sm:$0xff]
        %v1554 = vld [vmem:[#allocation3 + $0xa0] sm:$0xff]
        %v1555 = vld [vmem:[#allocation3 + $0xa8] sm:$0xff]
        %v1556 = vld [vmem:[#allocation3 + $0xb0] sm:$0xff]
        %v1557 = vld [vmem:[#allocation3 + $0xb8] sm:$0xff]
        %v1558 = vld [vmem:[#allocation3 + $0xc0] sm:$0xff]
        %v1559 = vld [vmem:[#allocation3 + $0xc8] sm:$0xff]
        %v1560 = vld [vmem:[#allocation3 + $0xd0] sm:$0xff]
        %v1561 = vld [vmem:[#allocation3 + $0xd8] sm:$0xff]
        %v1562 = vld [vmem:[#allocation3 + $0xe0] sm:$0xff]
        %v1563 = vld [vmem:[#allocation3 + $0xe8] sm:$0xff]
        %v1564 = vld [vmem:[#allocation3 + $0xf0] sm:$0xff]
        %v1565 = vld [vmem:[#allocation3 + $0xf8] sm:$0xff]
        %v1566 = vld [vmem:[#allocation3 + $0x100] sm:$0xff]
        %v1567 = vld [vmem:[#allocation3 + $0x108] sm:$0xff]
        %v1568 = vld [vmem:[#allocation3 + $0x110] sm:$0xff]
        %v1569 = vld [vmem:[#allocation3 + $0x118] sm:$0xff]
        %v1570 = vld [vmem:[#allocation3 + $0x120] sm:$0xff]
        %v1571 = vld [vmem:[#allocation3 + $0x128] sm:$0xff]
        %v1572 = vld [vmem:[#allocation3 + $0x130] sm:$0xff]
        %v1573 = vld [vmem:[#allocation3 + $0x138] sm:$0xff]
        %v1574 = vld [vmem:[#allocation3 + $0x140] sm:$0xff]
        %v1575 = vld [vmem:[#allocation3 + $0x148] sm:$0xff]
        %v1576 = vld [vmem:[#allocation3 + $0x150] sm:$0xff]
        %v1577 = vld [vmem:[#allocation3 + $0x158] sm:$0xff]
        %v1578 = vld [vmem:[#allocation3 + $0x160] sm:$0xff]
        %v1579 = vld [vmem:[#allocation3 + $0x168] sm:$0xff]
        %v1580 = vld [vmem:[#allocation3 + $0x170] sm:$0xff]
        %v1581 = vld [vmem:[#allocation3 + $0x178] sm:$0xff]
        %s1582 = scalar_lea.vmem %s2, 24
        %v1583 = vld [vmem:[%s1582] sm:$0xff]
        %v1584 = vld [vmem:[%s1582 + $0x8] sm:$0xff]
        %v1585 = vld [vmem:[%s1582 + $0x10] sm:$0xff]
        %1587 = vset.pattern.permute.xlu0 0
        %1588 = vperm.xlu0 %1587, %v1583
        %v1589 = vpop.permute.xlu0 %1588
        %1592 = vset.pattern.permute.xlu0 0
        %1593 = vperm.xlu0 %1592, %v1584
        %v1594 = vpop.permute.xlu0 %1593
        %1597 = vset.pattern.permute.xlu0 0
        %1598 = vperm.xlu0 %1597, %v1585
        %v1599 = vpop.permute.xlu0 %1598
        %v1602 = vsel %vm809, %v1529, 0
        %v1605 = vsel %vm809, %v1531, 0
        %v1608 = vsel %vm809, %v1533, 0
        %1610 = vmatpush.msra.mxu0 %v1564
        %1611 = vmatpush.msra.mxu0 %v1562
        %1612 = vmatpush.msra.mxu0 %v1560
        %1613 = vmatpush.msra.mxu0 %v1558
        %1614 = vmatpush.msra.mxu0 %v1556
        %1615 = vmatpush.msra.mxu0 %v1554
        %1616 = vmatpush.msra.mxu0 %v1552
        %1617 = vmatpush.msra.mxu0 %v1550
        %1618 = vmatpush.msra.mxu0 %v1548
        %1619 = vmatpush.msra.mxu0 %v1546
        %1620 = vmatpush.msra.mxu0 %v1544
        %1621 = vmatpush.msra.mxu0 %v1542
        %1622 = vmatpush.msra.mxu0 %v1540
        %1623 = vmatpush.msra.mxu0 %v1538
        %1624 = vmatpush.msra.mxu0 %v1536
        %1625 = vmatpush.msra.mxu0 %v1534
        %1626 = vmatmul.f32.gmra.mxu0 %v1528
        %v1627 = vpop.f32.mrf.mxu0
        %v1628 = vadd.f32 %v1589, %v1627
        %1629 = vmatmul.f32.gmra.mxu0 %v1530
        %v1630 = vpop.f32.mrf.mxu0
        %v1631 = vadd.f32 %v1594, %v1630
        %1632 = vmatmul.f32.gmra.mxu0 %v1532
        %v1633 = vpop.f32.mrf.mxu0
        %v1634 = vadd.f32 %v1599, %v1633
        %1635 = vdwg.mxu0
        %1636 = vmatpush.msra.mxu0 0.0
        %1637 = vmatpush.msra.mxu0 0.0
        %1638 = vmatpush.msra.mxu0 0.0
        %1639 = vmatpush.msra.mxu0 0.0
        %1640 = vmatpush.msra.mxu0 0.0
        %1641 = vmatpush.msra.mxu0 0.0
        %1642 = vmatpush.msra.mxu0 0.0
        %1643 = vmatpush.msra.mxu0 0.0
        %1644 = vmatpush.msra.mxu0 %v1580
        %1645 = vmatpush.msra.mxu0 %v1578
        %1646 = vmatpush.msra.mxu0 %v1576
        %1647 = vmatpush.msra.mxu0 %v1574
        %1648 = vmatpush.msra.mxu0 %v1572
        %1649 = vmatpush.msra.mxu0 %v1570
        %1650 = vmatpush.msra.mxu0 %v1568
        %1651 = vmatpush.msra.mxu0 %v1566
        %1652 = vmatmul.f32.gmra.mxu0 %v1602
        %v1653 = vpop.f32.mrf.mxu0
        %v1654 = vadd.f32 %v1628, %v1653
        %1655 = vmatmul.f32.gmra.mxu0 %v1605
        %v1656 = vpop.f32.mrf.mxu0
        %v1657 = vadd.f32 %v1631, %v1656
        %1658 = vmatmul.f32.gmra.mxu0 %v1608
        %v1659 = vpop.f32.mrf.mxu0
        %v1660 = vadd.f32 %v1634, %v1659
        %1661 = vdwg.mxu0
        %1662 = vmatpush.msra.mxu0 %v1565
        %1663 = vmatpush.msra.mxu0 %v1563
        %1664 = vmatpush.msra.mxu0 %v1561
        %1665 = vmatpush.msra.mxu0 %v1559
        %1666 = vmatpush.msra.mxu0 %v1557
        %1667 = vmatpush.msra.mxu0 %v1555
        %1668 = vmatpush.msra.mxu0 %v1553
        %1669 = vmatpush.msra.mxu0 %v1551
        %1670 = vmatpush.msra.mxu0 %v1549
        %1671 = vmatpush.msra.mxu0 %v1547
        %1672 = vmatpush.msra.mxu0 %v1545
        %1673 = vmatpush.msra.mxu0 %v1543
        %1674 = vmatpush.msra.mxu0 %v1541
        %1675 = vmatpush.msra.mxu0 %v1539
        %1676 = vmatpush.msra.mxu0 %v1537
        %1677 = vmatpush.msra.mxu0 %v1535
        %1678 = vmatmul.f32.gmra.mxu0 %v1528
        %v1679 = vpop.f32.mrf.mxu0
        %v1680 = vadd.f32 %v1589, %v1679
        %1681 = vmatmul.f32.gmra.mxu0 %v1530
        %v1682 = vpop.f32.mrf.mxu0
        %v1683 = vadd.f32 %v1594, %v1682
        %1684 = vmatmul.f32.gmra.mxu0 %v1532
        %v1685 = vpop.f32.mrf.mxu0
        %v1686 = vadd.f32 %v1599, %v1685
        %1687 = vdwg.mxu0
        %1688 = vmatpush.msra.mxu0 0.0
        %1689 = vmatpush.msra.mxu0 0.0
        %1690 = vmatpush.msra.mxu0 0.0
        %1691 = vmatpush.msra.mxu0 0.0
        %1692 = vmatpush.msra.mxu0 0.0
        %1693 = vmatpush.msra.mxu0 0.0
        %1694 = vmatpush.msra.mxu0 0.0
        %1695 = vmatpush.msra.mxu0 0.0
        %1696 = vmatpush.msra.mxu0 %v1581
        %1697 = vmatpush.msra.mxu0 %v1579
        %1698 = vmatpush.msra.mxu0 %v1577
        %1699 = vmatpush.msra.mxu0 %v1575
        %1700 = vmatpush.msra.mxu0 %v1573
        %1701 = vmatpush.msra.mxu0 %v1571
        %1702 = vmatpush.msra.mxu0 %v1569
        %1703 = vmatpush.msra.mxu0 %v1567
        %1704 = vmatmul.f32.gmra.mxu0 %v1602
        %v1705 = vpop.f32.mrf.mxu0
        %v1706 = vadd.f32 %v1680, %v1705
        %1707 = vmatmul.f32.gmra.mxu0 %v1605
        %v1708 = vpop.f32.mrf.mxu0
        %v1709 = vadd.f32 %v1683, %v1708
        %1710 = vmatmul.f32.gmra.mxu0 %v1608
        %v1711 = vpop.f32.mrf.mxu0
        %v1712 = vadd.f32 %v1686, %v1711
        %1713 = vdwg.mxu0
        %v1714 = vmax.f32 %v1654, 0.0
        %v1715 = vmax.f32 %v1706, 0.0
        %v1716 = vmax.f32 %v1657, 0.0
        %v1717 = vmax.f32 %v1709, 0.0
        %v1718 = vmax.f32 %v1660, 0.0
        %v1719 = vmax.f32 %v1712, 0.0
        %s1720 = scalar_lea.vmem %s3, 24
        %v1721 = vld [vmem:[%s1720] sm:$0xff]
        %v1722 = vld [vmem:[%s1720 + $0x8] sm:$0xff]
        %v1723 = vld [vmem:[%s1720 + $0x10] sm:$0xff]
        %1725 = vset.pattern.permute.xlu0 0
        %1726 = vperm.xlu0 %1725, %v1721
        %v1727 = vpop.permute.xlu0 %1726
        %1730 = vset.pattern.permute.xlu0 0
        %1731 = vperm.xlu0 %1730, %v1722
        %v1732 = vpop.permute.xlu0 %1731
        %1735 = vset.pattern.permute.xlu0 0
        %1736 = vperm.xlu0 %1735, %v1723
        %v1737 = vpop.permute.xlu0 %1736
        %v1739 = vmul.f32 %v1714, %v1727
        %v1740 = vmul.f32 %v1715, %v1727
        %v1741 = vmul.f32 %v1716, %v1732
        %v1742 = vmul.f32 %v1717, %v1732
        %v1743 = vmul.f32 %v1718, %v1737
        %v1744 = vmul.f32 %v1719, %v1737
        %s1745 = scalar_lea.vmem %s4, 24
        %v1746 = vld [vmem:[%s1745] sm:$0xff]
        %v1747 = vld [vmem:[%s1745 + $0x8] sm:$0xff]
        %v1748 = vld [vmem:[%s1745 + $0x10] sm:$0xff]
        %1750 = vset.pattern.permute.xlu0 0
        %1751 = vperm.xlu0 %1750, %v1746
        %v1752 = vpop.permute.xlu0 %1751
        %1755 = vset.pattern.permute.xlu0 0
        %1756 = vperm.xlu0 %1755, %v1747
        %v1757 = vpop.permute.xlu0 %1756
        %1760 = vset.pattern.permute.xlu0 0
        %1761 = vperm.xlu0 %1760, %v1748
        %v1762 = vpop.permute.xlu0 %1761
        %v1764 = vadd.f32 %v1739, %v1752
        %v1765 = vadd.f32 %v1740, %v1752
        %v1766 = vadd.f32 %v1741, %v1757
        %v1767 = vadd.f32 %v1742, %v1757
        %v1768 = vadd.f32 %v1743, %v1762
        %v1769 = vadd.f32 %v1744, %v1762
        %v1770 = vld [vmem:[#allocation2 + $0x8] sm:$0xff]
        %v1771 = vld [vmem:[#allocation2 + $0x20] sm:$0xff]
        %v1772 = vld [vmem:[#allocation2 + $0x38] sm:$0xff]
        %v1773 = vadd.f32 %v1770, %v1764
        %v1774 = vadd.f32 %v1771, %v1766
        %v1775 = vadd.f32 %v1772, %v1768
        %1776 = vst [vmem:[#allocation2 + $0x8] sm:$0xff] %v1773
        %1777 = vst [vmem:[#allocation2 + $0x20] sm:$0xff] %v1774
        %1778 = vst [vmem:[#allocation2 + $0x38] sm:$0xff] %v1775
        %v1779 = vld [vmem:[%s289 + $0x8] sm:$0xff]
        %v1780 = vld [vmem:[%s289 + $0x20] sm:$0xff]
        %v1781 = vld [vmem:[%s289 + $0x38] sm:$0xff]
        %v1782 = vadd.f32 %v1779, %v1765
        %v1783 = vadd.f32 %v1780, %v1767
        %v1784 = vadd.f32 %v1781, %v1769
        %1785 = vst [vmem:[%s289 + $0x8] sm:$0xff] %v1782
        %1786 = vst [vmem:[%s289 + $0x20] sm:$0xff] %v1783
        %1787 = vst [vmem:[%s289 + $0x38] sm:$0xff] %v1784
        %v1788 = vld [vmem:[#allocation2] sm:$0xff]
        %v1789 = vld [vmem:[#allocation2 + $0x8] sm:$0xff]
        %v1790 = vld [vmem:[#allocation2 + $0x18] sm:$0xff]
        %v1791 = vld [vmem:[#allocation2 + $0x20] sm:$0xff]
        %v1792 = vld [vmem:[#allocation2 + $0x30] sm:$0xff]
        %v1793 = vld [vmem:[#allocation2 + $0x38] sm:$0xff]
        %1800 = vrot.lane.b32.xlu0 %v1788, 14
        %v1801 = vpop.permute.xlu0 %1800
        %1802 = vrot.lane.b32.xlu0 %v1789, 14
        %v1803 = vpop.permute.xlu0 %1802
        %1804 = vrot.lane.b32.xlu0 %v1790, 14
        %v1805 = vpop.permute.xlu0 %1804
        %1806 = vrot.lane.b32.xlu0 %v1791, 14
        %v1807 = vpop.permute.xlu0 %1806
        %1808 = vrot.lane.b32.xlu0 %v1792, 14
        %v1809 = vpop.permute.xlu0 %1808
        %1810 = vrot.lane.b32.xlu0 %v1793, 14
        %v1811 = vpop.permute.xlu0 %1810
        %vm1812 = vcmask 113664
        %v1813 = vsel %vm1812, %v1801, %v1803
        %v1814 = vsel %vm1812, %v1805, %v1807
        %v1815 = vsel %vm1812, %v1809, %v1811
        %1819 = vst [vmem:[#allocation3] sm:$0xff] %v1813
        %1820 = vst [vmem:[#allocation3 + $0x10] sm:$0xff] %v1814
        %1821 = vst [vmem:[#allocation3 + $0x20] sm:$0xff] %v1815
        %v1822 = vld [vmem:[%s289] sm:$0xff]
        %v1823 = vld [vmem:[%s289 + $0x8] sm:$0xff]
        %v1824 = vld [vmem:[%s289 + $0x18] sm:$0xff]
        %v1825 = vld [vmem:[%s289 + $0x20] sm:$0xff]
        %v1826 = vld [vmem:[%s289 + $0x30] sm:$0xff]
        %v1827 = vld [vmem:[%s289 + $0x38] sm:$0xff]
        %1834 = vrot.lane.b32.xlu0 %v1822, 14
        %v1835 = vpop.permute.xlu0 %1834
        %1836 = vrot.lane.b32.xlu0 %v1823, 14
        %v1837 = vpop.permute.xlu0 %1836
        %1838 = vrot.lane.b32.xlu0 %v1824, 14
        %v1839 = vpop.permute.xlu0 %1838
        %1840 = vrot.lane.b32.xlu0 %v1825, 14
        %v1841 = vpop.permute.xlu0 %1840
        %1842 = vrot.lane.b32.xlu0 %v1826, 14
        %v1843 = vpop.permute.xlu0 %1842
        %1844 = vrot.lane.b32.xlu0 %v1827, 14
        %v1845 = vpop.permute.xlu0 %1844
        %v1846 = vsel %vm1812, %v1835, %v1837
        %v1847 = vsel %vm1812, %v1839, %v1841
        %v1848 = vsel %vm1812, %v1843, %v1845
        %1852 = vst [vmem:[#allocation3 + $0x8] sm:$0xff] %v1846
        %1853 = vst [vmem:[#allocation3 + $0x18] sm:$0xff] %v1847
        %1854 = vst [vmem:[#allocation3 + $0x28] sm:$0xff] %v1848
        %v1855 = vld [vmem:[#allocation2] sm:$0xff]
        %v1856 = vld [vmem:[#allocation2 + $0x8] sm:$0xff]
        %v1857 = vld [vmem:[#allocation2 + $0x18] sm:$0xff]
        %v1858 = vld [vmem:[#allocation2 + $0x20] sm:$0xff]
        %v1859 = vld [vmem:[#allocation2 + $0x30] sm:$0xff]
        %v1860 = vld [vmem:[#allocation2 + $0x38] sm:$0xff]
        %1867 = vrot.lane.b32.xlu0 %v1855, 10
        %v1868 = vpop.permute.xlu0 %1867
        %1869 = vrot.lane.b32.xlu0 %v1856, 10
        %v1870 = vpop.permute.xlu0 %1869
        %1871 = vrot.lane.b32.xlu0 %v1857, 10
        %v1872 = vpop.permute.xlu0 %1871
        %1873 = vrot.lane.b32.xlu0 %v1858, 10
        %v1874 = vpop.permute.xlu0 %1873
        %1875 = vrot.lane.b32.xlu0 %v1859, 10
        %v1876 = vpop.permute.xlu0 %1875
        %1877 = vrot.lane.b32.xlu0 %v1860, 10
        %v1878 = vpop.permute.xlu0 %1877
        %vm1879 = vcmask 80896
        %v1880 = vsel %vm1879, %v1868, %v1870
        %v1881 = vsel %vm1879, %v1872, %v1874
        %v1882 = vsel %vm1879, %v1876, %v1878
        %1886 = vst [vmem:[#allocation3 + $0x30] sm:$0xff] %v1880
        %1887 = vst [vmem:[#allocation3 + $0x40] sm:$0xff] %v1881
        %1888 = vst [vmem:[#allocation3 + $0x50] sm:$0xff] %v1882
        %v1889 = vld [vmem:[%s289] sm:$0xff]
        %v1890 = vld [vmem:[%s289 + $0x8] sm:$0xff]
        %v1891 = vld [vmem:[%s289 + $0x18] sm:$0xff]
        %v1892 = vld [vmem:[%s289 + $0x20] sm:$0xff]
        %v1893 = vld [vmem:[%s289 + $0x30] sm:$0xff]
        %v1894 = vld [vmem:[%s289 + $0x38] sm:$0xff]
        %1901 = vrot.lane.b32.xlu0 %v1889, 10
        %v1902 = vpop.permute.xlu0 %1901
        %1903 = vrot.lane.b32.xlu0 %v1890, 10
        %v1904 = vpop.permute.xlu0 %1903
        %1905 = vrot.lane.b32.xlu0 %v1891, 10
        %v1906 = vpop.permute.xlu0 %1905
        %1907 = vrot.lane.b32.xlu0 %v1892, 10
        %v1908 = vpop.permute.xlu0 %1907
        %1909 = vrot.lane.b32.xlu0 %v1893, 10
        %v1910 = vpop.permute.xlu0 %1909
        %1911 = vrot.lane.b32.xlu0 %v1894, 10
        %v1912 = vpop.permute.xlu0 %1911
        %v1913 = vsel %vm1879, %v1902, %v1904
        %v1914 = vsel %vm1879, %v1906, %v1908
        %v1915 = vsel %vm1879, %v1910, %v1912
        %1919 = vst [vmem:[#allocation3 + $0x38] sm:$0xff] %v1913
        %1920 = vst [vmem:[#allocation3 + $0x48] sm:$0xff] %v1914
        %1921 = vst [vmem:[#allocation3 + $0x58] sm:$0xff] %v1915
        %v1922 = vld [vmem:[#allocation2] sm:$0xff]
        %v1923 = vld [vmem:[#allocation2 + $0x8] sm:$0xff]
        %v1924 = vld [vmem:[#allocation2 + $0x18] sm:$0xff]
        %v1925 = vld [vmem:[#allocation2 + $0x20] sm:$0xff]
        %v1926 = vld [vmem:[#allocation2 + $0x30] sm:$0xff]
        %v1927 = vld [vmem:[#allocation2 + $0x38] sm:$0xff]
        %1934 = vrot.lane.b32.xlu0 %v1922, 6
        %v1935 = vpop.permute.xlu0 %1934
        %1936 = vrot.lane.b32.xlu0 %v1923, 6
        %v1937 = vpop.permute.xlu0 %1936
        %1938 = vrot.lane.b32.xlu0 %v1924, 6
        %v1939 = vpop.permute.xlu0 %1938
        %1940 = vrot.lane.b32.xlu0 %v1925, 6
        %v1941 = vpop.permute.xlu0 %1940
        %1942 = vrot.lane.b32.xlu0 %v1926, 6
        %v1943 = vpop.permute.xlu0 %1942
        %1944 = vrot.lane.b32.xlu0 %v1927, 6
        %v1945 = vpop.permute.xlu0 %1944
        %vm1946 = vcmask 48128
        %v1947 = vsel %vm1946, %v1935, %v1937
        %v1948 = vsel %vm1946, %v1939, %v1941
        %v1949 = vsel %vm1946, %v1943, %v1945
        %1953 = vst [vmem:[#allocation3 + $0x60] sm:$0xff] %v1947
        %1954 = vst [vmem:[#allocation3 + $0x70] sm:$0xff] %v1948
        %1955 = vst [vmem:[#allocation3 + $0x80] sm:$0xff] %v1949
        %v1956 = vld [vmem:[%s289] sm:$0xff]
        %v1957 = vld [vmem:[%s289 + $0x8] sm:$0xff]
        %v1958 = vld [vmem:[%s289 + $0x18] sm:$0xff]
        %v1959 = vld [vmem:[%s289 + $0x20] sm:$0xff]
        %v1960 = vld [vmem:[%s289 + $0x30] sm:$0xff]
        %v1961 = vld [vmem:[%s289 + $0x38] sm:$0xff]
        %1968 = vrot.lane.b32.xlu0 %v1956, 6
        %v1969 = vpop.permute.xlu0 %1968
        %1970 = vrot.lane.b32.xlu0 %v1957, 6
        %v1971 = vpop.permute.xlu0 %1970
        %1972 = vrot.lane.b32.xlu0 %v1958, 6
        %v1973 = vpop.permute.xlu0 %1972
        %1974 = vrot.lane.b32.xlu0 %v1959, 6
        %v1975 = vpop.permute.xlu0 %1974
        %1976 = vrot.lane.b32.xlu0 %v1960, 6
        %v1977 = vpop.permute.xlu0 %1976
        %1978 = vrot.lane.b32.xlu0 %v1961, 6
        %v1979 = vpop.permute.xlu0 %1978
        %v1980 = vsel %vm1946, %v1969, %v1971
        %v1981 = vsel %vm1946, %v1973, %v1975
        %v1982 = vsel %vm1946, %v1977, %v1979
        %1986 = vst [vmem:[#allocation3 + $0x68] sm:$0xff] %v1980
        %1987 = vst [vmem:[#allocation3 + $0x78] sm:$0xff] %v1981
        %1988 = vst [vmem:[#allocation3 + $0x88] sm:$0xff] %v1982
        %v1989 = vld [vmem:[#allocation2] sm:$0xff]
        %v1990 = vld [vmem:[#allocation2 + $0x8] sm:$0xff]
        %v1991 = vld [vmem:[#allocation2 + $0x18] sm:$0xff]
        %v1992 = vld [vmem:[#allocation2 + $0x20] sm:$0xff]
        %v1993 = vld [vmem:[#allocation2 + $0x30] sm:$0xff]
        %v1994 = vld [vmem:[#allocation2 + $0x38] sm:$0xff]
        %2001 = vrot.lane.b32.xlu0 %v1989, 2
        %v2002 = vpop.permute.xlu0 %2001
        %2003 = vrot.lane.b32.xlu0 %v1990, 2
        %v2004 = vpop.permute.xlu0 %2003
        %2005 = vrot.lane.b32.xlu0 %v1991, 2
        %v2006 = vpop.permute.xlu0 %2005
        %2007 = vrot.lane.b32.xlu0 %v1992, 2
        %v2008 = vpop.permute.xlu0 %2007
        %2009 = vrot.lane.b32.xlu0 %v1993, 2
        %v2010 = vpop.permute.xlu0 %2009
        %2011 = vrot.lane.b32.xlu0 %v1994, 2
        %v2012 = vpop.permute.xlu0 %2011
        %v2013 = vsel %vm347, %v2002, %v2004
        %v2014 = vsel %vm347, %v2006, %v2008
        %v2015 = vsel %vm347, %v2010, %v2012
        %2019 = vst [vmem:[#allocation3 + $0x90] sm:$0xff] %v2013
        %2020 = vst [vmem:[#allocation3 + $0xa0] sm:$0xff] %v2014
        %2021 = vst [vmem:[#allocation3 + $0xb0] sm:$0xff] %v2015
        %v2022 = vld [vmem:[%s289] sm:$0xff]
        %v2023 = vld [vmem:[%s289 + $0x8] sm:$0xff]
        %v2024 = vld [vmem:[%s289 + $0x18] sm:$0xff]
        %v2025 = vld [vmem:[%s289 + $0x20] sm:$0xff]
        %v2026 = vld [vmem:[%s289 + $0x30] sm:$0xff]
        %v2027 = vld [vmem:[%s289 + $0x38] sm:$0xff]
        %2034 = vrot.lane.b32.xlu0 %v2022, 2
        %v2035 = vpop.permute.xlu0 %2034
        %2036 = vrot.lane.b32.xlu0 %v2023, 2
        %v2037 = vpop.permute.xlu0 %2036
        %2038 = vrot.lane.b32.xlu0 %v2024, 2
        %v2039 = vpop.permute.xlu0 %2038
        %2040 = vrot.lane.b32.xlu0 %v2025, 2
        %v2041 = vpop.permute.xlu0 %2040
        %2042 = vrot.lane.b32.xlu0 %v2026, 2
        %v2043 = vpop.permute.xlu0 %2042
        %2044 = vrot.lane.b32.xlu0 %v2027, 2
        %v2045 = vpop.permute.xlu0 %2044
        %v2046 = vsel %vm347, %v2035, %v2037
        %v2047 = vsel %vm347, %v2039, %v2041
        %v2048 = vsel %vm347, %v2043, %v2045
        %2052 = vst [vmem:[#allocation3 + $0x98] sm:$0xff] %v2046
        %2053 = vst [vmem:[#allocation3 + $0xa8] sm:$0xff] %v2047
        %2054 = vst [vmem:[#allocation3 + $0xb8] sm:$0xff] %v2048
        %v2055 = vld [vmem:[#allocation2 + $0x8] sm:$0xff]
        %v2056 = vld [vmem:[#allocation2 + $0x10] sm:$0xff]
        %v2057 = vld [vmem:[#allocation2 + $0x20] sm:$0xff]
        %v2058 = vld [vmem:[#allocation2 + $0x28] sm:$0xff]
        %v2059 = vld [vmem:[#allocation2 + $0x38] sm:$0xff]
        %v2060 = vld [vmem:[#allocation2 + $0x40] sm:$0xff]
        %2067 = vrot.lane.b32.xlu0 %v2055, 126
        %v2068 = vpop.permute.xlu0 %2067
        %2069 = vrot.lane.b32.xlu0 %v2056, 126
        %v2070 = vpop.permute.xlu0 %2069
        %2071 = vrot.lane.b32.xlu0 %v2057, 126
        %v2072 = vpop.permute.xlu0 %2071
        %2073 = vrot.lane.b32.xlu0 %v2058, 126
        %v2074 = vpop.permute.xlu0 %2073
        %2075 = vrot.lane.b32.xlu0 %v2059, 126
        %v2076 = vpop.permute.xlu0 %2075
        %2077 = vrot.lane.b32.xlu0 %v2060, 126
        %v2078 = vpop.permute.xlu0 %2077
        %v2079 = vsel %vm560, %v2068, %v2070
        %v2080 = vsel %vm560, %v2072, %v2074
        %v2081 = vsel %vm560, %v2076, %v2078
        %2085 = vst [vmem:[#allocation3 + $0xc0] sm:$0xff] %v2079
        %2086 = vst [vmem:[#allocation3 + $0xd0] sm:$0xff] %v2080
        %2087 = vst [vmem:[#allocation3 + $0xe0] sm:$0xff] %v2081
        %v2088 = vld [vmem:[%s289 + $0x8] sm:$0xff]
        %v2089 = vld [vmem:[%s289 + $0x10] sm:$0xff]
        %v2090 = vld [vmem:[%s289 + $0x20] sm:$0xff]
        %v2091 = vld [vmem:[%s289 + $0x28] sm:$0xff]
        %v2092 = vld [vmem:[%s289 + $0x38] sm:$0xff]
        %v2093 = vld [vmem:[%s289 + $0x40] sm:$0xff]
        %2100 = vrot.lane.b32.xlu0 %v2088, 126
        %v2101 = vpop.permute.xlu0 %2100
        %2102 = vrot.lane.b32.xlu0 %v2089, 126
        %v2103 = vpop.permute.xlu0 %2102
        %2104 = vrot.lane.b32.xlu0 %v2090, 126
        %v2105 = vpop.permute.xlu0 %2104
        %2106 = vrot.lane.b32.xlu0 %v2091, 126
        %v2107 = vpop.permute.xlu0 %2106
        %2108 = vrot.lane.b32.xlu0 %v2092, 126
        %v2109 = vpop.permute.xlu0 %2108
        %2110 = vrot.lane.b32.xlu0 %v2093, 126
        %v2111 = vpop.permute.xlu0 %2110
        %v2112 = vsel %vm560, %v2101, %v2103
        %v2113 = vsel %vm560, %v2105, %v2107
        %v2114 = vsel %vm560, %v2109, %v2111
        %2118 = vst [vmem:[#allocation3 + $0xc8] sm:$0xff] %v2112
        %2119 = vst [vmem:[#allocation3 + $0xd8] sm:$0xff] %v2113
        %2120 = vst [vmem:[#allocation3 + $0xe8] sm:$0xff] %v2114
        %v2121 = vld [vmem:[#allocation2 + $0x8] sm:$0xff]
        %v2122 = vld [vmem:[#allocation2 + $0x10] sm:$0xff]
        %v2123 = vld [vmem:[#allocation2 + $0x20] sm:$0xff]
        %v2124 = vld [vmem:[#allocation2 + $0x28] sm:$0xff]
        %v2125 = vld [vmem:[#allocation2 + $0x38] sm:$0xff]
        %v2126 = vld [vmem:[#allocation2 + $0x40] sm:$0xff]
        %2133 = vrot.lane.b32.xlu0 %v2121, 122
        %v2134 = vpop.permute.xlu0 %2133
        %2135 = vrot.lane.b32.xlu0 %v2122, 122
        %v2136 = vpop.permute.xlu0 %2135
        %2137 = vrot.lane.b32.xlu0 %v2123, 122
        %v2138 = vpop.permute.xlu0 %2137
        %2139 = vrot.lane.b32.xlu0 %v2124, 122
        %v2140 = vpop.permute.xlu0 %2139
        %2141 = vrot.lane.b32.xlu0 %v2125, 122
        %v2142 = vpop.permute.xlu0 %2141
        %2143 = vrot.lane.b32.xlu0 %v2126, 122
        %v2144 = vpop.permute.xlu0 %2143
        %vm2145 = vcmask 998400
        %v2146 = vsel %vm2145, %v2134, %v2136
        %v2147 = vsel %vm2145, %v2138, %v2140
        %v2148 = vsel %vm2145, %v2142, %v2144
        %2152 = vst [vmem:[#allocation3 + $0xf0] sm:$0xff] %v2146
        %2153 = vst [vmem:[#allocation3 + $0x100] sm:$0xff] %v2147
        %2154 = vst [vmem:[#allocation3 + $0x110] sm:$0xff] %v2148
        %v2155 = vld [vmem:[%s289 + $0x8] sm:$0xff]
        %v2156 = vld [vmem:[%s289 + $0x10] sm:$0xff]
        %v2157 = vld [vmem:[%s289 + $0x20] sm:$0xff]
        %v2158 = vld [vmem:[%s289 + $0x28] sm:$0xff]
        %v2159 = vld [vmem:[%s289 + $0x38] sm:$0xff]
        %v2160 = vld [vmem:[%s289 + $0x40] sm:$0xff]
        %2167 = vrot.lane.b32.xlu0 %v2155, 122
        %v2168 = vpop.permute.xlu0 %2167
        %2169 = vrot.lane.b32.xlu0 %v2156, 122
        %v2170 = vpop.permute.xlu0 %2169
        %2171 = vrot.lane.b32.xlu0 %v2157, 122
        %v2172 = vpop.permute.xlu0 %2171
        %2173 = vrot.lane.b32.xlu0 %v2158, 122
        %v2174 = vpop.permute.xlu0 %2173
        %2175 = vrot.lane.b32.xlu0 %v2159, 122
        %v2176 = vpop.permute.xlu0 %2175
        %2177 = vrot.lane.b32.xlu0 %v2160, 122
        %v2178 = vpop.permute.xlu0 %2177
        %v2179 = vsel %vm2145, %v2168, %v2170
        %v2180 = vsel %vm2145, %v2172, %v2174
        %v2181 = vsel %vm2145, %v2176, %v2178
        %2185 = vst [vmem:[#allocation3 + $0xf8] sm:$0xff] %v2179
        %2186 = vst [vmem:[#allocation3 + $0x108] sm:$0xff] %v2180
        %2187 = vst [vmem:[#allocation3 + $0x118] sm:$0xff] %v2181
        %v2188 = vld [vmem:[#allocation2 + $0x8] sm:$0xff]
        %v2189 = vld [vmem:[#allocation2 + $0x10] sm:$0xff]
        %v2190 = vld [vmem:[#allocation2 + $0x20] sm:$0xff]
        %v2191 = vld [vmem:[#allocation2 + $0x28] sm:$0xff]
        %v2192 = vld [vmem:[#allocation2 + $0x38] sm:$0xff]
        %v2193 = vld [vmem:[#allocation2 + $0x40] sm:$0xff]
        %2200 = vrot.lane.b32.xlu0 %v2188, 118
        %v2201 = vpop.permute.xlu0 %2200
        %2202 = vrot.lane.b32.xlu0 %v2189, 118
        %v2203 = vpop.permute.xlu0 %2202
        %2204 = vrot.lane.b32.xlu0 %v2190, 118
        %v2205 = vpop.permute.xlu0 %2204
        %2206 = vrot.lane.b32.xlu0 %v2191, 118
        %v2207 = vpop.permute.xlu0 %2206
        %2208 = vrot.lane.b32.xlu0 %v2192, 118
        %v2209 = vpop.permute.xlu0 %2208
        %2210 = vrot.lane.b32.xlu0 %v2193, 118
        %v2211 = vpop.permute.xlu0 %2210
        %vm2212 = vcmask 965632
        %v2213 = vsel %vm2212, %v2201, %v2203
        %v2214 = vsel %vm2212, %v2205, %v2207
        %v2215 = vsel %vm2212, %v2209, %v2211
        %2219 = vst [vmem:[#allocation3 + $0x120] sm:$0xff] %v2213
        %2220 = vst [vmem:[#allocation3 + $0x130] sm:$0xff] %v2214
        %2221 = vst [vmem:[#allocation3 + $0x140] sm:$0xff] %v2215
        %v2222 = vld [vmem:[%s289 + $0x8] sm:$0xff]
        %v2223 = vld [vmem:[%s289 + $0x10] sm:$0xff]
        %v2224 = vld [vmem:[%s289 + $0x20] sm:$0xff]
        %v2225 = vld [vmem:[%s289 + $0x28] sm:$0xff]
        %v2226 = vld [vmem:[%s289 + $0x38] sm:$0xff]
        %v2227 = vld [vmem:[%s289 + $0x40] sm:$0xff]
        %2234 = vrot.lane.b32.xlu0 %v2222, 118
        %v2235 = vpop.permute.xlu0 %2234
        %2236 = vrot.lane.b32.xlu0 %v2223, 118
        %v2237 = vpop.permute.xlu0 %2236
        %2238 = vrot.lane.b32.xlu0 %v2224, 118
        %v2239 = vpop.permute.xlu0 %2238
        %2240 = vrot.lane.b32.xlu0 %v2225, 118
        %v2241 = vpop.permute.xlu0 %2240
        %2242 = vrot.lane.b32.xlu0 %v2226, 118
        %v2243 = vpop.permute.xlu0 %2242
        %2244 = vrot.lane.b32.xlu0 %v2227, 118
        %v2245 = vpop.permute.xlu0 %2244
        %v2246 = vsel %vm2212, %v2235, %v2237
        %v2247 = vsel %vm2212, %v2239, %v2241
        %v2248 = vsel %vm2212, %v2243, %v2245
        %2252 = vst [vmem:[#allocation3 + $0x128] sm:$0xff] %v2246
        %2253 = vst [vmem:[#allocation3 + $0x138] sm:$0xff] %v2247
        %2254 = vst [vmem:[#allocation3 + $0x148] sm:$0xff] %v2248
        %v2255 = vld [vmem:[#allocation2 + $0x8] sm:$0xff]
        %v2256 = vld [vmem:[#allocation2 + $0x10] sm:$0xff]
        %v2257 = vld [vmem:[#allocation2 + $0x20] sm:$0xff]
        %v2258 = vld [vmem:[#allocation2 + $0x28] sm:$0xff]
        %v2259 = vld [vmem:[#allocation2 + $0x38] sm:$0xff]
        %v2260 = vld [vmem:[#allocation2 + $0x40] sm:$0xff]
        %2267 = vrot.lane.b32.xlu0 %v2255, 114
        %v2268 = vpop.permute.xlu0 %2267
        %2269 = vrot.lane.b32.xlu0 %v2256, 114
        %v2270 = vpop.permute.xlu0 %2269
        %2271 = vrot.lane.b32.xlu0 %v2257, 114
        %v2272 = vpop.permute.xlu0 %2271
        %2273 = vrot.lane.b32.xlu0 %v2258, 114
        %v2274 = vpop.permute.xlu0 %2273
        %2275 = vrot.lane.b32.xlu0 %v2259, 114
        %v2276 = vpop.permute.xlu0 %2275
        %2277 = vrot.lane.b32.xlu0 %v2260, 114
        %v2278 = vpop.permute.xlu0 %2277
        %vm2279 = vcmask 932864
        %v2280 = vsel %vm2279, %v2268, %v2270
        %v2281 = vsel %vm2279, %v2272, %v2274
        %v2282 = vsel %vm2279, %v2276, %v2278
        %2286 = vst [vmem:[#allocation3 + $0x150] sm:$0xff] %v2280
        %2287 = vst [vmem:[#allocation3 + $0x160] sm:$0xff] %v2281
        %2288 = vst [vmem:[#allocation3 + $0x170] sm:$0xff] %v2282
        %v2289 = vld [vmem:[%s289 + $0x8] sm:$0xff]
        %v2290 = vld [vmem:[%s289 + $0x10] sm:$0xff]
        %v2291 = vld [vmem:[%s289 + $0x20] sm:$0xff]
        %v2292 = vld [vmem:[%s289 + $0x28] sm:$0xff]
        %v2293 = vld [vmem:[%s289 + $0x38] sm:$0xff]
        %v2294 = vld [vmem:[%s289 + $0x40] sm:$0xff]
        %2301 = vrot.lane.b32.xlu0 %v2289, 114
        %v2302 = vpop.permute.xlu0 %2301
        %2303 = vrot.lane.b32.xlu0 %v2290, 114
        %v2304 = vpop.permute.xlu0 %2303
        %2305 = vrot.lane.b32.xlu0 %v2291, 114
        %v2306 = vpop.permute.xlu0 %2305
        %2307 = vrot.lane.b32.xlu0 %v2292, 114
        %v2308 = vpop.permute.xlu0 %2307
        %2309 = vrot.lane.b32.xlu0 %v2293, 114
        %v2310 = vpop.permute.xlu0 %2309
        %2311 = vrot.lane.b32.xlu0 %v2294, 114
        %v2312 = vpop.permute.xlu0 %2311
        %v2313 = vsel %vm2279, %v2302, %v2304
        %v2314 = vsel %vm2279, %v2306, %v2308
        %v2315 = vsel %vm2279, %v2310, %v2312
        %2319 = vst [vmem:[#allocation3 + $0x158] sm:$0xff] %v2313
        %2320 = vst [vmem:[#allocation3 + $0x168] sm:$0xff] %v2314
        %2321 = vst [vmem:[#allocation3 + $0x178] sm:$0xff] %v2315
        %s2322 = scalar_lea.vmem %s1, 96
        %v2323 = vld [vmem:[%s2322] sm:$0xff]
        %v2324 = vld [vmem:[%s2322 + $0x8] sm:$0xff]
        %v2325 = vld [vmem:[%s2322 + $0x10] sm:$0xff]
        %v2326 = vld [vmem:[%s2322 + $0x18] sm:$0xff]
        %v2327 = vld [vmem:[%s2322 + $0x20] sm:$0xff]
        %v2328 = vld [vmem:[%s2322 + $0x28] sm:$0xff]
        %v2329 = vld [vmem:[#allocation3] sm:$0xff]
        %v2330 = vld [vmem:[#allocation3 + $0x8] sm:$0xff]
        %v2331 = vld [vmem:[#allocation3 + $0x10] sm:$0xff]
        %v2332 = vld [vmem:[#allocation3 + $0x18] sm:$0xff]
        %v2333 = vld [vmem:[#allocation3 + $0x20] sm:$0xff]
        %v2334 = vld [vmem:[#allocation3 + $0x28] sm:$0xff]
        %v2335 = vld [vmem:[#allocation3 + $0x30] sm:$0xff]
        %v2336 = vld [vmem:[#allocation3 + $0x38] sm:$0xff]
        %v2337 = vld [vmem:[#allocation3 + $0x40] sm:$0xff]
        %v2338 = vld [vmem:[#allocation3 + $0x48] sm:$0xff]
        %v2339 = vld [vmem:[#allocation3 + $0x50] sm:$0xff]
        %v2340 = vld [vmem:[#allocation3 + $0x58] sm:$0xff]
        %v2341 = vld [vmem:[#allocation3 + $0x60] sm:$0xff]
        %v2342 = vld [vmem:[#allocation3 + $0x68] sm:$0xff]
        %v2343 = vld [vmem:[#allocation3 + $0x70] sm:$0xff]
        %v2344 = vld [vmem:[#allocation3 + $0x78] sm:$0xff]
        %v2345 = vld [vmem:[#allocation3 + $0x80] sm:$0xff]
        %v2346 = vld [vmem:[#allocation3 + $0x88] sm:$0xff]
        %v2347 = vld [vmem:[#allocation3 + $0x90] sm:$0xff]
        %v2348 = vld [vmem:[#allocation3 + $0x98] sm:$0xff]
        %v2349 = vld [vmem:[#allocation3 + $0xa0] sm:$0xff]
        %v2350 = vld [vmem:[#allocation3 + $0xa8] sm:$0xff]
        %v2351 = vld [vmem:[#allocation3 + $0xb0] sm:$0xff]
        %v2352 = vld [vmem:[#allocation3 + $0xb8] sm:$0xff]
        %v2353 = vld [vmem:[#allocation3 + $0xc0] sm:$0xff]
        %v2354 = vld [vmem:[#allocation3 + $0xc8] sm:$0xff]
        %v2355 = vld [vmem:[#allocation3 + $0xd0] sm:$0xff]
        %v2356 = vld [vmem:[#allocation3 + $0xd8] sm:$0xff]
        %v2357 = vld [vmem:[#allocation3 + $0xe0] sm:$0xff]
        %v2358 = vld [vmem:[#allocation3 + $0xe8] sm:$0xff]
        %v2359 = vld [vmem:[#allocation3 + $0xf0] sm:$0xff]
        %v2360 = vld [vmem:[#allocation3 + $0xf8] sm:$0xff]
        %v2361 = vld [vmem:[#allocation3 + $0x100] sm:$0xff]
        %v2362 = vld [vmem:[#allocation3 + $0x108] sm:$0xff]
        %v2363 = vld [vmem:[#allocation3 + $0x110] sm:$0xff]
        %v2364 = vld [vmem:[#allocation3 + $0x118] sm:$0xff]
        %v2365 = vld [vmem:[#allocation3 + $0x120] sm:$0xff]
        %v2366 = vld [vmem:[#allocation3 + $0x128] sm:$0xff]
        %v2367 = vld [vmem:[#allocation3 + $0x130] sm:$0xff]
        %v2368 = vld [vmem:[#allocation3 + $0x138] sm:$0xff]
        %v2369 = vld [vmem:[#allocation3 + $0x140] sm:$0xff]
        %v2370 = vld [vmem:[#allocation3 + $0x148] sm:$0xff]
        %v2371 = vld [vmem:[#allocation3 + $0x150] sm:$0xff]
        %v2372 = vld [vmem:[#allocation3 + $0x158] sm:$0xff]
        %v2373 = vld [vmem:[#allocation3 + $0x160] sm:$0xff]
        %v2374 = vld [vmem:[#allocation3 + $0x168] sm:$0xff]
        %v2375 = vld [vmem:[#allocation3 + $0x170] sm:$0xff]
        %v2376 = vld [vmem:[#allocation3 + $0x178] sm:$0xff]
        %s2377 = scalar_lea.vmem %s2, 48
        %v2378 = vld [vmem:[%s2377] sm:$0xff]
        %v2379 = vld [vmem:[%s2377 + $0x8] sm:$0xff]
        %v2380 = vld [vmem:[%s2377 + $0x10] sm:$0xff]
        %2382 = vset.pattern.permute.xlu0 0
        %2383 = vperm.xlu0 %2382, %v2378
        %v2384 = vpop.permute.xlu0 %2383
        %2387 = vset.pattern.permute.xlu0 0
        %2388 = vperm.xlu0 %2387, %v2379
        %v2389 = vpop.permute.xlu0 %2388
        %2392 = vset.pattern.permute.xlu0 0
        %2393 = vperm.xlu0 %2392, %v2380
        %v2394 = vpop.permute.xlu0 %2393
        %v2397 = vsel %vm809, %v2324, 0
        %v2400 = vsel %vm809, %v2326, 0
        %v2403 = vsel %vm809, %v2328, 0
        %2405 = vmatpush.msra.mxu0 %v2359
        %2406 = vmatpush.msra.mxu0 %v2357
        %2407 = vmatpush.msra.mxu0 %v2355
        %2408 = vmatpush.msra.mxu0 %v2353
        %2409 = vmatpush.msra.mxu0 %v2351
        %2410 = vmatpush.msra.mxu0 %v2349
        %2411 = vmatpush.msra.mxu0 %v2347
        %2412 = vmatpush.msra.mxu0 %v2345
        %2413 = vmatpush.msra.mxu0 %v2343
        %2414 = vmatpush.msra.mxu0 %v2341
        %2415 = vmatpush.msra.mxu0 %v2339
        %2416 = vmatpush.msra.mxu0 %v2337
        %2417 = vmatpush.msra.mxu0 %v2335
        %2418 = vmatpush.msra.mxu0 %v2333
        %2419 = vmatpush.msra.mxu0 %v2331
        %2420 = vmatpush.msra.mxu0 %v2329
        %2421 = vmatmul.f32.gmra.mxu0 %v2323
        %v2422 = vpop.f32.mrf.mxu0
        %v2423 = vadd.f32 %v2384, %v2422
        %2424 = vmatmul.f32.gmra.mxu0 %v2325
        %v2425 = vpop.f32.mrf.mxu0
        %v2426 = vadd.f32 %v2389, %v2425
        %2427 = vmatmul.f32.gmra.mxu0 %v2327
        %v2428 = vpop.f32.mrf.mxu0
        %v2429 = vadd.f32 %v2394, %v2428
        %2430 = vdwg.mxu0
        %2431 = vmatpush.msra.mxu0 0.0
        %2432 = vmatpush.msra.mxu0 0.0
        %2433 = vmatpush.msra.mxu0 0.0
        %2434 = vmatpush.msra.mxu0 0.0
        %2435 = vmatpush.msra.mxu0 0.0
        %2436 = vmatpush.msra.mxu0 0.0
        %2437 = vmatpush.msra.mxu0 0.0
        %2438 = vmatpush.msra.mxu0 0.0
        %2439 = vmatpush.msra.mxu0 %v2375
        %2440 = vmatpush.msra.mxu0 %v2373
        %2441 = vmatpush.msra.mxu0 %v2371
        %2442 = vmatpush.msra.mxu0 %v2369
        %2443 = vmatpush.msra.mxu0 %v2367
        %2444 = vmatpush.msra.mxu0 %v2365
        %2445 = vmatpush.msra.mxu0 %v2363
        %2446 = vmatpush.msra.mxu0 %v2361
        %2447 = vmatmul.f32.gmra.mxu0 %v2397
        %v2448 = vpop.f32.mrf.mxu0
        %v2449 = vadd.f32 %v2423, %v2448
        %2450 = vmatmul.f32.gmra.mxu0 %v2400
        %v2451 = vpop.f32.mrf.mxu0
        %v2452 = vadd.f32 %v2426, %v2451
        %2453 = vmatmul.f32.gmra.mxu0 %v2403
        %v2454 = vpop.f32.mrf.mxu0
        %v2455 = vadd.f32 %v2429, %v2454
        %2456 = vdwg.mxu0
        %2457 = vmatpush.msra.mxu0 %v2360
        %2458 = vmatpush.msra.mxu0 %v2358
        %2459 = vmatpush.msra.mxu0 %v2356
        %2460 = vmatpush.msra.mxu0 %v2354
        %2461 = vmatpush.msra.mxu0 %v2352
        %2462 = vmatpush.msra.mxu0 %v2350
        %2463 = vmatpush.msra.mxu0 %v2348
        %2464 = vmatpush.msra.mxu0 %v2346
        %2465 = vmatpush.msra.mxu0 %v2344
        %2466 = vmatpush.msra.mxu0 %v2342
        %2467 = vmatpush.msra.mxu0 %v2340
        %2468 = vmatpush.msra.mxu0 %v2338
        %2469 = vmatpush.msra.mxu0 %v2336
        %2470 = vmatpush.msra.mxu0 %v2334
        %2471 = vmatpush.msra.mxu0 %v2332
        %2472 = vmatpush.msra.mxu0 %v2330
        %2473 = vmatmul.f32.gmra.mxu0 %v2323
        %v2474 = vpop.f32.mrf.mxu0
        %v2475 = vadd.f32 %v2384, %v2474
        %2476 = vmatmul.f32.gmra.mxu0 %v2325
        %v2477 = vpop.f32.mrf.mxu0
        %v2478 = vadd.f32 %v2389, %v2477
        %2479 = vmatmul.f32.gmra.mxu0 %v2327
        %v2480 = vpop.f32.mrf.mxu0
        %v2481 = vadd.f32 %v2394, %v2480
        %2482 = vdwg.mxu0
        %2483 = vmatpush.msra.mxu0 0.0
        %2484 = vmatpush.msra.mxu0 0.0
        %2485 = vmatpush.msra.mxu0 0.0
        %2486 = vmatpush.msra.mxu0 0.0
        %2487 = vmatpush.msra.mxu0 0.0
        %2488 = vmatpush.msra.mxu0 0.0
        %2489 = vmatpush.msra.mxu0 0.0
        %2490 = vmatpush.msra.mxu0 0.0
        %2491 = vmatpush.msra.mxu0 %v2376
        %2492 = vmatpush.msra.mxu0 %v2374
        %2493 = vmatpush.msra.mxu0 %v2372
        %2494 = vmatpush.msra.mxu0 %v2370
        %2495 = vmatpush.msra.mxu0 %v2368
        %2496 = vmatpush.msra.mxu0 %v2366
        %2497 = vmatpush.msra.mxu0 %v2364
        %2498 = vmatpush.msra.mxu0 %v2362
        %2499 = vmatmul.f32.gmra.mxu0 %v2397
        %v2500 = vpop.f32.mrf.mxu0
        %v2501 = vadd.f32 %v2475, %v2500
        %2502 = vmatmul.f32.gmra.mxu0 %v2400
        %v2503 = vpop.f32.mrf.mxu0
        %v2504 = vadd.f32 %v2478, %v2503
        %2505 = vmatmul.f32.gmra.mxu0 %v2403
        %v2506 = vpop.f32.mrf.mxu0
        %v2507 = vadd.f32 %v2481, %v2506
        %2508 = vdwg.mxu0
        %v2509 = vmax.f32 %v2449, 0.0
        %v2510 = vmax.f32 %v2501, 0.0
        %v2511 = vmax.f32 %v2452, 0.0
        %v2512 = vmax.f32 %v2504, 0.0
        %v2513 = vmax.f32 %v2455, 0.0
        %v2514 = vmax.f32 %v2507, 0.0
        %s2515 = scalar_lea.vmem %s3, 48
        %v2516 = vld [vmem:[%s2515] sm:$0xff]
        %v2517 = vld [vmem:[%s2515 + $0x8] sm:$0xff]
        %v2518 = vld [vmem:[%s2515 + $0x10] sm:$0xff]
        %2520 = vset.pattern.permute.xlu0 0
        %2521 = vperm.xlu0 %2520, %v2516
        %v2522 = vpop.permute.xlu0 %2521
        %2525 = vset.pattern.permute.xlu0 0
        %2526 = vperm.xlu0 %2525, %v2517
        %v2527 = vpop.permute.xlu0 %2526
        %2530 = vset.pattern.permute.xlu0 0
        %2531 = vperm.xlu0 %2530, %v2518
        %v2532 = vpop.permute.xlu0 %2531
        %v2534 = vmul.f32 %v2509, %v2522
        %v2535 = vmul.f32 %v2510, %v2522
        %v2536 = vmul.f32 %v2511, %v2527
        %v2537 = vmul.f32 %v2512, %v2527
        %v2538 = vmul.f32 %v2513, %v2532
        %v2539 = vmul.f32 %v2514, %v2532
        %s2540 = scalar_lea.vmem %s4, 48
        %v2541 = vld [vmem:[%s2540] sm:$0xff]
        %v2542 = vld [vmem:[%s2540 + $0x8] sm:$0xff]
        %v2543 = vld [vmem:[%s2540 + $0x10] sm:$0xff]
        %2545 = vset.pattern.permute.xlu0 0
        %2546 = vperm.xlu0 %2545, %v2541
        %v2547 = vpop.permute.xlu0 %2546
        %2550 = vset.pattern.permute.xlu0 0
        %2551 = vperm.xlu0 %2550, %v2542
        %v2552 = vpop.permute.xlu0 %2551
        %2555 = vset.pattern.permute.xlu0 0
        %2556 = vperm.xlu0 %2555, %v2543
        %v2557 = vpop.permute.xlu0 %2556
        %v2559 = vadd.f32 %v2534, %v2547
        %v2560 = vadd.f32 %v2535, %v2547
        %v2561 = vadd.f32 %v2536, %v2552
        %v2562 = vadd.f32 %v2537, %v2552
        %v2563 = vadd.f32 %v2538, %v2557
        %v2564 = vadd.f32 %v2539, %v2557
        %v2565 = vld [vmem:[#allocation2 + $0x8] sm:$0xff]
        %v2566 = vld [vmem:[#allocation2 + $0x20] sm:$0xff]
        %v2567 = vld [vmem:[#allocation2 + $0x38] sm:$0xff]
        %v2568 = vadd.f32 %v2565, %v2559
        %v2569 = vadd.f32 %v2566, %v2561
        %v2570 = vadd.f32 %v2567, %v2563
        %2571 = vst [vmem:[#allocation2 + $0x8] sm:$0xff] %v2568
        %2572 = vst [vmem:[#allocation2 + $0x20] sm:$0xff] %v2569
        %2573 = vst [vmem:[#allocation2 + $0x38] sm:$0xff] %v2570
        %v2574 = vld [vmem:[%s289 + $0x8] sm:$0xff]
        %v2575 = vld [vmem:[%s289 + $0x20] sm:$0xff]
        %v2576 = vld [vmem:[%s289 + $0x38] sm:$0xff]
        %v2577 = vadd.f32 %v2574, %v2560
        %v2578 = vadd.f32 %v2575, %v2562
        %v2579 = vadd.f32 %v2576, %v2564
        %2580 = vst [vmem:[%s289 + $0x8] sm:$0xff] %v2577
        %2581 = vst [vmem:[%s289 + $0x20] sm:$0xff] %v2578
        %2582 = vst [vmem:[%s289 + $0x38] sm:$0xff] %v2579
        %v2583 = vld [vmem:[#allocation2] sm:$0xff]
        %v2584 = vld [vmem:[#allocation2 + $0x8] sm:$0xff]
        %v2585 = vld [vmem:[#allocation2 + $0x18] sm:$0xff]
        %v2586 = vld [vmem:[#allocation2 + $0x20] sm:$0xff]
        %v2587 = vld [vmem:[#allocation2 + $0x30] sm:$0xff]
        %v2588 = vld [vmem:[#allocation2 + $0x38] sm:$0xff]
        %2595 = vrot.lane.b32.xlu0 %v2583, 28
        %v2596 = vpop.permute.xlu0 %2595
        %2597 = vrot.lane.b32.xlu0 %v2584, 28
        %v2598 = vpop.permute.xlu0 %2597
        %2599 = vrot.lane.b32.xlu0 %v2585, 28
        %v2600 = vpop.permute.xlu0 %2599
        %2601 = vrot.lane.b32.xlu0 %v2586, 28
        %v2602 = vpop.permute.xlu0 %2601
        %2603 = vrot.lane.b32.xlu0 %v2587, 28
        %v2604 = vpop.permute.xlu0 %2603
        %2605 = vrot.lane.b32.xlu0 %v2588, 28
        %v2606 = vpop.permute.xlu0 %2605
        %v2607 = vsel %vm236, %v2596, %v2598
        %v2608 = vsel %vm236, %v2600, %v2602
        %v2609 = vsel %vm236, %v2604, %v2606
        %2613 = vst [vmem:[#allocation3] sm:$0xff] %v2607
        %2614 = vst [vmem:[#allocation3 + $0x10] sm:$0xff] %v2608
        %2615 = vst [vmem:[#allocation3 + $0x20] sm:$0xff] %v2609
        %v2616 = vld [vmem:[%s289] sm:$0xff]
        %v2617 = vld [vmem:[%s289 + $0x8] sm:$0xff]
        %v2618 = vld [vmem:[%s289 + $0x18] sm:$0xff]
        %v2619 = vld [vmem:[%s289 + $0x20] sm:$0xff]
        %v2620 = vld [vmem:[%s289 + $0x30] sm:$0xff]
        %v2621 = vld [vmem:[%s289 + $0x38] sm:$0xff]
        %2628 = vrot.lane.b32.xlu0 %v2616, 28
        %v2629 = vpop.permute.xlu0 %2628
        %2630 = vrot.lane.b32.xlu0 %v2617, 28
        %v2631 = vpop.permute.xlu0 %2630
        %2632 = vrot.lane.b32.xlu0 %v2618, 28
        %v2633 = vpop.permute.xlu0 %2632
        %2634 = vrot.lane.b32.xlu0 %v2619, 28
        %v2635 = vpop.permute.xlu0 %2634
        %2636 = vrot.lane.b32.xlu0 %v2620, 28
        %v2637 = vpop.permute.xlu0 %2636
        %2638 = vrot.lane.b32.xlu0 %v2621, 28
        %v2639 = vpop.permute.xlu0 %2638
        %v2640 = vsel %vm236, %v2629, %v2631
        %v2641 = vsel %vm236, %v2633, %v2635
        %v2642 = vsel %vm236, %v2637, %v2639
        %2646 = vst [vmem:[#allocation3 + $0x8] sm:$0xff] %v2640
        %2647 = vst [vmem:[#allocation3 + $0x18] sm:$0xff] %v2641
        %2648 = vst [vmem:[#allocation3 + $0x28] sm:$0xff] %v2642
        %v2649 = vld [vmem:[#allocation2] sm:$0xff]
        %v2650 = vld [vmem:[#allocation2 + $0x8] sm:$0xff]
        %v2651 = vld [vmem:[#allocation2 + $0x18] sm:$0xff]
        %v2652 = vld [vmem:[#allocation2 + $0x20] sm:$0xff]
        %v2653 = vld [vmem:[#allocation2 + $0x30] sm:$0xff]
        %v2654 = vld [vmem:[#allocation2 + $0x38] sm:$0xff]
        %2661 = vrot.lane.b32.xlu0 %v2649, 20
        %v2662 = vpop.permute.xlu0 %2661
        %2663 = vrot.lane.b32.xlu0 %v2650, 20
        %v2664 = vpop.permute.xlu0 %2663
        %2665 = vrot.lane.b32.xlu0 %v2651, 20
        %v2666 = vpop.permute.xlu0 %2665
        %2667 = vrot.lane.b32.xlu0 %v2652, 20
        %v2668 = vpop.permute.xlu0 %2667
        %2669 = vrot.lane.b32.xlu0 %v2653, 20
        %v2670 = vpop.permute.xlu0 %2669
        %2671 = vrot.lane.b32.xlu0 %v2654, 20
        %v2672 = vpop.permute.xlu0 %2671
        %vm2673 = vcmask 162816
        %v2674 = vsel %vm2673, %v2662, %v2664
        %v2675 = vsel %vm2673, %v2666, %v2668
        %v2676 = vsel %vm2673, %v2670, %v2672
        %2680 = vst [vmem:[#allocation3 + $0x30] sm:$0xff] %v2674
        %2681 = vst [vmem:[#allocation3 + $0x40] sm:$0xff] %v2675
        %2682 = vst [vmem:[#allocation3 + $0x50] sm:$0xff] %v2676
        %v2683 = vld [vmem:[%s289] sm:$0xff]
        %v2684 = vld [vmem:[%s289 + $0x8] sm:$0xff]
        %v2685 = vld [vmem:[%s289 + $0x18] sm:$0xff]
        %v2686 = vld [vmem:[%s289 + $0x20] sm:$0xff]
        %v2687 = vld [vmem:[%s289 + $0x30] sm:$0xff]
        %v2688 = vld [vmem:[%s289 + $0x38] sm:$0xff]
        %2695 = vrot.lane.b32.xlu0 %v2683, 20
        %v2696 = vpop.permute.xlu0 %2695
        %2697 = vrot.lane.b32.xlu0 %v2684, 20
        %v2698 = vpop.permute.xlu0 %2697
        %2699 = vrot.lane.b32.xlu0 %v2685, 20
        %v2700 = vpop.permute.xlu0 %2699
        %2701 = vrot.lane.b32.xlu0 %v2686, 20
        %v2702 = vpop.permute.xlu0 %2701
        %2703 = vrot.lane.b32.xlu0 %v2687, 20
        %v2704 = vpop.permute.xlu0 %2703
        %2705 = vrot.lane.b32.xlu0 %v2688, 20
        %v2706 = vpop.permute.xlu0 %2705
        %v2707 = vsel %vm2673, %v2696, %v2698
        %v2708 = vsel %vm2673, %v2700, %v2702
        %v2709 = vsel %vm2673, %v2704, %v2706
        %2713 = vst [vmem:[#allocation3 + $0x38] sm:$0xff] %v2707
        %2714 = vst [vmem:[#allocation3 + $0x48] sm:$0xff] %v2708
        %2715 = vst [vmem:[#allocation3 + $0x58] sm:$0xff] %v2709
        %v2716 = vld [vmem:[#allocation2] sm:$0xff]
        %v2717 = vld [vmem:[#allocation2 + $0x8] sm:$0xff]
        %v2718 = vld [vmem:[#allocation2 + $0x18] sm:$0xff]
        %v2719 = vld [vmem:[#allocation2 + $0x20] sm:$0xff]
        %v2720 = vld [vmem:[#allocation2 + $0x30] sm:$0xff]
        %v2721 = vld [vmem:[#allocation2 + $0x38] sm:$0xff]
        %2728 = vrot.lane.b32.xlu0 %v2716, 12
        %v2729 = vpop.permute.xlu0 %2728
        %2730 = vrot.lane.b32.xlu0 %v2717, 12
        %v2731 = vpop.permute.xlu0 %2730
        %2732 = vrot.lane.b32.xlu0 %v2718, 12
        %v2733 = vpop.permute.xlu0 %2732
        %2734 = vrot.lane.b32.xlu0 %v2719, 12
        %v2735 = vpop.permute.xlu0 %2734
        %2736 = vrot.lane.b32.xlu0 %v2720, 12
        %v2737 = vpop.permute.xlu0 %2736
        %2738 = vrot.lane.b32.xlu0 %v2721, 12
        %v2739 = vpop.permute.xlu0 %2738
        %vm2740 = vcmask 97280
        %v2741 = vsel %vm2740, %v2729, %v2731
        %v2742 = vsel %vm2740, %v2733, %v2735
        %v2743 = vsel %vm2740, %v2737, %v2739
        %2747 = vst [vmem:[#allocation3 + $0x60] sm:$0xff] %v2741
        %2748 = vst [vmem:[#allocation3 + $0x70] sm:$0xff] %v2742
        %2749 = vst [vmem:[#allocation3 + $0x80] sm:$0xff] %v2743
        %v2750 = vld [vmem:[%s289] sm:$0xff]
        %v2751 = vld [vmem:[%s289 + $0x8] sm:$0xff]
        %v2752 = vld [vmem:[%s289 + $0x18] sm:$0xff]
        %v2753 = vld [vmem:[%s289 + $0x20] sm:$0xff]
        %v2754 = vld [vmem:[%s289 + $0x30] sm:$0xff]
        %v2755 = vld [vmem:[%s289 + $0x38] sm:$0xff]
        %2762 = vrot.lane.b32.xlu0 %v2750, 12
        %v2763 = vpop.permute.xlu0 %2762
        %2764 = vrot.lane.b32.xlu0 %v2751, 12
        %v2765 = vpop.permute.xlu0 %2764
        %2766 = vrot.lane.b32.xlu0 %v2752, 12
        %v2767 = vpop.permute.xlu0 %2766
        %2768 = vrot.lane.b32.xlu0 %v2753, 12
        %v2769 = vpop.permute.xlu0 %2768
        %2770 = vrot.lane.b32.xlu0 %v2754, 12
        %v2771 = vpop.permute.xlu0 %2770
        %2772 = vrot.lane.b32.xlu0 %v2755, 12
        %v2773 = vpop.permute.xlu0 %2772
        %v2774 = vsel %vm2740, %v2763, %v2765
        %v2775 = vsel %vm2740, %v2767, %v2769
        %v2776 = vsel %vm2740, %v2771, %v2773
        %2780 = vst [vmem:[#allocation3 + $0x68] sm:$0xff] %v2774
        %2781 = vst [vmem:[#allocation3 + $0x78] sm:$0xff] %v2775
        %2782 = vst [vmem:[#allocation3 + $0x88] sm:$0xff] %v2776
        %v2783 = vld [vmem:[#allocation2] sm:$0xff]
        %v2784 = vld [vmem:[#allocation2 + $0x8] sm:$0xff]
        %v2785 = vld [vmem:[#allocation2 + $0x18] sm:$0xff]
        %v2786 = vld [vmem:[#allocation2 + $0x20] sm:$0xff]
        %v2787 = vld [vmem:[#allocation2 + $0x30] sm:$0xff]
        %v2788 = vld [vmem:[#allocation2 + $0x38] sm:$0xff]
        %2795 = vrot.lane.b32.xlu0 %v2783, 4
        %v2796 = vpop.permute.xlu0 %2795
        %2797 = vrot.lane.b32.xlu0 %v2784, 4
        %v2798 = vpop.permute.xlu0 %2797
        %2799 = vrot.lane.b32.xlu0 %v2785, 4
        %v2800 = vpop.permute.xlu0 %2799
        %2801 = vrot.lane.b32.xlu0 %v2786, 4
        %v2802 = vpop.permute.xlu0 %2801
        %2803 = vrot.lane.b32.xlu0 %v2787, 4
        %v2804 = vpop.permute.xlu0 %2803
        %2805 = vrot.lane.b32.xlu0 %v2788, 4
        %v2806 = vpop.permute.xlu0 %2805
        %vm2807 = vcmask 31744
        %v2808 = vsel %vm2807, %v2796, %v2798
        %v2809 = vsel %vm2807, %v2800, %v2802
        %v2810 = vsel %vm2807, %v2804, %v2806
        %2814 = vst [vmem:[#allocation3 + $0x90] sm:$0xff] %v2808
        %2815 = vst [vmem:[#allocation3 + $0xa0] sm:$0xff] %v2809
        %2816 = vst [vmem:[#allocation3 + $0xb0] sm:$0xff] %v2810
        %v2817 = vld [vmem:[%s289] sm:$0xff]
        %v2818 = vld [vmem:[%s289 + $0x8] sm:$0xff]
        %v2819 = vld [vmem:[%s289 + $0x18] sm:$0xff]
        %v2820 = vld [vmem:[%s289 + $0x20] sm:$0xff]
        %v2821 = vld [vmem:[%s289 + $0x30] sm:$0xff]
        %v2822 = vld [vmem:[%s289 + $0x38] sm:$0xff]
        %2829 = vrot.lane.b32.xlu0 %v2817, 4
        %v2830 = vpop.permute.xlu0 %2829
        %2831 = vrot.lane.b32.xlu0 %v2818, 4
        %v2832 = vpop.permute.xlu0 %2831
        %2833 = vrot.lane.b32.xlu0 %v2819, 4
        %v2834 = vpop.permute.xlu0 %2833
        %2835 = vrot.lane.b32.xlu0 %v2820, 4
        %v2836 = vpop.permute.xlu0 %2835
        %2837 = vrot.lane.b32.xlu0 %v2821, 4
        %v2838 = vpop.permute.xlu0 %2837
        %2839 = vrot.lane.b32.xlu0 %v2822, 4
        %v2840 = vpop.permute.xlu0 %2839
        %v2841 = vsel %vm2807, %v2830, %v2832
        %v2842 = vsel %vm2807, %v2834, %v2836
        %v2843 = vsel %vm2807, %v2838, %v2840
        %2847 = vst [vmem:[#allocation3 + $0x98] sm:$0xff] %v2841
        %2848 = vst [vmem:[#allocation3 + $0xa8] sm:$0xff] %v2842
        %2849 = vst [vmem:[#allocation3 + $0xb8] sm:$0xff] %v2843
        %v2850 = vld [vmem:[#allocation2 + $0x8] sm:$0xff]
        %v2851 = vld [vmem:[#allocation2 + $0x10] sm:$0xff]
        %v2852 = vld [vmem:[#allocation2 + $0x20] sm:$0xff]
        %v2853 = vld [vmem:[#allocation2 + $0x28] sm:$0xff]
        %v2854 = vld [vmem:[#allocation2 + $0x38] sm:$0xff]
        %v2855 = vld [vmem:[#allocation2 + $0x40] sm:$0xff]
        %2862 = vrot.lane.b32.xlu0 %v2850, 124
        %v2863 = vpop.permute.xlu0 %2862
        %2864 = vrot.lane.b32.xlu0 %v2851, 124
        %v2865 = vpop.permute.xlu0 %2864
        %2866 = vrot.lane.b32.xlu0 %v2852, 124
        %v2867 = vpop.permute.xlu0 %2866
        %2868 = vrot.lane.b32.xlu0 %v2853, 124
        %v2869 = vpop.permute.xlu0 %2868
        %2870 = vrot.lane.b32.xlu0 %v2854, 124
        %v2871 = vpop.permute.xlu0 %2870
        %2872 = vrot.lane.b32.xlu0 %v2855, 124
        %v2873 = vpop.permute.xlu0 %2872
        %v2874 = vsel %vm694, %v2863, %v2865
        %v2875 = vsel %vm694, %v2867, %v2869
        %v2876 = vsel %vm694, %v2871, %v2873
        %2880 = vst [vmem:[#allocation3 + $0xc0] sm:$0xff] %v2874
        %2881 = vst [vmem:[#allocation3 + $0xd0] sm:$0xff] %v2875
        %2882 = vst [vmem:[#allocation3 + $0xe0] sm:$0xff] %v2876
        %v2883 = vld [vmem:[%s289 + $0x8] sm:$0xff]
        %v2884 = vld [vmem:[%s289 + $0x10] sm:$0xff]
        %v2885 = vld [vmem:[%s289 + $0x20] sm:$0xff]
        %v2886 = vld [vmem:[%s289 + $0x28] sm:$0xff]
        %v2887 = vld [vmem:[%s289 + $0x38] sm:$0xff]
        %v2888 = vld [vmem:[%s289 + $0x40] sm:$0xff]
        %2895 = vrot.lane.b32.xlu0 %v2883, 124
        %v2896 = vpop.permute.xlu0 %2895
        %2897 = vrot.lane.b32.xlu0 %v2884, 124
        %v2898 = vpop.permute.xlu0 %2897
        %2899 = vrot.lane.b32.xlu0 %v2885, 124
        %v2900 = vpop.permute.xlu0 %2899
        %2901 = vrot.lane.b32.xlu0 %v2886, 124
        %v2902 = vpop.permute.xlu0 %2901
        %2903 = vrot.lane.b32.xlu0 %v2887, 124
        %v2904 = vpop.permute.xlu0 %2903
        %2905 = vrot.lane.b32.xlu0 %v2888, 124
        %v2906 = vpop.permute.xlu0 %2905
        %v2907 = vsel %vm694, %v2896, %v2898
        %v2908 = vsel %vm694, %v2900, %v2902
        %v2909 = vsel %vm694, %v2904, %v2906
        %2913 = vst [vmem:[#allocation3 + $0xc8] sm:$0xff] %v2907
        %2914 = vst [vmem:[#allocation3 + $0xd8] sm:$0xff] %v2908
        %2915 = vst [vmem:[#allocation3 + $0xe8] sm:$0xff] %v2909
        %v2916 = vld [vmem:[#allocation2 + $0x8] sm:$0xff]
        %v2917 = vld [vmem:[#allocation2 + $0x10] sm:$0xff]
        %v2918 = vld [vmem:[#allocation2 + $0x20] sm:$0xff]
        %v2919 = vld [vmem:[#allocation2 + $0x28] sm:$0xff]
        %v2920 = vld [vmem:[#allocation2 + $0x38] sm:$0xff]
        %v2921 = vld [vmem:[#allocation2 + $0x40] sm:$0xff]
        %2928 = vrot.lane.b32.xlu0 %v2916, 116
        %v2929 = vpop.permute.xlu0 %2928
        %2930 = vrot.lane.b32.xlu0 %v2917, 116
        %v2931 = vpop.permute.xlu0 %2930
        %2932 = vrot.lane.b32.xlu0 %v2918, 116
        %v2933 = vpop.permute.xlu0 %2932
        %2934 = vrot.lane.b32.xlu0 %v2919, 116
        %v2935 = vpop.permute.xlu0 %2934
        %2936 = vrot.lane.b32.xlu0 %v2920, 116
        %v2937 = vpop.permute.xlu0 %2936
        %2938 = vrot.lane.b32.xlu0 %v2921, 116
        %v2939 = vpop.permute.xlu0 %2938
        %vm2940 = vcmask 949248
        %v2941 = vsel %vm2940, %v2929, %v2931
        %v2942 = vsel %vm2940, %v2933, %v2935
        %v2943 = vsel %vm2940, %v2937, %v2939
        %2947 = vst [vmem:[#allocation3 + $0xf0] sm:$0xff] %v2941
        %2948 = vst [vmem:[#allocation3 + $0x100] sm:$0xff] %v2942
        %2949 = vst [vmem:[#allocation3 + $0x110] sm:$0xff] %v2943
        %v2950 = vld [vmem:[%s289 + $0x8] sm:$0xff]
        %v2951 = vld [vmem:[%s289 + $0x10] sm:$0xff]
        %v2952 = vld [vmem:[%s289 + $0x20] sm:$0xff]
        %v2953 = vld [vmem:[%s289 + $0x28] sm:$0xff]
        %v2954 = vld [vmem:[%s289 + $0x38] sm:$0xff]
        %v2955 = vld [vmem:[%s289 + $0x40] sm:$0xff]
        %2962 = vrot.lane.b32.xlu0 %v2950, 116
        %v2963 = vpop.permute.xlu0 %2962
        %2964 = vrot.lane.b32.xlu0 %v2951, 116
        %v2965 = vpop.permute.xlu0 %2964
        %2966 = vrot.lane.b32.xlu0 %v2952, 116
        %v2967 = vpop.permute.xlu0 %2966
        %2968 = vrot.lane.b32.xlu0 %v2953, 116
        %v2969 = vpop.permute.xlu0 %2968
        %2970 = vrot.lane.b32.xlu0 %v2954, 116
        %v2971 = vpop.permute.xlu0 %2970
        %2972 = vrot.lane.b32.xlu0 %v2955, 116
        %v2973 = vpop.permute.xlu0 %2972
        %v2974 = vsel %vm2940, %v2963, %v2965
        %v2975 = vsel %vm2940, %v2967, %v2969
        %v2976 = vsel %vm2940, %v2971, %v2973
        %2980 = vst [vmem:[#allocation3 + $0xf8] sm:$0xff] %v2974
        %2981 = vst [vmem:[#allocation3 + $0x108] sm:$0xff] %v2975
        %2982 = vst [vmem:[#allocation3 + $0x118] sm:$0xff] %v2976
        %v2983 = vld [vmem:[#allocation2 + $0x8] sm:$0xff]
        %v2984 = vld [vmem:[#allocation2 + $0x10] sm:$0xff]
        %v2985 = vld [vmem:[#allocation2 + $0x20] sm:$0xff]
        %v2986 = vld [vmem:[#allocation2 + $0x28] sm:$0xff]
        %v2987 = vld [vmem:[#allocation2 + $0x38] sm:$0xff]
        %v2988 = vld [vmem:[#allocation2 + $0x40] sm:$0xff]
        %2995 = vrot.lane.b32.xlu0 %v2983, 108
        %v2996 = vpop.permute.xlu0 %2995
        %2997 = vrot.lane.b32.xlu0 %v2984, 108
        %v2998 = vpop.permute.xlu0 %2997
        %2999 = vrot.lane.b32.xlu0 %v2985, 108
        %v3000 = vpop.permute.xlu0 %2999
        %3001 = vrot.lane.b32.xlu0 %v2986, 108
        %v3002 = vpop.permute.xlu0 %3001
        %3003 = vrot.lane.b32.xlu0 %v2987, 108
        %v3004 = vpop.permute.xlu0 %3003
        %3005 = vrot.lane.b32.xlu0 %v2988, 108
        %v3006 = vpop.permute.xlu0 %3005
        %vm3007 = vcmask 883712
        %v3008 = vsel %vm3007, %v2996, %v2998
        %v3009 = vsel %vm3007, %v3000, %v3002
        %v3010 = vsel %vm3007, %v3004, %v3006
        %3014 = vst [vmem:[#allocation3 + $0x120] sm:$0xff] %v3008
        %3015 = vst [vmem:[#allocation3 + $0x130] sm:$0xff] %v3009
        %3016 = vst [vmem:[#allocation3 + $0x140] sm:$0xff] %v3010
        %v3017 = vld [vmem:[%s289 + $0x8] sm:$0xff]
        %v3018 = vld [vmem:[%s289 + $0x10] sm:$0xff]
        %v3019 = vld [vmem:[%s289 + $0x20] sm:$0xff]
        %v3020 = vld [vmem:[%s289 + $0x28] sm:$0xff]
        %v3021 = vld [vmem:[%s289 + $0x38] sm:$0xff]
        %v3022 = vld [vmem:[%s289 + $0x40] sm:$0xff]
        %3029 = vrot.lane.b32.xlu0 %v3017, 108
        %v3030 = vpop.permute.xlu0 %3029
        %3031 = vrot.lane.b32.xlu0 %v3018, 108
        %v3032 = vpop.permute.xlu0 %3031
        %3033 = vrot.lane.b32.xlu0 %v3019, 108
        %v3034 = vpop.permute.xlu0 %3033
        %3035 = vrot.lane.b32.xlu0 %v3020, 108
        %v3036 = vpop.permute.xlu0 %3035
        %3037 = vrot.lane.b32.xlu0 %v3021, 108
        %v3038 = vpop.permute.xlu0 %3037
        %3039 = vrot.lane.b32.xlu0 %v3022, 108
        %v3040 = vpop.permute.xlu0 %3039
        %v3041 = vsel %vm3007, %v3030, %v3032
        %v3042 = vsel %vm3007, %v3034, %v3036
        %v3043 = vsel %vm3007, %v3038, %v3040
        %3047 = vst [vmem:[#allocation3 + $0x128] sm:$0xff] %v3041
        %3048 = vst [vmem:[#allocation3 + $0x138] sm:$0xff] %v3042
        %3049 = vst [vmem:[#allocation3 + $0x148] sm:$0xff] %v3043
        %v3050 = vld [vmem:[#allocation2 + $0x8] sm:$0xff]
        %v3051 = vld [vmem:[#allocation2 + $0x10] sm:$0xff]
        %v3052 = vld [vmem:[#allocation2 + $0x20] sm:$0xff]
        %v3053 = vld [vmem:[#allocation2 + $0x28] sm:$0xff]
        %v3054 = vld [vmem:[#allocation2 + $0x38] sm:$0xff]
        %v3055 = vld [vmem:[#allocation2 + $0x40] sm:$0xff]
        %3062 = vrot.lane.b32.xlu0 %v3050, 100
        %v3063 = vpop.permute.xlu0 %3062
        %3064 = vrot.lane.b32.xlu0 %v3051, 100
        %v3065 = vpop.permute.xlu0 %3064
        %3066 = vrot.lane.b32.xlu0 %v3052, 100
        %v3067 = vpop.permute.xlu0 %3066
        %3068 = vrot.lane.b32.xlu0 %v3053, 100
        %v3069 = vpop.permute.xlu0 %3068
        %3070 = vrot.lane.b32.xlu0 %v3054, 100
        %v3071 = vpop.permute.xlu0 %3070
        %3072 = vrot.lane.b32.xlu0 %v3055, 100
        %v3073 = vpop.permute.xlu0 %3072
        %vm3074 = vcmask 818176
        %v3075 = vsel %vm3074, %v3063, %v3065
        %v3076 = vsel %vm3074, %v3067, %v3069
        %v3077 = vsel %vm3074, %v3071, %v3073
        %3081 = vst [vmem:[#allocation3 + $0x150] sm:$0xff] %v3075
        %3082 = vst [vmem:[#allocation3 + $0x160] sm:$0xff] %v3076
        %3083 = vst [vmem:[#allocation3 + $0x170] sm:$0xff] %v3077
        %v3084 = vld [vmem:[%s289 + $0x8] sm:$0xff]
        %v3085 = vld [vmem:[%s289 + $0x10] sm:$0xff]
        %v3086 = vld [vmem:[%s289 + $0x20] sm:$0xff]
        %v3087 = vld [vmem:[%s289 + $0x28] sm:$0xff]
        %v3088 = vld [vmem:[%s289 + $0x38] sm:$0xff]
        %v3089 = vld [vmem:[%s289 + $0x40] sm:$0xff]
        %3096 = vrot.lane.b32.xlu0 %v3084, 100
        %v3097 = vpop.permute.xlu0 %3096
        %3098 = vrot.lane.b32.xlu0 %v3085, 100
        %v3099 = vpop.permute.xlu0 %3098
        %3100 = vrot.lane.b32.xlu0 %v3086, 100
        %v3101 = vpop.permute.xlu0 %3100
        %3102 = vrot.lane.b32.xlu0 %v3087, 100
        %v3103 = vpop.permute.xlu0 %3102
        %3104 = vrot.lane.b32.xlu0 %v3088, 100
        %v3105 = vpop.permute.xlu0 %3104
        %3106 = vrot.lane.b32.xlu0 %v3089, 100
        %v3107 = vpop.permute.xlu0 %3106
        %v3108 = vsel %vm3074, %v3097, %v3099
        %v3109 = vsel %vm3074, %v3101, %v3103
        %v3110 = vsel %vm3074, %v3105, %v3107
        %3114 = vst [vmem:[#allocation3 + $0x158] sm:$0xff] %v3108
        %3115 = vst [vmem:[#allocation3 + $0x168] sm:$0xff] %v3109
        %3116 = vst [vmem:[#allocation3 + $0x178] sm:$0xff] %v3110
        %s3117 = scalar_lea.vmem %s1, 144
        %v3118 = vld [vmem:[%s3117] sm:$0xff]
        %v3119 = vld [vmem:[%s3117 + $0x8] sm:$0xff]
        %v3120 = vld [vmem:[%s3117 + $0x10] sm:$0xff]
        %v3121 = vld [vmem:[%s3117 + $0x18] sm:$0xff]
        %v3122 = vld [vmem:[%s3117 + $0x20] sm:$0xff]
        %v3123 = vld [vmem:[%s3117 + $0x28] sm:$0xff]
        %v3124 = vld [vmem:[#allocation3] sm:$0xff]
        %v3125 = vld [vmem:[#allocation3 + $0x8] sm:$0xff]
        %v3126 = vld [vmem:[#allocation3 + $0x10] sm:$0xff]
        %v3127 = vld [vmem:[#allocation3 + $0x18] sm:$0xff]
        %v3128 = vld [vmem:[#allocation3 + $0x20] sm:$0xff]
        %v3129 = vld [vmem:[#allocation3 + $0x28] sm:$0xff]
        %v3130 = vld [vmem:[#allocation3 + $0x30] sm:$0xff]
        %v3131 = vld [vmem:[#allocation3 + $0x38] sm:$0xff]
        %v3132 = vld [vmem:[#allocation3 + $0x40] sm:$0xff]
        %v3133 = vld [vmem:[#allocation3 + $0x48] sm:$0xff]
        %v3134 = vld [vmem:[#allocation3 + $0x50] sm:$0xff]
        %v3135 = vld [vmem:[#allocation3 + $0x58] sm:$0xff]
        %v3136 = vld [vmem:[#allocation3 + $0x60] sm:$0xff]
        %v3137 = vld [vmem:[#allocation3 + $0x68] sm:$0xff]
        %v3138 = vld [vmem:[#allocation3 + $0x70] sm:$0xff]
        %v3139 = vld [vmem:[#allocation3 + $0x78] sm:$0xff]
        %v3140 = vld [vmem:[#allocation3 + $0x80] sm:$0xff]
        %v3141 = vld [vmem:[#allocation3 + $0x88] sm:$0xff]
        %v3142 = vld [vmem:[#allocation3 + $0x90] sm:$0xff]
        %v3143 = vld [vmem:[#allocation3 + $0x98] sm:$0xff]
        %v3144 = vld [vmem:[#allocation3 + $0xa0] sm:$0xff]
        %v3145 = vld [vmem:[#allocation3 + $0xa8] sm:$0xff]
        %v3146 = vld [vmem:[#allocation3 + $0xb0] sm:$0xff]
        %v3147 = vld [vmem:[#allocation3 + $0xb8] sm:$0xff]
        %v3148 = vld [vmem:[#allocation3 + $0xc0] sm:$0xff]
        %v3149 = vld [vmem:[#allocation3 + $0xc8] sm:$0xff]
        %v3150 = vld [vmem:[#allocation3 + $0xd0] sm:$0xff]
        %v3151 = vld [vmem:[#allocation3 + $0xd8] sm:$0xff]
        %v3152 = vld [vmem:[#allocation3 + $0xe0] sm:$0xff]
        %v3153 = vld [vmem:[#allocation3 + $0xe8] sm:$0xff]
        %v3154 = vld [vmem:[#allocation3 + $0xf0] sm:$0xff]
        %v3155 = vld [vmem:[#allocation3 + $0xf8] sm:$0xff]
        %v3156 = vld [vmem:[#allocation3 + $0x100] sm:$0xff]
        %v3157 = vld [vmem:[#allocation3 + $0x108] sm:$0xff]
        %v3158 = vld [vmem:[#allocation3 + $0x110] sm:$0xff]
        %v3159 = vld [vmem:[#allocation3 + $0x118] sm:$0xff]
        %v3160 = vld [vmem:[#allocation3 + $0x120] sm:$0xff]
        %v3161 = vld [vmem:[#allocation3 + $0x128] sm:$0xff]
        %v3162 = vld [vmem:[#allocation3 + $0x130] sm:$0xff]
        %v3163 = vld [vmem:[#allocation3 + $0x138] sm:$0xff]
        %v3164 = vld [vmem:[#allocation3 + $0x140] sm:$0xff]
        %v3165 = vld [vmem:[#allocation3 + $0x148] sm:$0xff]
        %v3166 = vld [vmem:[#allocation3 + $0x150] sm:$0xff]
        %v3167 = vld [vmem:[#allocation3 + $0x158] sm:$0xff]
        %v3168 = vld [vmem:[#allocation3 + $0x160] sm:$0xff]
        %v3169 = vld [vmem:[#allocation3 + $0x168] sm:$0xff]
        %v3170 = vld [vmem:[#allocation3 + $0x170] sm:$0xff]
        %v3171 = vld [vmem:[#allocation3 + $0x178] sm:$0xff]
        %s3172 = scalar_lea.vmem %s2, 72
        %v3173 = vld [vmem:[%s3172] sm:$0xff]
        %v3174 = vld [vmem:[%s3172 + $0x8] sm:$0xff]
        %v3175 = vld [vmem:[%s3172 + $0x10] sm:$0xff]
        %3177 = vset.pattern.permute.xlu0 0
        %3178 = vperm.xlu0 %3177, %v3173
        %v3179 = vpop.permute.xlu0 %3178
        %3182 = vset.pattern.permute.xlu0 0
        %3183 = vperm.xlu0 %3182, %v3174
        %v3184 = vpop.permute.xlu0 %3183
        %3187 = vset.pattern.permute.xlu0 0
        %3188 = vperm.xlu0 %3187, %v3175
        %v3189 = vpop.permute.xlu0 %3188
        %v3192 = vsel %vm809, %v3119, 0
        %v3195 = vsel %vm809, %v3121, 0
        %v3198 = vsel %vm809, %v3123, 0
        %3200 = vmatpush.msra.mxu0 %v3154
        %3201 = vmatpush.msra.mxu0 %v3152
        %3202 = vmatpush.msra.mxu0 %v3150
        %3203 = vmatpush.msra.mxu0 %v3148
        %3204 = vmatpush.msra.mxu0 %v3146
        %3205 = vmatpush.msra.mxu0 %v3144
        %3206 = vmatpush.msra.mxu0 %v3142
        %3207 = vmatpush.msra.mxu0 %v3140
        %3208 = vmatpush.msra.mxu0 %v3138
        %3209 = vmatpush.msra.mxu0 %v3136
        %3210 = vmatpush.msra.mxu0 %v3134
        %3211 = vmatpush.msra.mxu0 %v3132
        %3212 = vmatpush.msra.mxu0 %v3130
        %3213 = vmatpush.msra.mxu0 %v3128
        %3214 = vmatpush.msra.mxu0 %v3126
        %3215 = vmatpush.msra.mxu0 %v3124
        %3216 = vmatmul.f32.gmra.mxu0 %v3118
        %v3217 = vpop.f32.mrf.mxu0
        %v3218 = vadd.f32 %v3179, %v3217
        %3219 = vmatmul.f32.gmra.mxu0 %v3120
        %v3220 = vpop.f32.mrf.mxu0
        %v3221 = vadd.f32 %v3184, %v3220
        %3222 = vmatmul.f32.gmra.mxu0 %v3122
        %v3223 = vpop.f32.mrf.mxu0
        %v3224 = vadd.f32 %v3189, %v3223
        %3225 = vdwg.mxu0
        %3226 = vmatpush.msra.mxu0 0.0
        %3227 = vmatpush.msra.mxu0 0.0
        %3228 = vmatpush.msra.mxu0 0.0
        %3229 = vmatpush.msra.mxu0 0.0
        %3230 = vmatpush.msra.mxu0 0.0
        %3231 = vmatpush.msra.mxu0 0.0
        %3232 = vmatpush.msra.mxu0 0.0
        %3233 = vmatpush.msra.mxu0 0.0
        %3234 = vmatpush.msra.mxu0 %v3170
        %3235 = vmatpush.msra.mxu0 %v3168
        %3236 = vmatpush.msra.mxu0 %v3166
        %3237 = vmatpush.msra.mxu0 %v3164
        %3238 = vmatpush.msra.mxu0 %v3162
        %3239 = vmatpush.msra.mxu0 %v3160
        %3240 = vmatpush.msra.mxu0 %v3158
        %3241 = vmatpush.msra.mxu0 %v3156
        %3242 = vmatmul.f32.gmra.mxu0 %v3192
        %v3243 = vpop.f32.mrf.mxu0
        %v3244 = vadd.f32 %v3218, %v3243
        %3245 = vmatmul.f32.gmra.mxu0 %v3195
        %v3246 = vpop.f32.mrf.mxu0
        %v3247 = vadd.f32 %v3221, %v3246
        %3248 = vmatmul.f32.gmra.mxu0 %v3198
        %v3249 = vpop.f32.mrf.mxu0
        %v3250 = vadd.f32 %v3224, %v3249
        %3251 = vdwg.mxu0
        %3252 = vmatpush.msra.mxu0 %v3155
        %3253 = vmatpush.msra.mxu0 %v3153
        %3254 = vmatpush.msra.mxu0 %v3151
        %3255 = vmatpush.msra.mxu0 %v3149
        %3256 = vmatpush.msra.mxu0 %v3147
        %3257 = vmatpush.msra.mxu0 %v3145
        %3258 = vmatpush.msra.mxu0 %v3143
        %3259 = vmatpush.msra.mxu0 %v3141
        %3260 = vmatpush.msra.mxu0 %v3139
        %3261 = vmatpush.msra.mxu0 %v3137
        %3262 = vmatpush.msra.mxu0 %v3135
        %3263 = vmatpush.msra.mxu0 %v3133
        %3264 = vmatpush.msra.mxu0 %v3131
        %3265 = vmatpush.msra.mxu0 %v3129
        %3266 = vmatpush.msra.mxu0 %v3127
        %3267 = vmatpush.msra.mxu0 %v3125
        %3268 = vmatmul.f32.gmra.mxu0 %v3118
        %v3269 = vpop.f32.mrf.mxu0
        %v3270 = vadd.f32 %v3179, %v3269
        %3271 = vmatmul.f32.gmra.mxu0 %v3120
        %v3272 = vpop.f32.mrf.mxu0
        %v3273 = vadd.f32 %v3184, %v3272
        %3274 = vmatmul.f32.gmra.mxu0 %v3122
        %v3275 = vpop.f32.mrf.mxu0
        %v3276 = vadd.f32 %v3189, %v3275
        %3277 = vdwg.mxu0
        %3278 = vmatpush.msra.mxu0 0.0
        %3279 = vmatpush.msra.mxu0 0.0
        %3280 = vmatpush.msra.mxu0 0.0
        %3281 = vmatpush.msra.mxu0 0.0
        %3282 = vmatpush.msra.mxu0 0.0
        %3283 = vmatpush.msra.mxu0 0.0
        %3284 = vmatpush.msra.mxu0 0.0
        %3285 = vmatpush.msra.mxu0 0.0
        %3286 = vmatpush.msra.mxu0 %v3171
        %3287 = vmatpush.msra.mxu0 %v3169
        %3288 = vmatpush.msra.mxu0 %v3167
        %3289 = vmatpush.msra.mxu0 %v3165
        %3290 = vmatpush.msra.mxu0 %v3163
        %3291 = vmatpush.msra.mxu0 %v3161
        %3292 = vmatpush.msra.mxu0 %v3159
        %3293 = vmatpush.msra.mxu0 %v3157
        %3294 = vmatmul.f32.gmra.mxu0 %v3192
        %v3295 = vpop.f32.mrf.mxu0
        %v3296 = vadd.f32 %v3270, %v3295
        %3297 = vmatmul.f32.gmra.mxu0 %v3195
        %v3298 = vpop.f32.mrf.mxu0
        %v3299 = vadd.f32 %v3273, %v3298
        %3300 = vmatmul.f32.gmra.mxu0 %v3198
        %v3301 = vpop.f32.mrf.mxu0
        %v3302 = vadd.f32 %v3276, %v3301
        %3303 = vdwg.mxu0
        %v3304 = vmax.f32 %v3244, 0.0
        %v3305 = vmax.f32 %v3296, 0.0
        %v3306 = vmax.f32 %v3247, 0.0
        %v3307 = vmax.f32 %v3299, 0.0
        %v3308 = vmax.f32 %v3250, 0.0
        %v3309 = vmax.f32 %v3302, 0.0
        %s3310 = scalar_lea.vmem %s3, 72
        %v3311 = vld [vmem:[%s3310] sm:$0xff]
        %v3312 = vld [vmem:[%s3310 + $0x8] sm:$0xff]
        %v3313 = vld [vmem:[%s3310 + $0x10] sm:$0xff]
        %3315 = vset.pattern.permute.xlu0 0
        %3316 = vperm.xlu0 %3315, %v3311
        %v3317 = vpop.permute.xlu0 %3316
        %3320 = vset.pattern.permute.xlu0 0
        %3321 = vperm.xlu0 %3320, %v3312
        %v3322 = vpop.permute.xlu0 %3321
        %3325 = vset.pattern.permute.xlu0 0
        %3326 = vperm.xlu0 %3325, %v3313
        %v3327 = vpop.permute.xlu0 %3326
        %v3329 = vmul.f32 %v3304, %v3317
        %v3330 = vmul.f32 %v3305, %v3317
        %v3331 = vmul.f32 %v3306, %v3322
        %v3332 = vmul.f32 %v3307, %v3322
        %v3333 = vmul.f32 %v3308, %v3327
        %v3334 = vmul.f32 %v3309, %v3327
        %s3335 = scalar_lea.vmem %s4, 72
        %v3336 = vld [vmem:[%s3335] sm:$0xff]
        %v3337 = vld [vmem:[%s3335 + $0x8] sm:$0xff]
        %v3338 = vld [vmem:[%s3335 + $0x10] sm:$0xff]
        %3340 = vset.pattern.permute.xlu0 0
        %3341 = vperm.xlu0 %3340, %v3336
        %v3342 = vpop.permute.xlu0 %3341
        %3345 = vset.pattern.permute.xlu0 0
        %3346 = vperm.xlu0 %3345, %v3337
        %v3347 = vpop.permute.xlu0 %3346
        %3350 = vset.pattern.permute.xlu0 0
        %3351 = vperm.xlu0 %3350, %v3338
        %v3352 = vpop.permute.xlu0 %3351
        %v3354 = vadd.f32 %v3329, %v3342
        %v3355 = vadd.f32 %v3330, %v3342
        %v3356 = vadd.f32 %v3331, %v3347
        %v3357 = vadd.f32 %v3332, %v3347
        %v3358 = vadd.f32 %v3333, %v3352
        %v3359 = vadd.f32 %v3334, %v3352
        %v3360 = vld [vmem:[#allocation2 + $0x8] sm:$0xff]
        %v3361 = vld [vmem:[#allocation2 + $0x20] sm:$0xff]
        %v3362 = vld [vmem:[#allocation2 + $0x38] sm:$0xff]
        %v3363 = vadd.f32 %v3360, %v3354
        %v3364 = vadd.f32 %v3361, %v3356
        %v3365 = vadd.f32 %v3362, %v3358
        %3366 = vst [vmem:[#allocation2 + $0x8] sm:$0xff] %v3363
        %3367 = vst [vmem:[#allocation2 + $0x20] sm:$0xff] %v3364
        %3368 = vst [vmem:[#allocation2 + $0x38] sm:$0xff] %v3365
        %v3369 = vld [vmem:[%s289 + $0x8] sm:$0xff]
        %v3370 = vld [vmem:[%s289 + $0x20] sm:$0xff]
        %v3371 = vld [vmem:[%s289 + $0x38] sm:$0xff]
        %v3372 = vadd.f32 %v3369, %v3355
        %v3373 = vadd.f32 %v3370, %v3357
        %v3374 = vadd.f32 %v3371, %v3359
        %3375 = vst [vmem:[%s289 + $0x8] sm:$0xff] %v3372
        %3376 = vst [vmem:[%s289 + $0x20] sm:$0xff] %v3373
        %3377 = vst [vmem:[%s289 + $0x38] sm:$0xff] %v3374
        %v3378 = vld [vmem:[#allocation2 + $0x8] sm:$0xff]
        %v3379 = vld [vmem:[#allocation2 + $0x20] sm:$0xff]
        %v3380 = vld [vmem:[#allocation2 + $0x38] sm:$0xff]
        %v3381 = vld [vmem:[#allocation2 + $0x50] sm:$0xff]
        %v3382 = vld [vmem:[#allocation2 + $0x68] sm:$0xff]
        %v3383 = vld [vmem:[#allocation2 + $0x80] sm:$0xff]
        %3384 = vst [vmem:[%s220] sm:$0xff] %v3378
        %3385 = vst [vmem:[%s220 + $0x8] sm:$0xff] %v3379
        %3386 = vst [vmem:[%s220 + $0x10] sm:$0xff] %v3380
        %3387 = vst [vmem:[%s220 + $0x18] sm:$0xff] %v3381
        %3388 = vst [vmem:[%s220 + $0x20] sm:$0xff] %v3382
        %3389 = vst [vmem:[%s220 + $0x28] sm:$0xff] %v3383
        %s3390 = sand.u32 %s137, 1
        %s3391 = scalar_lea.sflag [#allocation5], %s3390
        %s3392 = sand.u32 %s137, 1
        %s3393 = smul.addr %s3392, 48
        %s3394 = scalar_lea.vmem [#allocation4], %s3393
        // Predicated region
        $region41: #{tpu_custom_call.1} parent=39 // pred_check
          %p3395 = pneg %p147
        $region42: #{tpu_custom_call.1} parent=39 // pred_check_branch
          %3397 = sbr.rel (%p3395) target = $region44
        $region43: #{tpu_custom_call.1} parent=39 // pred_region
          %s3398 = smul.u32 2, %s19
          %3400 = vsyncadd %s3391, 0
          %s3401 = smul.addr %s3398, 3
          %s3402 = smul.addr %s3401, 8
          %s3403 = scalar_lea.hbm %s5, %s3402
          %s3404 = sshll.u32 %s3394, 4
          %s3405 = int_to_ptr.vmem [resolvable:$true] %s3404
          %s3406 = sshll.u32 %s3403, 4
          %s3407 = int_to_ptr.hbm [resolvable:$true] %s3406
          %3412 = dma.vmem_to_hbm [thread:$0]  %s3405, 768, %s3407, %s3391, 128, 128, 8
        $region44: #{tpu_custom_call.1} parent=39 // pred_fallthru
          _
      $region40: #{tpu_custom_call.1} parent=5 // pred_fallthru
        _
      %p3413 = scmp.le.s32.totalorder 2, %s14
      // Predicated region
      $region45: #{tpu_custom_call.1} parent=5 // pred_check
        %p3414 = pneg %p3413
      $region46: #{tpu_custom_call.1} parent=5 // pred_check_branch
        %3416 = sbr.rel (%p3414) target = $region48
      $region47: #{tpu_custom_call.1} parent=5 // pred_region
        %s3417 = ssub.s32 %s14, 2
        // Predicated region
        $region49: #{tpu_custom_call.1} parent=47 // pred_check
          %p3418 = pneg %p153
        $region50: #{tpu_custom_call.1} parent=47 // pred_check_branch
          %3420 = sbr.rel (%p3418) target = $region52
        $region51: #{tpu_custom_call.1} parent=47 // pred_region
          %s3421 = sand.u32 %s138, 1
          %s3422 = scalar_lea.sflag [#allocation5], %s3421
          %s3423 = sand.u32 %s138, 1
          %s3424 = smul.addr %s3423, 48
          %s3425 = scalar_lea.vmem [#allocation4], %s3424
          %3427 = dma.done %s3422, 768
        $region52: #{tpu_custom_call.1} parent=47 // pred_fallthru
          _
      $region48: #{tpu_custom_call.1} parent=5 // pred_fallthru
        _
    $region6: #{tpu_custom_call.1} parent=1 // loop_footer
      %s18 = sadd.s32 1, %s14
    $region7: #{tpu_custom_call.1} parent=1 // loop_footer_branch
      %13 = sbr.rel target = $region3
    $region8: #{tpu_custom_call.1} parent=1 // loop_exit
      _
    %3428 = vsyncpa [#allocation5], 1
    %s3429 = scalar_lea.sflag [#allocation5], 1
    %3430 = vsyncpa %s3429, 1

</llo_original>
